<compile_context>
chip_gen: v6e
topology: v6e:2x2x1
jax: 0.10.0
libtpu: 0.0.40
codegen_flags: <defaults>
</compile_context>

<pallas_src>
import jax
import jax.numpy as jnp
from jax import lax
from jax.experimental import pallas as pl
from jax.experimental.pallas import tpu as pltpu

# ----- synthetic config (real mBERT: vocab ~105K, 768 hidden, 12 heads, 12 L)
VOCAB  = 128          # synthetic vocab (lane-dense one-hot gather)
S      = 8            # sequence length (one full sublane tile)
H      = 128          # hidden size (multiple of 128 -> lane-dense)
NH     = 4            # attention heads
HD     = H // NH      # head dim
FFN    = 256          # intermediate size (multiple of 128)
LAYERS = 2            # encoder layers
LN_EPS = 1e-12        # BERT layer-norm eps


def _layernorm(x, g, b):
    mu = jnp.mean(x, axis=-1, keepdims=True)
    var = jnp.mean((x - mu) * (x - mu), axis=-1, keepdims=True)
    return (x - mu) * lax.rsqrt(var + LN_EPS) * g + b


def _gelu_tanh(x):
    # TODO(synk): HuggingFace BERT uses erf-based GELU; tanh approximation
    # differs at ~1e-3 (weights are synthetic anyway).
    return 0.5 * x * (1.0 + jnp.tanh(0.7978845608028654 * (x + 0.044715 * x * x * x)))


# ------------------------------- fused kernel --------------------------------
def fused_encoder_kernel(
    ids_ref,                                           # [S, 1] int32
    we_ref, pe_ref, te_ref, eg_ref, eb_ref,            # embeddings + emb LN
    wqkv_ref, bqkv_ref, wo_ref, bo_ref,                # attention (head-stacked)
    ln1g_ref, ln1b_ref,
    w1_ref, b1_ref, w2_ref, b2_ref,                    # FFN
    ln2g_ref, ln2b_ref,
    out_ref,                                           # [S, H] f32
):
    # ---- embedding: one-hot matmul gather (single MXU push, no serial copies)
    ids = ids_ref[...]                                               # [S, 1]
    vocab_iota = lax.broadcasted_iota(jnp.int32, (S, VOCAB), 1)
    one_hot = jnp.where(ids == vocab_iota, 1.0, 0.0).astype(jnp.bfloat16)
    x = jnp.dot(one_hot, we_ref[...], preferred_element_type=jnp.float32)
    x = x + pe_ref[...] + te_ref[...]
    h = _layernorm(x, eg_ref[...], eb_ref[...])                      # [S, H] f32

    # ---- LAYERS x (MHA + FFN), fully unrolled; hidden state stays in registers
    for l in range(LAYERS):
        hb = h.astype(jnp.bfloat16)
        xb = jnp.broadcast_to(hb[None, :, :], (3 * NH, S, H))        # [3NH,S,H]

        # head-batched QKV projection: [3NH,S,H] x [3NH,H,HD] -> [3NH,S,HD]
        qkv = lax.dot_general(
            xb, wqkv_ref[l],
            dimension_numbers=(((2,), (1,)), ((0,), (0,))),
            preferred_element_type=jnp.float32,
        ) + bqkv_ref[l]

        q = qkv[0:NH].astype(jnp.bfloat16)        # 1/sqrt(HD) folded into Wq/bq
        k = qkv[NH:2 * NH].astype(jnp.bfloat16)
        v = qkv[2 * NH:3 * NH].astype(jnp.bfloat16)

        # ONE batched QK^T, ONE softmax chain, ONE batched PV.
        # TODO(synk): no attention mask (single unpadded sentence, matching the
        # module's usage of one token tensor with no padding).
        s = lax.dot_general(q, k, (((2,), (2,)), ((0,), (0,))),
                            preferred_element_type=jnp.float32)      # [NH,S,S]
        s = s - jnp.max(s, axis=-1, keepdims=True)
        p = jnp.exp(s)
        p = p * pl.reciprocal(jnp.sum(p, axis=-1, keepdims=True), approx=True)
        ctx = lax.dot_general(p.astype(jnp.bfloat16), v,
                              (((2,), (1,)), ((0,), (0,))),
                              preferred_element_type=jnp.float32)    # [NH,S,HD]

        # output projection: batched per-head [S,HD]x[HD,H], summed over heads
        # (== concat(heads) @ Wo with Wo stored head-major-stacked).
        att3 = lax.dot_general(ctx.astype(jnp.bfloat16), wo_ref[l],
                               (((2,), (1,)), ((0,), (0,))),
                               preferred_element_type=jnp.float32)   # [NH,S,H]
        att = att3[0]
        for hh in range(1, NH):
            att = att + att3[hh]
        att = att + bo_ref[l]

        h1 = _layernorm(h + att, ln1g_ref[l], ln1b_ref[l])

        # FFN (GELU) + residual + LayerNorm
        ff = jnp.dot(h1.astype(jnp.bfloat16), w1_ref[l],
                     preferred_element_type=jnp.float32) + b1_ref[l]
        ff = _gelu_tanh(ff)
        ff = jnp.dot(ff.astype(jnp.bfloat16), w2_ref[l],
                     preferred_element_type=jnp.float32) + b2_ref[l]

        h = _layernorm(h1 + ff, ln2g_ref[l], ln2b_ref[l])

    out_ref[...] = h                                                 # full-lane store


# ------------------------------ pallas_call wrapper ---------------------------
def multilingual_lexer_forward(token_ids, params):
    """token_ids: [1, S] int32 (the module's torch.tensor([ids])); returns [S, H]."""
    ids = token_ids[0].astype(jnp.int32)[:, None]      # squeeze(dim=0) -> [S, 1]

    vmem = pl.BlockSpec(memory_space=pltpu.MemorySpace.VMEM)
    inputs = (
        ids,
        params["word_emb"], params["pos_emb"], params["type_row"],
        params["emb_ln_g"], params["emb_ln_b"],
        params["wqkv"], params["bqkv"], params["wo"], params["bo"],
        params["ln1_g"], params["ln1_b"],
        params["w1"], params["b1"], params["w2"], params["b2"],
        params["ln2_g"], params["ln2_b"],
    )
    return pl.pallas_call(
        fused_encoder_kernel,
        out_shape=jax.ShapeDtypeStruct((S, H), jnp.float32),
        in_specs=[vmem] * len(inputs),
        out_specs=vmem,
    )(*inputs)


# ---------------------------------- params ------------------------------------
def init_params(key):
    ks = jax.random.split(key, 7)

    def nrm(k, shape, scale=0.02):
        return scale * jax.random.normal(k, shape, dtype=jnp.float32)

    # fold the 1/sqrt(head_dim) attention scale into the query projection
    # (weights AND bias) at init time -> no in-kernel scale multiply.
    inv_sqrt_hd = 1.0 / (HD ** 0.5)
    wqkv = nrm(ks[3], (LAYERS, 3 * NH, H, HD))
    wqkv = wqkv.at[:, 0:NH].multiply(inv_sqrt_hd)
    bqkv = jnp.zeros((LAYERS, 3 * NH, 1, HD), jnp.float32)
    bqkv = bqkv.at[:, 0:NH].multiply(inv_sqrt_hd)

    return {
        # MXU operands stored bf16 (f32 accumulation in-kernel); additive
        # params (biases, LayerNorm, pos/type embeddings) stay f32.
        "word_emb": nrm(ks[0], (VOCAB, H)).astype(jnp.bfloat16),
        "pos_emb": nrm(ks[1], (S, H)),
        "type_row": nrm(ks[2], (2, H))[0:1],            # token-type-0 row [1, H]
        "emb_ln_g": jnp.ones((1, H), jnp.float32),
        "emb_ln_b": jnp.zeros((1, H), jnp.float32),
        # attention weights stacked per layer AND per head:
        #   wqkv[l, 0:NH]   = Wq heads, [H, HD] each (scale pre-folded)
        #   wqkv[l, NH:2NH] = Wk heads, wqkv[l, 2NH:3NH] = Wv heads
        #   wo[l, h]        = Wo rows for head h, [HD, H]
        "wqkv": wqkv.astype(jnp.bfloat16),
        "bqkv": bqkv,
        "wo": nrm(ks[4], (LAYERS, NH, HD, H)).astype(jnp.bfloat16),
        "bo": jnp.zeros((LAYERS, 1, H), jnp.float32),
        "ln1_g": jnp.ones((LAYERS, 1, H), jnp.float32),
        "ln1_b": jnp.zeros((LAYERS, 1, H), jnp.float32),
        "w1": nrm(ks[5], (LAYERS, H, FFN)).astype(jnp.bfloat16),
        "b1": jnp.zeros((LAYERS, 1, FFN), jnp.float32),
        "w2": nrm(ks[6], (LAYERS, FFN, H)).astype(jnp.bfloat16),
        "b2": jnp.zeros((LAYERS, 1, H), jnp.float32),
        "ln2_g": jnp.ones((LAYERS, 1, H), jnp.float32),
        "ln2_b": jnp.zeros((LAYERS, 1, H), jnp.float32),
    }


# ------------------------------------ main -------------------------------------
if __name__ == "__main__":
    key = jax.random.PRNGKey(0)
    pkey, ikey = jax.random.split(key)
    params = init_params(pkey)

    # TODO(synk): BertTokenizer string handling (split / '##' filtering /
    # convert_tokens_to_ids) has no Pallas equivalent; we start from token ids.
    token_ids = jax.random.randint(ikey, (1, S), 0, VOCAB, dtype=jnp.int32)

    hidden = multilingual_lexer_forward(token_ids, params)
    hidden = jax.block_until_ready(hidden)
    assert hidden.shape == (S, H) and hidden.dtype == jnp.float32
    assert bool(jnp.all(jnp.isfinite(hidden)))
    print("KERNEL_OK")
</pallas_src>

<mosaic_0001>
module attributes {stable_mosaic.version = 11 : i64} {
  func.func @fused_encoder_kernel(%arg0: memref<8x1xi32, #tpu.memory_space<vmem>>, %arg1: memref<128x128xbf16, #tpu.memory_space<vmem>>, %arg2: memref<8x128xf32, #tpu.memory_space<vmem>>, %arg3: memref<1x128xf32, #tpu.memory_space<vmem>>, %arg4: memref<1x128xf32, #tpu.memory_space<vmem>>, %arg5: memref<1x128xf32, #tpu.memory_space<vmem>>, %arg6: memref<2x12x128x32xbf16, #tpu.memory_space<vmem>>, %arg7: memref<2x12x1x32xf32, #tpu.memory_space<vmem>>, %arg8: memref<2x4x32x128xbf16, #tpu.memory_space<vmem>>, %arg9: memref<2x1x128xf32, #tpu.memory_space<vmem>>, %arg10: memref<2x1x128xf32, #tpu.memory_space<vmem>>, %arg11: memref<2x1x128xf32, #tpu.memory_space<vmem>>, %arg12: memref<2x128x256xbf16, #tpu.memory_space<vmem>>, %arg13: memref<2x1x256xf32, #tpu.memory_space<vmem>>, %arg14: memref<2x256x128xbf16, #tpu.memory_space<vmem>>, %arg15: memref<2x1x128xf32, #tpu.memory_space<vmem>>, %arg16: memref<2x1x128xf32, #tpu.memory_space<vmem>>, %arg17: memref<2x1x128xf32, #tpu.memory_space<vmem>>, %arg18: memref<8x128xf32, #tpu.memory_space<vmem>>) attributes {dimension_semantics = [], scalar_prefetch = 0 : i64, scratch_operands = 0 : i64, tpu.core_type = #tpu.core_type<tc>} {
    %c0 = arith.constant 0 : index
    %c0_0 = arith.constant 0 : index
    %0 = vector.load %arg0[%c0, %c0_0] : memref<8x1xi32, #tpu.memory_space<vmem>>, vector<8x1xi32>
    %1 = tpu.iota {dimensions = array<i32: 1>} : vector<8x128xi32>
    %2 = vector.broadcast %0 : vector<8x1xi32> to vector<8x128xi32>
    %3 = arith.cmpi eq, %2, %1 : vector<8x128xi32>
    %cst = arith.constant 1.000000e+00 : f32
    %cst_1 = arith.constant 0.000000e+00 : f32
    %4 = vector.broadcast %cst : f32 to vector<8x128xf32>
    %5 = vector.broadcast %cst_1 : f32 to vector<8x128xf32>
    %6 = arith.select %3, %4, %5 : vector<8x128xi1>, vector<8x128xf32>
    %7 = arith.truncf %6 : vector<8x128xf32> to vector<8x128xbf16>
    %c0_2 = arith.constant 0 : index
    %c0_3 = arith.constant 0 : index
    %8 = vector.load %arg1[%c0_2, %c0_3] : memref<128x128xbf16, #tpu.memory_space<vmem>>, vector<128x128xbf16>
    %cst_4 = arith.constant dense<0.000000e+00> : vector<8x128xf32>
    %9 = tpu.matmul %7, %8, %cst_4 {dimension_numbers = #tpu.dot_dimension_numbers<[1], [0], [0], [1], [0, 0, 1, 1], [], []>} : vector<8x128xbf16>, vector<128x128xbf16>, vector<8x128xf32> -> vector<8x128xf32>
    %c0_5 = arith.constant 0 : index
    %c0_6 = arith.constant 0 : index
    %10 = vector.load %arg2[%c0_5, %c0_6] : memref<8x128xf32, #tpu.memory_space<vmem>>, vector<8x128xf32>
    %11 = arith.addf %9, %10 : vector<8x128xf32>
    %c0_7 = arith.constant 0 : index
    %c0_8 = arith.constant 0 : index
    %12 = vector.load %arg3[%c0_7, %c0_8] : memref<1x128xf32, #tpu.memory_space<vmem>>, vector<1x128xf32>
    %13 = vector.broadcast %12 : vector<1x128xf32> to vector<8x128xf32>
    %14 = arith.addf %11, %13 : vector<8x128xf32>
    %c0_9 = arith.constant 0 : index
    %c0_10 = arith.constant 0 : index
    %15 = vector.load %arg4[%c0_9, %c0_10] : memref<1x128xf32, #tpu.memory_space<vmem>>, vector<1x128xf32>
    %c0_11 = arith.constant 0 : index
    %c0_12 = arith.constant 0 : index
    %16 = vector.load %arg5[%c0_11, %c0_12] : memref<1x128xf32, #tpu.memory_space<vmem>>, vector<1x128xf32>
    %cst_13 = arith.constant dense<0.000000e+00> : vector<8xf32>
    %17 = vector.multi_reduction <add>, %14, %cst_13 [1] : vector<8x128xf32> to vector<8xf32>
    %18 = vector.shape_cast %17 : vector<8xf32> to vector<8x1xf32>
    %cst_14 = arith.constant 1.280000e+02 : f32
    %19 = vector.broadcast %cst_14 : f32 to vector<8x1xf32>
    %20 = arith.divf %18, %19 : vector<8x1xf32>
    %21 = vector.broadcast %20 : vector<8x1xf32> to vector<8x128xf32>
    %22 = arith.subf %14, %21 : vector<8x128xf32>
    %23 = vector.broadcast %20 : vector<8x1xf32> to vector<8x128xf32>
    %24 = arith.subf %14, %23 : vector<8x128xf32>
    %25 = arith.mulf %22, %24 : vector<8x128xf32>
    %cst_15 = arith.constant dense<0.000000e+00> : vector<8xf32>
    %26 = vector.multi_reduction <add>, %25, %cst_15 [1] : vector<8x128xf32> to vector<8xf32>
    %27 = vector.shape_cast %26 : vector<8xf32> to vector<8x1xf32>
    %cst_16 = arith.constant 1.280000e+02 : f32
    %28 = vector.broadcast %cst_16 : f32 to vector<8x1xf32>
    %29 = arith.divf %27, %28 : vector<8x1xf32>
    %30 = vector.broadcast %20 : vector<8x1xf32> to vector<8x128xf32>
    %31 = arith.subf %14, %30 : vector<8x128xf32>
    %cst_17 = arith.constant 9.99999996E-13 : f32
    %32 = vector.broadcast %cst_17 : f32 to vector<8x1xf32>
    %33 = arith.addf %29, %32 : vector<8x1xf32>
    %34 = math.rsqrt %33 : vector<8x1xf32>
    %35 = vector.broadcast %34 : vector<8x1xf32> to vector<8x128xf32>
    %36 = arith.mulf %31, %35 : vector<8x128xf32>
    %37 = vector.broadcast %15 : vector<1x128xf32> to vector<8x128xf32>
    %38 = arith.mulf %36, %37 : vector<8x128xf32>
    %39 = vector.broadcast %16 : vector<1x128xf32> to vector<8x128xf32>
    %40 = arith.addf %38, %39 : vector<8x128xf32>
    %41 = arith.truncf %40 : vector<8x128xf32> to vector<8x128xbf16>
    %42 = vector.shape_cast %41 : vector<8x128xbf16> to vector<1x8x128xbf16>
    %43 = vector.shape_cast %42 : vector<1x8x128xbf16> to vector<1x8x128xbf16>
    %44 = vector.broadcast %43 : vector<1x8x128xbf16> to vector<12x8x128xbf16>
    %c0_18 = arith.constant 0 : index
    %c0_19 = arith.constant 0 : index
    %c0_20 = arith.constant 0 : index
    %c0_21 = arith.constant 0 : index
    %45 = vector.load %arg6[%c0_18, %c0_19, %c0_20, %c0_21] : memref<2x12x128x32xbf16, #tpu.memory_space<vmem>>, vector<1x12x128x32xbf16>
    %46 = vector.shape_cast %45 : vector<1x12x128x32xbf16> to vector<12x128x32xbf16>
    %cst_22 = arith.constant dense<0.000000e+00> : vector<12x8x32xf32>
    %47 = tpu.matmul %44, %46, %cst_22 {dimension_numbers = #tpu.dot_dimension_numbers<[2], [1], [1], [2], [0, 0, 0, 1, 1, 2], [0], [0]>} : vector<12x8x128xbf16>, vector<12x128x32xbf16>, vector<12x8x32xf32> -> vector<12x8x32xf32>
    %c0_23 = arith.constant 0 : index
    %c0_24 = arith.constant 0 : index
    %c0_25 = arith.constant 0 : index
    %c0_26 = arith.constant 0 : index
    %48 = vector.load %arg7[%c0_23, %c0_24, %c0_25, %c0_26] : memref<2x12x1x32xf32, #tpu.memory_space<vmem>>, vector<1x12x1x32xf32>
    %49 = vector.shape_cast %48 : vector<1x12x1x32xf32> to vector<12x1x32xf32>
    %50 = vector.broadcast %49 : vector<12x1x32xf32> to vector<12x8x32xf32>
    %51 = arith.addf %47, %50 : vector<12x8x32xf32>
    %52 = vector.extract_strided_slice %51 {offsets = [0, 0, 0], sizes = [4, 8, 32], strides = [1, 1, 1]} : vector<12x8x32xf32> to vector<4x8x32xf32>
    %53 = arith.truncf %52 : vector<4x8x32xf32> to vector<4x8x32xbf16>
    %54 = vector.extract_strided_slice %51 {offsets = [4, 0, 0], sizes = [4, 8, 32], strides = [1, 1, 1]} : vector<12x8x32xf32> to vector<4x8x32xf32>
    %55 = arith.truncf %54 : vector<4x8x32xf32> to vector<4x8x32xbf16>
    %56 = vector.extract_strided_slice %51 {offsets = [8, 0, 0], sizes = [4, 8, 32], strides = [1, 1, 1]} : vector<12x8x32xf32> to vector<4x8x32xf32>
    %57 = arith.truncf %56 : vector<4x8x32xf32> to vector<4x8x32xbf16>
    %cst_27 = arith.constant dense<0.000000e+00> : vector<4x8x8xf32>
    %58 = tpu.matmul %53, %55, %cst_27 {dimension_numbers = #tpu.dot_dimension_numbers<[2], [2], [1], [1], [0, 0, 0, 1, 1, 1], [0], [0]>} : vector<4x8x32xbf16>, vector<4x8x32xbf16>, vector<4x8x8xf32> -> vector<4x8x8xf32>
    %cst_28 = arith.constant dense<0xFF800000> : vector<4x8xf32>
    %59 = vector.multi_reduction <maximumf>, %58, %cst_28 [2] : vector<4x8x8xf32> to vector<4x8xf32>
    %60 = vector.shape_cast %59 : vector<4x8xf32> to vector<4x8x1xf32>
    %61 = vector.broadcast %60 : vector<4x8x1xf32> to vector<4x8x8xf32>
    %62 = arith.subf %58, %61 : vector<4x8x8xf32>
    %63 = math.exp %62 : vector<4x8x8xf32>
    %cst_29 = arith.constant dense<0.000000e+00> : vector<4x8xf32>
    %64 = vector.multi_reduction <add>, %63, %cst_29 [2] : vector<4x8x8xf32> to vector<4x8xf32>
    %65 = vector.shape_cast %64 : vector<4x8xf32> to vector<4x8x1xf32>
    %66 = tpu.reciprocal %65 {approx = true} : vector<4x8x1xf32> -> vector<4x8x1xf32>
    %67 = vector.broadcast %66 : vector<4x8x1xf32> to vector<4x8x8xf32>
    %68 = arith.mulf %63, %67 : vector<4x8x8xf32>
    %69 = arith.truncf %68 : vector<4x8x8xf32> to vector<4x8x8xbf16>
    %cst_30 = arith.constant dense<0.000000e+00> : vector<4x8x32xf32>
    %70 = tpu.matmul %69, %57, %cst_30 {dimension_numbers = #tpu.dot_dimension_numbers<[2], [1], [1], [2], [0, 0, 0, 1, 1, 2], [0], [0]>} : vector<4x8x8xbf16>, vector<4x8x32xbf16>, vector<4x8x32xf32> -> vector<4x8x32xf32>
    %71 = arith.truncf %70 : vector<4x8x32xf32> to vector<4x8x32xbf16>
    %c0_31 = arith.constant 0 : index
    %c0_32 = arith.constant 0 : index
    %c0_33 = arith.constant 0 : index
    %c0_34 = arith.constant 0 : index
    %72 = vector.load %arg8[%c0_31, %c0_32, %c0_33, %c0_34] : memref<2x4x32x128xbf16, #tpu.memory_space<vmem>>, vector<1x4x32x128xbf16>
    %73 = vector.shape_cast %72 : vector<1x4x32x128xbf16> to vector<4x32x128xbf16>
    %cst_35 = arith.constant dense<0.000000e+00> : vector<4x8x128xf32>
    %74 = tpu.matmul %71, %73, %cst_35 {dimension_numbers = #tpu.dot_dimension_numbers<[2], [1], [1], [2], [0, 0, 0, 1, 1, 2], [0], [0]>} : vector<4x8x32xbf16>, vector<4x32x128xbf16>, vector<4x8x128xf32> -> vector<4x8x128xf32>
    %75 = vector.extract_strided_slice %74 {offsets = [0, 0, 0], sizes = [1, 8, 128], strides = [1, 1, 1]} : vector<4x8x128xf32> to vector<1x8x128xf32>
    %76 = vector.shape_cast %75 : vector<1x8x128xf32> to vector<8x128xf32>
    %77 = vector.extract_strided_slice %74 {offsets = [1, 0, 0], sizes = [1, 8, 128], strides = [1, 1, 1]} : vector<4x8x128xf32> to vector<1x8x128xf32>
    %78 = vector.shape_cast %77 : vector<1x8x128xf32> to vector<8x128xf32>
    %79 = arith.addf %76, %78 : vector<8x128xf32>
    %80 = vector.extract_strided_slice %74 {offsets = [2, 0, 0], sizes = [1, 8, 128], strides = [1, 1, 1]} : vector<4x8x128xf32> to vector<1x8x128xf32>
    %81 = vector.shape_cast %80 : vector<1x8x128xf32> to vector<8x128xf32>
    %82 = arith.addf %79, %81 : vector<8x128xf32>
    %83 = vector.extract_strided_slice %74 {offsets = [3, 0, 0], sizes = [1, 8, 128], strides = [1, 1, 1]} : vector<4x8x128xf32> to vector<1x8x128xf32>
    %84 = vector.shape_cast %83 : vector<1x8x128xf32> to vector<8x128xf32>
    %85 = arith.addf %82, %84 : vector<8x128xf32>
    %c0_36 = arith.constant 0 : index
    %c0_37 = arith.constant 0 : index
    %c0_38 = arith.constant 0 : index
    %86 = vector.load %arg9[%c0_36, %c0_37, %c0_38] : memref<2x1x128xf32, #tpu.memory_space<vmem>>, vector<1x1x128xf32>
    %87 = vector.shape_cast %86 : vector<1x1x128xf32> to vector<1x128xf32>
    %88 = vector.broadcast %87 : vector<1x128xf32> to vector<8x128xf32>
    %89 = arith.addf %85, %88 : vector<8x128xf32>
    %90 = arith.addf %40, %89 : vector<8x128xf32>
    %c0_39 = arith.constant 0 : index
    %c0_40 = arith.constant 0 : index
    %c0_41 = arith.constant 0 : index
    %91 = vector.load %arg10[%c0_39, %c0_40, %c0_41] : memref<2x1x128xf32, #tpu.memory_space<vmem>>, vector<1x1x128xf32>
    %92 = vector.shape_cast %91 : vector<1x1x128xf32> to vector<1x128xf32>
    %c0_42 = arith.constant 0 : index
    %c0_43 = arith.constant 0 : index
    %c0_44 = arith.constant 0 : index
    %93 = vector.load %arg11[%c0_42, %c0_43, %c0_44] : memref<2x1x128xf32, #tpu.memory_space<vmem>>, vector<1x1x128xf32>
    %94 = vector.shape_cast %93 : vector<1x1x128xf32> to vector<1x128xf32>
    %cst_45 = arith.constant dense<0.000000e+00> : vector<8xf32>
    %95 = vector.multi_reduction <add>, %90, %cst_45 [1] : vector<8x128xf32> to vector<8xf32>
    %96 = vector.shape_cast %95 : vector<8xf32> to vector<8x1xf32>
    %cst_46 = arith.constant 1.280000e+02 : f32
    %97 = vector.broadcast %cst_46 : f32 to vector<8x1xf32>
    %98 = arith.divf %96, %97 : vector<8x1xf32>
    %99 = vector.broadcast %98 : vector<8x1xf32> to vector<8x128xf32>
    %100 = arith.subf %90, %99 : vector<8x128xf32>
    %101 = vector.broadcast %98 : vector<8x1xf32> to vector<8x128xf32>
    %102 = arith.subf %90, %101 : vector<8x128xf32>
    %103 = arith.mulf %100, %102 : vector<8x128xf32>
    %cst_47 = arith.constant dense<0.000000e+00> : vector<8xf32>
    %104 = vector.multi_reduction <add>, %103, %cst_47 [1] : vector<8x128xf32> to vector<8xf32>
    %105 = vector.shape_cast %104 : vector<8xf32> to vector<8x1xf32>
    %cst_48 = arith.constant 1.280000e+02 : f32
    %106 = vector.broadcast %cst_48 : f32 to vector<8x1xf32>
    %107 = arith.divf %105, %106 : vector<8x1xf32>
    %108 = vector.broadcast %98 : vector<8x1xf32> to vector<8x128xf32>
    %109 = arith.subf %90, %108 : vector<8x128xf32>
    %cst_49 = arith.constant 9.99999996E-13 : f32
    %110 = vector.broadcast %cst_49 : f32 to vector<8x1xf32>
    %111 = arith.addf %107, %110 : vector<8x1xf32>
    %112 = math.rsqrt %111 : vector<8x1xf32>
    %113 = vector.broadcast %112 : vector<8x1xf32> to vector<8x128xf32>
    %114 = arith.mulf %109, %113 : vector<8x128xf32>
    %115 = vector.broadcast %92 : vector<1x128xf32> to vector<8x128xf32>
    %116 = arith.mulf %114, %115 : vector<8x128xf32>
    %117 = vector.broadcast %94 : vector<1x128xf32> to vector<8x128xf32>
    %118 = arith.addf %116, %117 : vector<8x128xf32>
    %119 = arith.truncf %118 : vector<8x128xf32> to vector<8x128xbf16>
    %c0_50 = arith.constant 0 : index
    %c0_51 = arith.constant 0 : index
    %c0_52 = arith.constant 0 : index
    %120 = vector.load %arg12[%c0_50, %c0_51, %c0_52] : memref<2x128x256xbf16, #tpu.memory_space<vmem>>, vector<1x128x256xbf16>
    %121 = vector.shape_cast %120 : vector<1x128x256xbf16> to vector<128x256xbf16>
    %cst_53 = arith.constant dense<0.000000e+00> : vector<8x256xf32>
    %122 = tpu.matmul %119, %121, %cst_53 {dimension_numbers = #tpu.dot_dimension_numbers<[1], [0], [0], [1], [0, 0, 1, 1], [], []>} : vector<8x128xbf16>, vector<128x256xbf16>, vector<8x256xf32> -> vector<8x256xf32>
    %c0_54 = arith.constant 0 : index
    %c0_55 = arith.constant 0 : index
    %c0_56 = arith.constant 0 : index
    %123 = vector.load %arg13[%c0_54, %c0_55, %c0_56] : memref<2x1x256xf32, #tpu.memory_space<vmem>>, vector<1x1x256xf32>
    %124 = vector.shape_cast %123 : vector<1x1x256xf32> to vector<1x256xf32>
    %125 = vector.broadcast %124 : vector<1x256xf32> to vector<8x256xf32>
    %126 = arith.addf %122, %125 : vector<8x256xf32>
    %cst_57 = arith.constant 5.000000e-01 : f32
    %127 = vector.broadcast %cst_57 : f32 to vector<8x256xf32>
    %128 = arith.mulf %127, %126 : vector<8x256xf32>
    %cst_58 = arith.constant 4.471500e-02 : f32
    %129 = vector.broadcast %cst_58 : f32 to vector<8x256xf32>
    %130 = arith.mulf %129, %126 : vector<8x256xf32>
    %131 = arith.mulf %130, %126 : vector<8x256xf32>
    %132 = arith.mulf %131, %126 : vector<8x256xf32>
    %133 = arith.addf %126, %132 : vector<8x256xf32>
    %cst_59 = arith.constant 0.797884583 : f32
    %134 = vector.broadcast %cst_59 : f32 to vector<8x256xf32>
    %135 = arith.mulf %134, %133 : vector<8x256xf32>
    %136 = math.tanh %135 : vector<8x256xf32>
    %cst_60 = arith.constant 1.000000e+00 : f32
    %137 = vector.broadcast %cst_60 : f32 to vector<8x256xf32>
    %138 = arith.addf %137, %136 : vector<8x256xf32>
    %139 = arith.mulf %128, %138 : vector<8x256xf32>
    %140 = arith.truncf %139 : vector<8x256xf32> to vector<8x256xbf16>
    %c0_61 = arith.constant 0 : index
    %c0_62 = arith.constant 0 : index
    %c0_63 = arith.constant 0 : index
    %141 = vector.load %arg14[%c0_61, %c0_62, %c0_63] : memref<2x256x128xbf16, #tpu.memory_space<vmem>>, vector<1x256x128xbf16>
    %142 = vector.shape_cast %141 : vector<1x256x128xbf16> to vector<256x128xbf16>
    %cst_64 = arith.constant dense<0.000000e+00> : vector<8x128xf32>
    %143 = tpu.matmul %140, %142, %cst_64 {dimension_numbers = #tpu.dot_dimension_numbers<[1], [0], [0], [1], [0, 0, 1, 1], [], []>} : vector<8x256xbf16>, vector<256x128xbf16>, vector<8x128xf32> -> vector<8x128xf32>
    %c0_65 = arith.constant 0 : index
    %c0_66 = arith.constant 0 : index
    %c0_67 = arith.constant 0 : index
    %144 = vector.load %arg15[%c0_65, %c0_66, %c0_67] : memref<2x1x128xf32, #tpu.memory_space<vmem>>, vector<1x1x128xf32>
    %145 = vector.shape_cast %144 : vector<1x1x128xf32> to vector<1x128xf32>
    %146 = vector.broadcast %145 : vector<1x128xf32> to vector<8x128xf32>
    %147 = arith.addf %143, %146 : vector<8x128xf32>
    %148 = arith.addf %118, %147 : vector<8x128xf32>
    %c0_68 = arith.constant 0 : index
    %c0_69 = arith.constant 0 : index
    %c0_70 = arith.constant 0 : index
    %149 = vector.load %arg16[%c0_68, %c0_69, %c0_70] : memref<2x1x128xf32, #tpu.memory_space<vmem>>, vector<1x1x128xf32>
    %150 = vector.shape_cast %149 : vector<1x1x128xf32> to vector<1x128xf32>
    %c0_71 = arith.constant 0 : index
    %c0_72 = arith.constant 0 : index
    %c0_73 = arith.constant 0 : index
    %151 = vector.load %arg17[%c0_71, %c0_72, %c0_73] : memref<2x1x128xf32, #tpu.memory_space<vmem>>, vector<1x1x128xf32>
    %152 = vector.shape_cast %151 : vector<1x1x128xf32> to vector<1x128xf32>
    %cst_74 = arith.constant dense<0.000000e+00> : vector<8xf32>
    %153 = vector.multi_reduction <add>, %148, %cst_74 [1] : vector<8x128xf32> to vector<8xf32>
    %154 = vector.shape_cast %153 : vector<8xf32> to vector<8x1xf32>
    %cst_75 = arith.constant 1.280000e+02 : f32
    %155 = vector.broadcast %cst_75 : f32 to vector<8x1xf32>
    %156 = arith.divf %154, %155 : vector<8x1xf32>
    %157 = vector.broadcast %156 : vector<8x1xf32> to vector<8x128xf32>
    %158 = arith.subf %148, %157 : vector<8x128xf32>
    %159 = vector.broadcast %156 : vector<8x1xf32> to vector<8x128xf32>
    %160 = arith.subf %148, %159 : vector<8x128xf32>
    %161 = arith.mulf %158, %160 : vector<8x128xf32>
    %cst_76 = arith.constant dense<0.000000e+00> : vector<8xf32>
    %162 = vector.multi_reduction <add>, %161, %cst_76 [1] : vector<8x128xf32> to vector<8xf32>
    %163 = vector.shape_cast %162 : vector<8xf32> to vector<8x1xf32>
    %cst_77 = arith.constant 1.280000e+02 : f32
    %164 = vector.broadcast %cst_77 : f32 to vector<8x1xf32>
    %165 = arith.divf %163, %164 : vector<8x1xf32>
    %166 = vector.broadcast %156 : vector<8x1xf32> to vector<8x128xf32>
    %167 = arith.subf %148, %166 : vector<8x128xf32>
    %cst_78 = arith.constant 9.99999996E-13 : f32
    %168 = vector.broadcast %cst_78 : f32 to vector<8x1xf32>
    %169 = arith.addf %165, %168 : vector<8x1xf32>
    %170 = math.rsqrt %169 : vector<8x1xf32>
    %171 = vector.broadcast %170 : vector<8x1xf32> to vector<8x128xf32>
    %172 = arith.mulf %167, %171 : vector<8x128xf32>
    %173 = vector.broadcast %150 : vector<1x128xf32> to vector<8x128xf32>
    %174 = arith.mulf %172, %173 : vector<8x128xf32>
    %175 = vector.broadcast %152 : vector<1x128xf32> to vector<8x128xf32>
    %176 = arith.addf %174, %175 : vector<8x128xf32>
    %177 = arith.truncf %176 : vector<8x128xf32> to vector<8x128xbf16>
    %178 = vector.shape_cast %177 : vector<8x128xbf16> to vector<1x8x128xbf16>
    %179 = vector.shape_cast %178 : vector<1x8x128xbf16> to vector<1x8x128xbf16>
    %180 = vector.broadcast %179 : vector<1x8x128xbf16> to vector<12x8x128xbf16>
    %c1 = arith.constant 1 : index
    %c0_79 = arith.constant 0 : index
    %c0_80 = arith.constant 0 : index
    %c0_81 = arith.constant 0 : index
    %181 = vector.load %arg6[%c1, %c0_79, %c0_80, %c0_81] : memref<2x12x128x32xbf16, #tpu.memory_space<vmem>>, vector<1x12x128x32xbf16>
    %182 = vector.shape_cast %181 : vector<1x12x128x32xbf16> to vector<12x128x32xbf16>
    %cst_82 = arith.constant dense<0.000000e+00> : vector<12x8x32xf32>
    %183 = tpu.matmul %180, %182, %cst_82 {dimension_numbers = #tpu.dot_dimension_numbers<[2], [1], [1], [2], [0, 0, 0, 1, 1, 2], [0], [0]>} : vector<12x8x128xbf16>, vector<12x128x32xbf16>, vector<12x8x32xf32> -> vector<12x8x32xf32>
    %c1_83 = arith.constant 1 : index
    %c0_84 = arith.constant 0 : index
    %c0_85 = arith.constant 0 : index
    %c0_86 = arith.constant 0 : index
    %184 = vector.load %arg7[%c1_83, %c0_84, %c0_85, %c0_86] : memref<2x12x1x32xf32, #tpu.memory_space<vmem>>, vector<1x12x1x32xf32>
    %185 = vector.shape_cast %184 : vector<1x12x1x32xf32> to vector<12x1x32xf32>
    %186 = vector.broadcast %185 : vector<12x1x32xf32> to vector<12x8x32xf32>
    %187 = arith.addf %183, %186 : vector<12x8x32xf32>
    %188 = vector.extract_strided_slice %187 {offsets = [0, 0, 0], sizes = [4, 8, 32], strides = [1, 1, 1]} : vector<12x8x32xf32> to vector<4x8x32xf32>
    %189 = arith.truncf %188 : vector<4x8x32xf32> to vector<4x8x32xbf16>
    %190 = vector.extract_strided_slice %187 {offsets = [4, 0, 0], sizes = [4, 8, 32], strides = [1, 1, 1]} : vector<12x8x32xf32> to vector<4x8x32xf32>
    %191 = arith.truncf %190 : vector<4x8x32xf32> to vector<4x8x32xbf16>
    %192 = vector.extract_strided_slice %187 {offsets = [8, 0, 0], sizes = [4, 8, 32], strides = [1, 1, 1]} : vector<12x8x32xf32> to vector<4x8x32xf32>
    %193 = arith.truncf %192 : vector<4x8x32xf32> to vector<4x8x32xbf16>
    %cst_87 = arith.constant dense<0.000000e+00> : vector<4x8x8xf32>
    %194 = tpu.matmul %189, %191, %cst_87 {dimension_numbers = #tpu.dot_dimension_numbers<[2], [2], [1], [1], [0, 0, 0, 1, 1, 1], [0], [0]>} : vector<4x8x32xbf16>, vector<4x8x32xbf16>, vector<4x8x8xf32> -> vector<4x8x8xf32>
    %cst_88 = arith.constant dense<0xFF800000> : vector<4x8xf32>
    %195 = vector.multi_reduction <maximumf>, %194, %cst_88 [2] : vector<4x8x8xf32> to vector<4x8xf32>
    %196 = vector.shape_cast %195 : vector<4x8xf32> to vector<4x8x1xf32>
    %197 = vector.broadcast %196 : vector<4x8x1xf32> to vector<4x8x8xf32>
    %198 = arith.subf %194, %197 : vector<4x8x8xf32>
    %199 = math.exp %198 : vector<4x8x8xf32>
    %cst_89 = arith.constant dense<0.000000e+00> : vector<4x8xf32>
    %200 = vector.multi_reduction <add>, %199, %cst_89 [2] : vector<4x8x8xf32> to vector<4x8xf32>
    %201 = vector.shape_cast %200 : vector<4x8xf32> to vector<4x8x1xf32>
    %202 = tpu.reciprocal %201 {approx = true} : vector<4x8x1xf32> -> vector<4x8x1xf32>
    %203 = vector.broadcast %202 : vector<4x8x1xf32> to vector<4x8x8xf32>
    %204 = arith.mulf %199, %203 : vector<4x8x8xf32>
    %205 = arith.truncf %204 : vector<4x8x8xf32> to vector<4x8x8xbf16>
    %cst_90 = arith.constant dense<0.000000e+00> : vector<4x8x32xf32>
    %206 = tpu.matmul %205, %193, %cst_90 {dimension_numbers = #tpu.dot_dimension_numbers<[2], [1], [1], [2], [0, 0, 0, 1, 1, 2], [0], [0]>} : vector<4x8x8xbf16>, vector<4x8x32xbf16>, vector<4x8x32xf32> -> vector<4x8x32xf32>
    %207 = arith.truncf %206 : vector<4x8x32xf32> to vector<4x8x32xbf16>
    %c1_91 = arith.constant 1 : index
    %c0_92 = arith.constant 0 : index
    %c0_93 = arith.constant 0 : index
    %c0_94 = arith.constant 0 : index
    %208 = vector.load %arg8[%c1_91, %c0_92, %c0_93, %c0_94] : memref<2x4x32x128xbf16, #tpu.memory_space<vmem>>, vector<1x4x32x128xbf16>
    %209 = vector.shape_cast %208 : vector<1x4x32x128xbf16> to vector<4x32x128xbf16>
    %cst_95 = arith.constant dense<0.000000e+00> : vector<4x8x128xf32>
    %210 = tpu.matmul %207, %209, %cst_95 {dimension_numbers = #tpu.dot_dimension_numbers<[2], [1], [1], [2], [0, 0, 0, 1, 1, 2], [0], [0]>} : vector<4x8x32xbf16>, vector<4x32x128xbf16>, vector<4x8x128xf32> -> vector<4x8x128xf32>
    %211 = vector.extract_strided_slice %210 {offsets = [0, 0, 0], sizes = [1, 8, 128], strides = [1, 1, 1]} : vector<4x8x128xf32> to vector<1x8x128xf32>
    %212 = vector.shape_cast %211 : vector<1x8x128xf32> to vector<8x128xf32>
    %213 = vector.extract_strided_slice %210 {offsets = [1, 0, 0], sizes = [1, 8, 128], strides = [1, 1, 1]} : vector<4x8x128xf32> to vector<1x8x128xf32>
    %214 = vector.shape_cast %213 : vector<1x8x128xf32> to vector<8x128xf32>
    %215 = arith.addf %212, %214 : vector<8x128xf32>
    %216 = vector.extract_strided_slice %210 {offsets = [2, 0, 0], sizes = [1, 8, 128], strides = [1, 1, 1]} : vector<4x8x128xf32> to vector<1x8x128xf32>
    %217 = vector.shape_cast %216 : vector<1x8x128xf32> to vector<8x128xf32>
    %218 = arith.addf %215, %217 : vector<8x128xf32>
    %219 = vector.extract_strided_slice %210 {offsets = [3, 0, 0], sizes = [1, 8, 128], strides = [1, 1, 1]} : vector<4x8x128xf32> to vector<1x8x128xf32>
    %220 = vector.shape_cast %219 : vector<1x8x128xf32> to vector<8x128xf32>
    %221 = arith.addf %218, %220 : vector<8x128xf32>
    %c1_96 = arith.constant 1 : index
    %c0_97 = arith.constant 0 : index
    %c0_98 = arith.constant 0 : index
    %222 = vector.load %arg9[%c1_96, %c0_97, %c0_98] : memref<2x1x128xf32, #tpu.memory_space<vmem>>, vector<1x1x128xf32>
    %223 = vector.shape_cast %222 : vector<1x1x128xf32> to vector<1x128xf32>
    %224 = vector.broadcast %223 : vector<1x128xf32> to vector<8x128xf32>
    %225 = arith.addf %221, %224 : vector<8x128xf32>
    %226 = arith.addf %176, %225 : vector<8x128xf32>
    %c1_99 = arith.constant 1 : index
    %c0_100 = arith.constant 0 : index
    %c0_101 = arith.constant 0 : index
    %227 = vector.load %arg10[%c1_99, %c0_100, %c0_101] : memref<2x1x128xf32, #tpu.memory_space<vmem>>, vector<1x1x128xf32>
    %228 = vector.shape_cast %227 : vector<1x1x128xf32> to vector<1x128xf32>
    %c1_102 = arith.constant 1 : index
    %c0_103 = arith.constant 0 : index
    %c0_104 = arith.constant 0 : index
    %229 = vector.load %arg11[%c1_102, %c0_103, %c0_104] : memref<2x1x128xf32, #tpu.memory_space<vmem>>, vector<1x1x128xf32>
    %230 = vector.shape_cast %229 : vector<1x1x128xf32> to vector<1x128xf32>
    %cst_105 = arith.constant dense<0.000000e+00> : vector<8xf32>
    %231 = vector.multi_reduction <add>, %226, %cst_105 [1] : vector<8x128xf32> to vector<8xf32>
    %232 = vector.shape_cast %231 : vector<8xf32> to vector<8x1xf32>
    %cst_106 = arith.constant 1.280000e+02 : f32
    %233 = vector.broadcast %cst_106 : f32 to vector<8x1xf32>
    %234 = arith.divf %232, %233 : vector<8x1xf32>
    %235 = vector.broadcast %234 : vector<8x1xf32> to vector<8x128xf32>
    %236 = arith.subf %226, %235 : vector<8x128xf32>
    %237 = vector.broadcast %234 : vector<8x1xf32> to vector<8x128xf32>
    %238 = arith.subf %226, %237 : vector<8x128xf32>
    %239 = arith.mulf %236, %238 : vector<8x128xf32>
    %cst_107 = arith.constant dense<0.000000e+00> : vector<8xf32>
    %240 = vector.multi_reduction <add>, %239, %cst_107 [1] : vector<8x128xf32> to vector<8xf32>
    %241 = vector.shape_cast %240 : vector<8xf32> to vector<8x1xf32>
    %cst_108 = arith.constant 1.280000e+02 : f32
    %242 = vector.broadcast %cst_108 : f32 to vector<8x1xf32>
    %243 = arith.divf %241, %242 : vector<8x1xf32>
    %244 = vector.broadcast %234 : vector<8x1xf32> to vector<8x128xf32>
    %245 = arith.subf %226, %244 : vector<8x128xf32>
    %cst_109 = arith.constant 9.99999996E-13 : f32
    %246 = vector.broadcast %cst_109 : f32 to vector<8x1xf32>
    %247 = arith.addf %243, %246 : vector<8x1xf32>
    %248 = math.rsqrt %247 : vector<8x1xf32>
    %249 = vector.broadcast %248 : vector<8x1xf32> to vector<8x128xf32>
    %250 = arith.mulf %245, %249 : vector<8x128xf32>
    %251 = vector.broadcast %228 : vector<1x128xf32> to vector<8x128xf32>
    %252 = arith.mulf %250, %251 : vector<8x128xf32>
    %253 = vector.broadcast %230 : vector<1x128xf32> to vector<8x128xf32>
    %254 = arith.addf %252, %253 : vector<8x128xf32>
    %255 = arith.truncf %254 : vector<8x128xf32> to vector<8x128xbf16>
    %c1_110 = arith.constant 1 : index
    %c0_111 = arith.constant 0 : index
    %c0_112 = arith.constant 0 : index
    %256 = vector.load %arg12[%c1_110, %c0_111, %c0_112] : memref<2x128x256xbf16, #tpu.memory_space<vmem>>, vector<1x128x256xbf16>
    %257 = vector.shape_cast %256 : vector<1x128x256xbf16> to vector<128x256xbf16>
    %cst_113 = arith.constant dense<0.000000e+00> : vector<8x256xf32>
    %258 = tpu.matmul %255, %257, %cst_113 {dimension_numbers = #tpu.dot_dimension_numbers<[1], [0], [0], [1], [0, 0, 1, 1], [], []>} : vector<8x128xbf16>, vector<128x256xbf16>, vector<8x256xf32> -> vector<8x256xf32>
    %c1_114 = arith.constant 1 : index
    %c0_115 = arith.constant 0 : index
    %c0_116 = arith.constant 0 : index
    %259 = vector.load %arg13[%c1_114, %c0_115, %c0_116] : memref<2x1x256xf32, #tpu.memory_space<vmem>>, vector<1x1x256xf32>
    %260 = vector.shape_cast %259 : vector<1x1x256xf32> to vector<1x256xf32>
    %261 = vector.broadcast %260 : vector<1x256xf32> to vector<8x256xf32>
    %262 = arith.addf %258, %261 : vector<8x256xf32>
    %cst_117 = arith.constant 5.000000e-01 : f32
    %263 = vector.broadcast %cst_117 : f32 to vector<8x256xf32>
    %264 = arith.mulf %263, %262 : vector<8x256xf32>
    %cst_118 = arith.constant 4.471500e-02 : f32
    %265 = vector.broadcast %cst_118 : f32 to vector<8x256xf32>
    %266 = arith.mulf %265, %262 : vector<8x256xf32>
    %267 = arith.mulf %266, %262 : vector<8x256xf32>
    %268 = arith.mulf %267, %262 : vector<8x256xf32>
    %269 = arith.addf %262, %268 : vector<8x256xf32>
    %cst_119 = arith.constant 0.797884583 : f32
    %270 = vector.broadcast %cst_119 : f32 to vector<8x256xf32>
    %271 = arith.mulf %270, %269 : vector<8x256xf32>
    %272 = math.tanh %271 : vector<8x256xf32>
    %cst_120 = arith.constant 1.000000e+00 : f32
    %273 = vector.broadcast %cst_120 : f32 to vector<8x256xf32>
    %274 = arith.addf %273, %272 : vector<8x256xf32>
    %275 = arith.mulf %264, %274 : vector<8x256xf32>
    %276 = arith.truncf %275 : vector<8x256xf32> to vector<8x256xbf16>
    %c1_121 = arith.constant 1 : index
    %c0_122 = arith.constant 0 : index
    %c0_123 = arith.constant 0 : index
    %277 = vector.load %arg14[%c1_121, %c0_122, %c0_123] : memref<2x256x128xbf16, #tpu.memory_space<vmem>>, vector<1x256x128xbf16>
    %278 = vector.shape_cast %277 : vector<1x256x128xbf16> to vector<256x128xbf16>
    %cst_124 = arith.constant dense<0.000000e+00> : vector<8x128xf32>
    %279 = tpu.matmul %276, %278, %cst_124 {dimension_numbers = #tpu.dot_dimension_numbers<[1], [0], [0], [1], [0, 0, 1, 1], [], []>} : vector<8x256xbf16>, vector<256x128xbf16>, vector<8x128xf32> -> vector<8x128xf32>
    %c1_125 = arith.constant 1 : index
    %c0_126 = arith.constant 0 : index
    %c0_127 = arith.constant 0 : index
    %280 = vector.load %arg15[%c1_125, %c0_126, %c0_127] : memref<2x1x128xf32, #tpu.memory_space<vmem>>, vector<1x1x128xf32>
    %281 = vector.shape_cast %280 : vector<1x1x128xf32> to vector<1x128xf32>
    %282 = vector.broadcast %281 : vector<1x128xf32> to vector<8x128xf32>
    %283 = arith.addf %279, %282 : vector<8x128xf32>
    %284 = arith.addf %254, %283 : vector<8x128xf32>
    %c1_128 = arith.constant 1 : index
    %c0_129 = arith.constant 0 : index
    %c0_130 = arith.constant 0 : index
    %285 = vector.load %arg16[%c1_128, %c0_129, %c0_130] : memref<2x1x128xf32, #tpu.memory_space<vmem>>, vector<1x1x128xf32>
    %286 = vector.shape_cast %285 : vector<1x1x128xf32> to vector<1x128xf32>
    %c1_131 = arith.constant 1 : index
    %c0_132 = arith.constant 0 : index
    %c0_133 = arith.constant 0 : index
    %287 = vector.load %arg17[%c1_131, %c0_132, %c0_133] : memref<2x1x128xf32, #tpu.memory_space<vmem>>, vector<1x1x128xf32>
    %288 = vector.shape_cast %287 : vector<1x1x128xf32> to vector<1x128xf32>
    %cst_134 = arith.constant dense<0.000000e+00> : vector<8xf32>
    %289 = vector.multi_reduction <add>, %284, %cst_134 [1] : vector<8x128xf32> to vector<8xf32>
    %290 = vector.shape_cast %289 : vector<8xf32> to vector<8x1xf32>
    %cst_135 = arith.constant 1.280000e+02 : f32
    %291 = vector.broadcast %cst_135 : f32 to vector<8x1xf32>
    %292 = arith.divf %290, %291 : vector<8x1xf32>
    %293 = vector.broadcast %292 : vector<8x1xf32> to vector<8x128xf32>
    %294 = arith.subf %284, %293 : vector<8x128xf32>
    %295 = vector.broadcast %292 : vector<8x1xf32> to vector<8x128xf32>
    %296 = arith.subf %284, %295 : vector<8x128xf32>
    %297 = arith.mulf %294, %296 : vector<8x128xf32>
    %cst_136 = arith.constant dense<0.000000e+00> : vector<8xf32>
    %298 = vector.multi_reduction <add>, %297, %cst_136 [1] : vector<8x128xf32> to vector<8xf32>
    %299 = vector.shape_cast %298 : vector<8xf32> to vector<8x1xf32>
    %cst_137 = arith.constant 1.280000e+02 : f32
    %300 = vector.broadcast %cst_137 : f32 to vector<8x1xf32>
    %301 = arith.divf %299, %300 : vector<8x1xf32>
    %302 = vector.broadcast %292 : vector<8x1xf32> to vector<8x128xf32>
    %303 = arith.subf %284, %302 : vector<8x128xf32>
    %cst_138 = arith.constant 9.99999996E-13 : f32
    %304 = vector.broadcast %cst_138 : f32 to vector<8x1xf32>
    %305 = arith.addf %301, %304 : vector<8x1xf32>
    %306 = math.rsqrt %305 : vector<8x1xf32>
    %307 = vector.broadcast %306 : vector<8x1xf32> to vector<8x128xf32>
    %308 = arith.mulf %303, %307 : vector<8x128xf32>
    %309 = vector.broadcast %286 : vector<1x128xf32> to vector<8x128xf32>
    %310 = arith.mulf %308, %309 : vector<8x128xf32>
    %311 = vector.broadcast %288 : vector<1x128xf32> to vector<8x128xf32>
    %312 = arith.addf %310, %311 : vector<8x128xf32>
    %c0_139 = arith.constant 0 : index
    %c0_140 = arith.constant 0 : index
    %313 = vector.load %arg18[%c0_139, %c0_140] : memref<8x128xf32, #tpu.memory_space<vmem>>, vector<8x128xf32>
    tpu.vector_store %arg18[%c0_139, %c0_140], %312 {strides = array<i32>} : memref<8x128xf32, #tpu.memory_space<vmem>>, vector<8x128xf32>,
    return
  }
}

</mosaic_0001>

<llo_original>
// kernel: tpu_custom_call.1
$region0: #{tpu_custom_call.1}
  #allocation0 [shape = 'u32[]', space=smem, size = 0x4, offset = 0x4, fixed_abs, tag = 'smem constant byte address 0x4 - core index']
  #allocation1 [shape = 'u32[144,128]{1,0:T(1,128)}', space=vmem, size = 0x12000, scoped, tag = 'internal scratch']
  %s0 = inlined_call_operand.vmem [shape: s32[8,1], index: 0, kind: input, shape index: {}]
  %s1 = inlined_call_operand.vmem [shape: bf16[128,128], index: 1, kind: input, shape index: {}]
  %s2 = inlined_call_operand.vmem [shape: f32[8,128], index: 2, kind: input, shape index: {}]
  %s3 = inlined_call_operand.vmem [shape: f32[1,128], index: 3, kind: input, shape index: {}]
  %s4 = inlined_call_operand.vmem [shape: f32[1,128], index: 4, kind: input, shape index: {}]
  %s5 = inlined_call_operand.vmem [shape: f32[1,128], index: 5, kind: input, shape index: {}]
  %s6 = inlined_call_operand.vmem [shape: bf16[2,12,128,32], index: 6, kind: input, shape index: {}]
  %s7 = inlined_call_operand.vmem [shape: f32[2,12,1,32], index: 7, kind: input, shape index: {}]
  %s8 = inlined_call_operand.vmem [shape: bf16[2,4,32,128], index: 8, kind: input, shape index: {}]
  %s9 = inlined_call_operand.vmem [shape: f32[2,1,128], index: 9, kind: input, shape index: {}]
  %s10 = inlined_call_operand.vmem [shape: f32[2,1,128], index: 10, kind: input, shape index: {}]
  %s11 = inlined_call_operand.vmem [shape: f32[2,1,128], index: 11, kind: input, shape index: {}]
  %s12 = inlined_call_operand.vmem [shape: bf16[2,128,256], index: 12, kind: input, shape index: {}]
  %s13 = inlined_call_operand.vmem [shape: f32[2,1,256], index: 13, kind: input, shape index: {}]
  %s14 = inlined_call_operand.vmem [shape: bf16[2,256,128], index: 14, kind: input, shape index: {}]
  %s15 = inlined_call_operand.vmem [shape: f32[2,1,128], index: 15, kind: input, shape index: {}]
  %s16 = inlined_call_operand.vmem [shape: f32[2,1,128], index: 16, kind: input, shape index: {}]
  %s17 = inlined_call_operand.vmem [shape: f32[2,1,128], index: 17, kind: input, shape index: {}]
  %s18 = inlined_call_operand.hbm [shape: f32[8,128], index: 18, kind: output, shape index: {}]
  %s19 = sld [smem:[#allocation0]]
  $region82: #{tpu_custom_call.1} parent=0
    _
  %s21 = ssub.s32 1, %s19
  %s22 = scalar_select 0, %s21, %s19
  $region1: #{tpu_custom_call.1} parent=0
    #allocation2 [shape = 'u8[4096]{0}', space=vmem, size = 0x1000, scoped, tag = 'output window, operand 0, single buffered']
    #allocation3 [shape = 's32[1]{0}', space=sflag, size = 0x4, scoped, tag = 'scoped memory for tpu_custom_call.1']
    %23 = vsyncpa [#allocation3], 0
    // Predicated region
    $region2: #{tpu_custom_call.1} parent=1 // pred_check
      _
    $region3: #{tpu_custom_call.1} parent=1 // pred_check_branch
      %25 = sbr.rel (0) target = $region5
    $region4: #{tpu_custom_call.1} parent=1 // pred_region
      _
    $region5: #{tpu_custom_call.1} parent=1 // pred_fallthru
      _
    // Predicated region
    $region6: #{tpu_custom_call.1} parent=1 // pred_check
      _
    $region7: #{tpu_custom_call.1} parent=1 // pred_check_branch
      %27 = sbr.rel (0) target = $region9
    $region8: #{tpu_custom_call.1} parent=1 // pred_region
      _
    $region9: #{tpu_custom_call.1} parent=1 // pred_fallthru
      _
    // Predicated region
    $region10: #{tpu_custom_call.1} parent=1 // pred_check
      _
    $region11: #{tpu_custom_call.1} parent=1 // pred_check_branch
      %29 = sbr.rel (0) target = $region13
    $region12: #{tpu_custom_call.1} parent=1 // pred_region
      _
    $region13: #{tpu_custom_call.1} parent=1 // pred_fallthru
      _
    // Predicated region
    $region14: #{tpu_custom_call.1} parent=1 // pred_check
      _
    $region15: #{tpu_custom_call.1} parent=1 // pred_check_branch
      %31 = sbr.rel (0) target = $region17
    $region16: #{tpu_custom_call.1} parent=1 // pred_region
      _
    $region17: #{tpu_custom_call.1} parent=1 // pred_fallthru
      _
    // Predicated region
    $region18: #{tpu_custom_call.1} parent=1 // pred_check
      _
    $region19: #{tpu_custom_call.1} parent=1 // pred_check_branch
      %33 = sbr.rel (0) target = $region21
    $region20: #{tpu_custom_call.1} parent=1 // pred_region
      _
    $region21: #{tpu_custom_call.1} parent=1 // pred_fallthru
      _
    // Predicated region
    $region22: #{tpu_custom_call.1} parent=1 // pred_check
      _
    $region23: #{tpu_custom_call.1} parent=1 // pred_check_branch
      %35 = sbr.rel (0) target = $region25
    $region24: #{tpu_custom_call.1} parent=1 // pred_region
      _
    $region25: #{tpu_custom_call.1} parent=1 // pred_fallthru
      _
    // Predicated region
    $region26: #{tpu_custom_call.1} parent=1 // pred_check
      _
    $region27: #{tpu_custom_call.1} parent=1 // pred_check_branch
      %37 = sbr.rel (0) target = $region29
    $region28: #{tpu_custom_call.1} parent=1 // pred_region
      _
    $region29: #{tpu_custom_call.1} parent=1 // pred_fallthru
      _
    // Predicated region
    $region30: #{tpu_custom_call.1} parent=1 // pred_check
      _
    $region31: #{tpu_custom_call.1} parent=1 // pred_check_branch
      %39 = sbr.rel (0) target = $region33
    $region32: #{tpu_custom_call.1} parent=1 // pred_region
      _
    $region33: #{tpu_custom_call.1} parent=1 // pred_fallthru
      _
    // Predicated region
    $region34: #{tpu_custom_call.1} parent=1 // pred_check
      _
    $region35: #{tpu_custom_call.1} parent=1 // pred_check_branch
      %41 = sbr.rel (0) target = $region37
    $region36: #{tpu_custom_call.1} parent=1 // pred_region
      _
    $region37: #{tpu_custom_call.1} parent=1 // pred_fallthru
      _
    // Predicated region
    $region38: #{tpu_custom_call.1} parent=1 // pred_check
      _
    $region39: #{tpu_custom_call.1} parent=1 // pred_check_branch
      %43 = sbr.rel (0) target = $region41
    $region40: #{tpu_custom_call.1} parent=1 // pred_region
      _
    $region41: #{tpu_custom_call.1} parent=1 // pred_fallthru
      _
    // Predicated region
    $region42: #{tpu_custom_call.1} parent=1 // pred_check
      _
    $region43: #{tpu_custom_call.1} parent=1 // pred_check_branch
      %45 = sbr.rel (0) target = $region45
    $region44: #{tpu_custom_call.1} parent=1 // pred_region
      _
    $region45: #{tpu_custom_call.1} parent=1 // pred_fallthru
      _
    // Predicated region
    $region46: #{tpu_custom_call.1} parent=1 // pred_check
      _
    $region47: #{tpu_custom_call.1} parent=1 // pred_check_branch
      %47 = sbr.rel (0) target = $region49
    $region48: #{tpu_custom_call.1} parent=1 // pred_region
      _
    $region49: #{tpu_custom_call.1} parent=1 // pred_fallthru
      _
    // Predicated region
    $region50: #{tpu_custom_call.1} parent=1 // pred_check
      _
    $region51: #{tpu_custom_call.1} parent=1 // pred_check_branch
      %49 = sbr.rel (0) target = $region53
    $region52: #{tpu_custom_call.1} parent=1 // pred_region
      _
    $region53: #{tpu_custom_call.1} parent=1 // pred_fallthru
      _
    // Predicated region
    $region54: #{tpu_custom_call.1} parent=1 // pred_check
      _
    $region55: #{tpu_custom_call.1} parent=1 // pred_check_branch
      %51 = sbr.rel (0) target = $region57
    $region56: #{tpu_custom_call.1} parent=1 // pred_region
      _
    $region57: #{tpu_custom_call.1} parent=1 // pred_fallthru
      _
    // Predicated region
    $region58: #{tpu_custom_call.1} parent=1 // pred_check
      _
    $region59: #{tpu_custom_call.1} parent=1 // pred_check_branch
      %53 = sbr.rel (0) target = $region61
    $region60: #{tpu_custom_call.1} parent=1 // pred_region
      _
    $region61: #{tpu_custom_call.1} parent=1 // pred_fallthru
      _
    // Predicated region
    $region62: #{tpu_custom_call.1} parent=1 // pred_check
      _
    $region63: #{tpu_custom_call.1} parent=1 // pred_check_branch
      %55 = sbr.rel (0) target = $region65
    $region64: #{tpu_custom_call.1} parent=1 // pred_region
      _
    $region65: #{tpu_custom_call.1} parent=1 // pred_fallthru
      _
    // Predicated region
    $region66: #{tpu_custom_call.1} parent=1 // pred_check
      _
    $region67: #{tpu_custom_call.1} parent=1 // pred_check_branch
      %57 = sbr.rel (0) target = $region69
    $region68: #{tpu_custom_call.1} parent=1 // pred_region
      _
    $region69: #{tpu_custom_call.1} parent=1 // pred_fallthru
      _
    // Predicated region
    $region70: #{tpu_custom_call.1} parent=1 // pred_check
      _
    $region71: #{tpu_custom_call.1} parent=1 // pred_check_branch
      %59 = sbr.rel (0) target = $region73
    $region72: #{tpu_custom_call.1} parent=1 // pred_region
      _
    $region73: #{tpu_custom_call.1} parent=1 // pred_fallthru
      _
    %v61 = vld [vmem:[%s0] sm:$0xff]
    %v62 = vlaneseq
    %v63 = vand.u32 %v62, 127
    %64 = vset.pattern.permute.xlu0 0
    %65 = vperm.xlu0 %64, %v61
    %v66 = vpop.permute.xlu0 %65
    %vm67 = vcmp.eq.s32.totalorder %v66, %v63
    %v68 = vsel %vm67, 1.0, 0.0
    %v69 = vpack.c.bf16 %v68, %v68
    %v70 = vld [vmem:[%s1] sm:$0xf]
    %v71 = vld [vmem:[%s1 + $0x4] sm:$0xf]
    %v72 = vld [vmem:[%s1 + $0x8] sm:$0xf]
    %v73 = vld [vmem:[%s1 + $0xc] sm:$0xf]
    %v74 = vld [vmem:[%s1 + $0x10] sm:$0xf]
    %v75 = vld [vmem:[%s1 + $0x14] sm:$0xf]
    %v76 = vld [vmem:[%s1 + $0x18] sm:$0xf]
    %v77 = vld [vmem:[%s1 + $0x1c] sm:$0xf]
    %v78 = vld [vmem:[%s1 + $0x20] sm:$0xf]
    %v79 = vld [vmem:[%s1 + $0x24] sm:$0xf]
    %v80 = vld [vmem:[%s1 + $0x28] sm:$0xf]
    %v81 = vld [vmem:[%s1 + $0x2c] sm:$0xf]
    %v82 = vld [vmem:[%s1 + $0x30] sm:$0xf]
    %v83 = vld [vmem:[%s1 + $0x34] sm:$0xf]
    %v84 = vld [vmem:[%s1 + $0x38] sm:$0xf]
    %v85 = vld [vmem:[%s1 + $0x3c] sm:$0xf]
    %v86 = vld [vmem:[%s2] sm:$0xff]
    %v103 = vunpack.c.l.b16 %v70
    %v104 = vunpack.c.l.b16 %v71
    %v105 = vunpack.c.l.b16 %v72
    %v106 = vunpack.c.l.b16 %v73
    %v107 = vunpack.c.l.b16 %v74
    %v108 = vunpack.c.l.b16 %v75
    %v109 = vunpack.c.l.b16 %v76
    %v110 = vunpack.c.l.b16 %v77
    %v111 = vunpack.c.l.b16 %v78
    %v112 = vunpack.c.l.b16 %v79
    %v113 = vunpack.c.l.b16 %v80
    %v114 = vunpack.c.l.b16 %v81
    %v115 = vunpack.c.l.b16 %v82
    %v116 = vunpack.c.l.b16 %v83
    %v117 = vunpack.c.l.b16 %v84
    %v118 = vunpack.c.l.b16 %v85
    %v119 = vpack.c.b16 %v104, %v103
    %v120 = vpack.c.b16 %v106, %v105
    %v121 = vpack.c.b16 %v108, %v107
    %v122 = vpack.c.b16 %v110, %v109
    %v123 = vpack.c.b16 %v112, %v111
    %v124 = vpack.c.b16 %v114, %v113
    %v125 = vpack.c.b16 %v116, %v115
    %v126 = vpack.c.b16 %v118, %v117
    %135 = vmatprep.subr.bf16.mxu0 0
    %136 = vmatpush1.bf16.msra.mxu0 %v126
    %137 = vmatprep.subr.bf16.mxu0 0
    %138 = vmatpush1.bf16.msra.mxu0 %v125
    %139 = vmatprep.subr.bf16.mxu0 0
    %140 = vmatpush1.bf16.msra.mxu0 %v124
    %141 = vmatprep.subr.bf16.mxu0 0
    %142 = vmatpush1.bf16.msra.mxu0 %v123
    %143 = vmatprep.subr.bf16.mxu0 0
    %144 = vmatpush1.bf16.msra.mxu0 %v122
    %145 = vmatprep.subr.bf16.mxu0 0
    %146 = vmatpush1.bf16.msra.mxu0 %v121
    %147 = vmatprep.subr.bf16.mxu0 0
    %148 = vmatpush1.bf16.msra.mxu0 %v120
    %149 = vmatprep.subr.bf16.mxu0 0
    %150 = vmatpush1.bf16.msra.mxu0 %v119
    %151 = vmatprep.subr.bf16.mxu0 0
    %152 = vmatpush2.bf16.msra.mxu0 0
    %153 = vmatprep.subr.bf16.mxu0 0
    %154 = vmatpush2.bf16.msra.mxu0 0
    %155 = vmatprep.subr.bf16.mxu0 0
    %156 = vmatpush2.bf16.msra.mxu0 0
    %157 = vmatprep.subr.bf16.mxu0 0
    %158 = vmatpush2.bf16.msra.mxu0 0
    %159 = vmatprep.subr.bf16.mxu0 0
    %160 = vmatpush2.bf16.msra.mxu0 0
    %161 = vmatprep.subr.bf16.mxu0 0
    %162 = vmatpush2.bf16.msra.mxu0 0
    %163 = vmatprep.subr.bf16.mxu0 0
    %164 = vmatpush2.bf16.msra.mxu0 0
    %165 = vmatprep.subr.bf16.mxu0 0
    %166 = vmatpush2.bf16.msra.mxu0 0
    %167 = vmatprep.mubr.bf16.mxu0 0
    %168 = vmatmul.mubr.bf16.gmra.mxu0 %v69
    %v169 = vpop.f32.mrf.mxu0
    %v170 = vadd.f32 %v86, %v169
    %v171 = vpop.f32.mrf.mxu0
    %v172 = vpop.f32.mrf.mxu0
    %v173 = vpop.f32.mrf.mxu0
    %174 = vdwg.mxu0
    %v175 = vld [vmem:[%s3] sm:$0x1]
    %v177 = vlaneseq
    %v178 = vshrl.u32 %v177, 7
    %v179 = vsub.s32 0, %v178
    %v180 = vrot.slane %v175, %v179
    %v182 = vadd.f32 %v170, %v180
    %v183 = vld [vmem:[%s4] sm:$0x1]
    %v184 = vld [vmem:[%s5] sm:$0x1]
    %185 = vadd.xlane.f32.xlu0 %v182
    %v186 = vpop.xlane.xlu0 %185
    %v187 = vrcp.pop 128.0
    %v188 = vmul.f32 %v186, %v187
    %v189 = vsub.f32 %v182, %v188
    %v190 = vmul.f32 %v189, %v189
    %191 = vadd.xlane.f32.xlu0 %v190
    %v192 = vpop.xlane.xlu0 %191
    %v193 = vmul.f32 %v192, %v187
    %v194 = vadd.f32 %v193, 1e-12
    %v195 = vrsqrt.pop %v194
    %v196 = vmul.f32 %v189, %v195
    %v198 = vlaneseq
    %v199 = vshrl.u32 %v198, 7
    %v200 = vsub.s32 0, %v199
    %v201 = vrot.slane %v183, %v200
    %v203 = vmul.f32 %v196, %v201
    %v205 = vlaneseq
    %v206 = vshrl.u32 %v205, 7
    %v207 = vsub.s32 0, %v206
    %v208 = vrot.slane %v184, %v207
    %v210 = vadd.f32 %v203, %v208
    %v211 = vpack.c.bf16 %v210, %v210
    %v212 = vld [vmem:[%s6] sm:$0xf]
    %v213 = vld [vmem:[%s6 + $0x4] sm:$0xf]
    %v214 = vld [vmem:[%s6 + $0x8] sm:$0xf]
    %v215 = vld [vmem:[%s6 + $0xc] sm:$0xf]
    %v216 = vld [vmem:[%s6 + $0x10] sm:$0xf]
    %v217 = vld [vmem:[%s6 + $0x14] sm:$0xf]
    %v218 = vld [vmem:[%s6 + $0x18] sm:$0xf]
    %v219 = vld [vmem:[%s6 + $0x1c] sm:$0xf]
    %v220 = vld [vmem:[%s6 + $0x20] sm:$0xf]
    %v221 = vld [vmem:[%s6 + $0x24] sm:$0xf]
    %v222 = vld [vmem:[%s6 + $0x28] sm:$0xf]
    %v223 = vld [vmem:[%s6 + $0x2c] sm:$0xf]
    %v224 = vld [vmem:[%s6 + $0x30] sm:$0xf]
    %v225 = vld [vmem:[%s6 + $0x34] sm:$0xf]
    %v226 = vld [vmem:[%s6 + $0x38] sm:$0xf]
    %v227 = vld [vmem:[%s6 + $0x3c] sm:$0xf]
    %v228 = vld [vmem:[%s6 + $0x40] sm:$0xf]
    %v229 = vld [vmem:[%s6 + $0x44] sm:$0xf]
    %v230 = vld [vmem:[%s6 + $0x48] sm:$0xf]
    %v231 = vld [vmem:[%s6 + $0x4c] sm:$0xf]
    %v232 = vld [vmem:[%s6 + $0x50] sm:$0xf]
    %v233 = vld [vmem:[%s6 + $0x54] sm:$0xf]
    %v234 = vld [vmem:[%s6 + $0x58] sm:$0xf]
    %v235 = vld [vmem:[%s6 + $0x5c] sm:$0xf]
    %v236 = vld [vmem:[%s6 + $0x60] sm:$0xf]
    %v237 = vld [vmem:[%s6 + $0x64] sm:$0xf]
    %v238 = vld [vmem:[%s6 + $0x68] sm:$0xf]
    %v239 = vld [vmem:[%s6 + $0x6c] sm:$0xf]
    %v240 = vld [vmem:[%s6 + $0x70] sm:$0xf]
    %v241 = vld [vmem:[%s6 + $0x74] sm:$0xf]
    %v242 = vld [vmem:[%s6 + $0x78] sm:$0xf]
    %v243 = vld [vmem:[%s6 + $0x7c] sm:$0xf]
    %v244 = vld [vmem:[%s6 + $0x80] sm:$0xf]
    %v245 = vld [vmem:[%s6 + $0x84] sm:$0xf]
    %v246 = vld [vmem:[%s6 + $0x88] sm:$0xf]
    %v247 = vld [vmem:[%s6 + $0x8c] sm:$0xf]
    %v248 = vld [vmem:[%s6 + $0x90] sm:$0xf]
    %v249 = vld [vmem:[%s6 + $0x94] sm:$0xf]
    %v250 = vld [vmem:[%s6 + $0x98] sm:$0xf]
    %v251 = vld [vmem:[%s6 + $0x9c] sm:$0xf]
    %v252 = vld [vmem:[%s6 + $0xa0] sm:$0xf]
    %v253 = vld [vmem:[%s6 + $0xa4] sm:$0xf]
    %v254 = vld [vmem:[%s6 + $0xa8] sm:$0xf]
    %v255 = vld [vmem:[%s6 + $0xac] sm:$0xf]
    %v256 = vld [vmem:[%s6 + $0xb0] sm:$0xf]
    %v257 = vld [vmem:[%s6 + $0xb4] sm:$0xf]
    %v258 = vld [vmem:[%s6 + $0xb8] sm:$0xf]
    %v259 = vld [vmem:[%s6 + $0xbc] sm:$0xf]
    %v260 = vld [vmem:[%s6 + $0xc0] sm:$0xf]
    %v261 = vld [vmem:[%s6 + $0xc4] sm:$0xf]
    %v262 = vld [vmem:[%s6 + $0xc8] sm:$0xf]
    %v263 = vld [vmem:[%s6 + $0xcc] sm:$0xf]
    %v264 = vld [vmem:[%s6 + $0xd0] sm:$0xf]
    %v265 = vld [vmem:[%s6 + $0xd4] sm:$0xf]
    %v266 = vld [vmem:[%s6 + $0xd8] sm:$0xf]
    %v267 = vld [vmem:[%s6 + $0xdc] sm:$0xf]
    %v268 = vld [vmem:[%s6 + $0xe0] sm:$0xf]
    %v269 = vld [vmem:[%s6 + $0xe4] sm:$0xf]
    %v270 = vld [vmem:[%s6 + $0xe8] sm:$0xf]
    %v271 = vld [vmem:[%s6 + $0xec] sm:$0xf]
    %v272 = vld [vmem:[%s6 + $0xf0] sm:$0xf]
    %v273 = vld [vmem:[%s6 + $0xf4] sm:$0xf]
    %v274 = vld [vmem:[%s6 + $0xf8] sm:$0xf]
    %v275 = vld [vmem:[%s6 + $0xfc] sm:$0xf]
    %v276 = vld [vmem:[%s6 + $0x100] sm:$0xf]
    %v277 = vld [vmem:[%s6 + $0x104] sm:$0xf]
    %v278 = vld [vmem:[%s6 + $0x108] sm:$0xf]
    %v279 = vld [vmem:[%s6 + $0x10c] sm:$0xf]
    %v280 = vld [vmem:[%s6 + $0x110] sm:$0xf]
    %v281 = vld [vmem:[%s6 + $0x114] sm:$0xf]
    %v282 = vld [vmem:[%s6 + $0x118] sm:$0xf]
    %v283 = vld [vmem:[%s6 + $0x11c] sm:$0xf]
    %v284 = vld [vmem:[%s6 + $0x120] sm:$0xf]
    %v285 = vld [vmem:[%s6 + $0x124] sm:$0xf]
    %v286 = vld [vmem:[%s6 + $0x128] sm:$0xf]
    %v287 = vld [vmem:[%s6 + $0x12c] sm:$0xf]
    %v288 = vld [vmem:[%s6 + $0x130] sm:$0xf]
    %v289 = vld [vmem:[%s6 + $0x134] sm:$0xf]
    %v290 = vld [vmem:[%s6 + $0x138] sm:$0xf]
    %v291 = vld [vmem:[%s6 + $0x13c] sm:$0xf]
    %v292 = vld [vmem:[%s6 + $0x140] sm:$0xf]
    %v293 = vld [vmem:[%s6 + $0x144] sm:$0xf]
    %v294 = vld [vmem:[%s6 + $0x148] sm:$0xf]
    %v295 = vld [vmem:[%s6 + $0x14c] sm:$0xf]
    %v296 = vld [vmem:[%s6 + $0x150] sm:$0xf]
    %v297 = vld [vmem:[%s6 + $0x154] sm:$0xf]
    %v298 = vld [vmem:[%s6 + $0x158] sm:$0xf]
    %v299 = vld [vmem:[%s6 + $0x15c] sm:$0xf]
    %v300 = vld [vmem:[%s6 + $0x160] sm:$0xf]
    %v301 = vld [vmem:[%s6 + $0x164] sm:$0xf]
    %v302 = vld [vmem:[%s6 + $0x168] sm:$0xf]
    %v303 = vld [vmem:[%s6 + $0x16c] sm:$0xf]
    %v304 = vld [vmem:[%s6 + $0x170] sm:$0xf]
    %v305 = vld [vmem:[%s6 + $0x174] sm:$0xf]
    %v306 = vld [vmem:[%s6 + $0x178] sm:$0xf]
    %v307 = vld [vmem:[%s6 + $0x17c] sm:$0xf]
    %v308 = vld [vmem:[%s6 + $0x180] sm:$0xf]
    %v309 = vld [vmem:[%s6 + $0x184] sm:$0xf]
    %v310 = vld [vmem:[%s6 + $0x188] sm:$0xf]
    %v311 = vld [vmem:[%s6 + $0x18c] sm:$0xf]
    %v312 = vld [vmem:[%s6 + $0x190] sm:$0xf]
    %v313 = vld [vmem:[%s6 + $0x194] sm:$0xf]
    %v314 = vld [vmem:[%s6 + $0x198] sm:$0xf]
    %v315 = vld [vmem:[%s6 + $0x19c] sm:$0xf]
    %v316 = vld [vmem:[%s6 + $0x1a0] sm:$0xf]
    %v317 = vld [vmem:[%s6 + $0x1a4] sm:$0xf]
    %v318 = vld [vmem:[%s6 + $0x1a8] sm:$0xf]
    %v319 = vld [vmem:[%s6 + $0x1ac] sm:$0xf]
    %v320 = vld [vmem:[%s6 + $0x1b0] sm:$0xf]
    %v321 = vld [vmem:[%s6 + $0x1b4] sm:$0xf]
    %v322 = vld [vmem:[%s6 + $0x1b8] sm:$0xf]
    %v323 = vld [vmem:[%s6 + $0x1bc] sm:$0xf]
    %v324 = vld [vmem:[%s6 + $0x1c0] sm:$0xf]
    %v325 = vld [vmem:[%s6 + $0x1c4] sm:$0xf]
    %v326 = vld [vmem:[%s6 + $0x1c8] sm:$0xf]
    %v327 = vld [vmem:[%s6 + $0x1cc] sm:$0xf]
    %v328 = vld [vmem:[%s6 + $0x1d0] sm:$0xf]
    %v329 = vld [vmem:[%s6 + $0x1d4] sm:$0xf]
    %v330 = vld [vmem:[%s6 + $0x1d8] sm:$0xf]
    %v331 = vld [vmem:[%s6 + $0x1dc] sm:$0xf]
    %v332 = vld [vmem:[%s6 + $0x1e0] sm:$0xf]
    %v333 = vld [vmem:[%s6 + $0x1e4] sm:$0xf]
    %v334 = vld [vmem:[%s6 + $0x1e8] sm:$0xf]
    %v335 = vld [vmem:[%s6 + $0x1ec] sm:$0xf]
    %v336 = vld [vmem:[%s6 + $0x1f0] sm:$0xf]
    %v337 = vld [vmem:[%s6 + $0x1f4] sm:$0xf]
    %v338 = vld [vmem:[%s6 + $0x1f8] sm:$0xf]
    %v339 = vld [vmem:[%s6 + $0x1fc] sm:$0xf]
    %v340 = vld [vmem:[%s6 + $0x200] sm:$0xf]
    %v341 = vld [vmem:[%s6 + $0x204] sm:$0xf]
    %v342 = vld [vmem:[%s6 + $0x208] sm:$0xf]
    %v343 = vld [vmem:[%s6 + $0x20c] sm:$0xf]
    %v344 = vld [vmem:[%s6 + $0x210] sm:$0xf]
    %v345 = vld [vmem:[%s6 + $0x214] sm:$0xf]
    %v346 = vld [vmem:[%s6 + $0x218] sm:$0xf]
    %v347 = vld [vmem:[%s6 + $0x21c] sm:$0xf]
    %v348 = vld [vmem:[%s6 + $0x220] sm:$0xf]
    %v349 = vld [vmem:[%s6 + $0x224] sm:$0xf]
    %v350 = vld [vmem:[%s6 + $0x228] sm:$0xf]
    %v351 = vld [vmem:[%s6 + $0x22c] sm:$0xf]
    %v352 = vld [vmem:[%s6 + $0x230] sm:$0xf]
    %v353 = vld [vmem:[%s6 + $0x234] sm:$0xf]
    %v354 = vld [vmem:[%s6 + $0x238] sm:$0xf]
    %v355 = vld [vmem:[%s6 + $0x23c] sm:$0xf]
    %v356 = vld [vmem:[%s6 + $0x240] sm:$0xf]
    %v357 = vld [vmem:[%s6 + $0x244] sm:$0xf]
    %v358 = vld [vmem:[%s6 + $0x248] sm:$0xf]
    %v359 = vld [vmem:[%s6 + $0x24c] sm:$0xf]
    %v360 = vld [vmem:[%s6 + $0x250] sm:$0xf]
    %v361 = vld [vmem:[%s6 + $0x254] sm:$0xf]
    %v362 = vld [vmem:[%s6 + $0x258] sm:$0xf]
    %v363 = vld [vmem:[%s6 + $0x25c] sm:$0xf]
    %v364 = vld [vmem:[%s6 + $0x260] sm:$0xf]
    %v365 = vld [vmem:[%s6 + $0x264] sm:$0xf]
    %v366 = vld [vmem:[%s6 + $0x268] sm:$0xf]
    %v367 = vld [vmem:[%s6 + $0x26c] sm:$0xf]
    %v368 = vld [vmem:[%s6 + $0x270] sm:$0xf]
    %v369 = vld [vmem:[%s6 + $0x274] sm:$0xf]
    %v370 = vld [vmem:[%s6 + $0x278] sm:$0xf]
    %v371 = vld [vmem:[%s6 + $0x27c] sm:$0xf]
    %v372 = vld [vmem:[%s6 + $0x280] sm:$0xf]
    %v373 = vld [vmem:[%s6 + $0x284] sm:$0xf]
    %v374 = vld [vmem:[%s6 + $0x288] sm:$0xf]
    %v375 = vld [vmem:[%s6 + $0x28c] sm:$0xf]
    %v376 = vld [vmem:[%s6 + $0x290] sm:$0xf]
    %v377 = vld [vmem:[%s6 + $0x294] sm:$0xf]
    %v378 = vld [vmem:[%s6 + $0x298] sm:$0xf]
    %v379 = vld [vmem:[%s6 + $0x29c] sm:$0xf]
    %v380 = vld [vmem:[%s6 + $0x2a0] sm:$0xf]
    %v381 = vld [vmem:[%s6 + $0x2a4] sm:$0xf]
    %v382 = vld [vmem:[%s6 + $0x2a8] sm:$0xf]
    %v383 = vld [vmem:[%s6 + $0x2ac] sm:$0xf]
    %v384 = vld [vmem:[%s6 + $0x2b0] sm:$0xf]
    %v385 = vld [vmem:[%s6 + $0x2b4] sm:$0xf]
    %v386 = vld [vmem:[%s6 + $0x2b8] sm:$0xf]
    %v387 = vld [vmem:[%s6 + $0x2bc] sm:$0xf]
    %v388 = vld [vmem:[%s6 + $0x2c0] sm:$0xf]
    %v389 = vld [vmem:[%s6 + $0x2c4] sm:$0xf]
    %v390 = vld [vmem:[%s6 + $0x2c8] sm:$0xf]
    %v391 = vld [vmem:[%s6 + $0x2cc] sm:$0xf]
    %v392 = vld [vmem:[%s6 + $0x2d0] sm:$0xf]
    %v393 = vld [vmem:[%s6 + $0x2d4] sm:$0xf]
    %v394 = vld [vmem:[%s6 + $0x2d8] sm:$0xf]
    %v395 = vld [vmem:[%s6 + $0x2dc] sm:$0xf]
    %v396 = vld [vmem:[%s6 + $0x2e0] sm:$0xf]
    %v397 = vld [vmem:[%s6 + $0x2e4] sm:$0xf]
    %v398 = vld [vmem:[%s6 + $0x2e8] sm:$0xf]
    %v399 = vld [vmem:[%s6 + $0x2ec] sm:$0xf]
    %v400 = vld [vmem:[%s6 + $0x2f0] sm:$0xf]
    %v401 = vld [vmem:[%s6 + $0x2f4] sm:$0xf]
    %v402 = vld [vmem:[%s6 + $0x2f8] sm:$0xf]
    %v403 = vld [vmem:[%s6 + $0x2fc] sm:$0xf]
    %v404 = vld [vmem:[%s7] sm:$0x1]
    %v405 = vld [vmem:[%s7 + $0x1] sm:$0x1]
    %v406 = vld [vmem:[%s7 + $0x2] sm:$0x1]
    %v407 = vld [vmem:[%s7 + $0x3] sm:$0x1]
    %v408 = vld [vmem:[%s7 + $0x4] sm:$0x1]
    %v409 = vld [vmem:[%s7 + $0x5] sm:$0x1]
    %v410 = vld [vmem:[%s7 + $0x6] sm:$0x1]
    %v411 = vld [vmem:[%s7 + $0x7] sm:$0x1]
    %v412 = vld [vmem:[%s7 + $0x8] sm:$0x1]
    %v413 = vld [vmem:[%s7 + $0x9] sm:$0x1]
    %v414 = vld [vmem:[%s7 + $0xa] sm:$0x1]
    %v415 = vld [vmem:[%s7 + $0xb] sm:$0x1]
    %v428 = vlaneseq
    %v429 = vshrl.u32 %v428, 7
    %v430 = vsub.s32 0, %v429
    %v431 = vrot.slane %v404, %v430
    %v432 = vlaneseq
    %v433 = vshrl.u32 %v432, 7
    %v434 = vsub.s32 0, %v433
    %v435 = vrot.slane %v405, %v434
    %v436 = vlaneseq
    %v437 = vshrl.u32 %v436, 7
    %v438 = vsub.s32 0, %v437
    %v439 = vrot.slane %v406, %v438
    %v440 = vlaneseq
    %v441 = vshrl.u32 %v440, 7
    %v442 = vsub.s32 0, %v441
    %v443 = vrot.slane %v407, %v442
    %v444 = vlaneseq
    %v445 = vshrl.u32 %v444, 7
    %v446 = vsub.s32 0, %v445
    %v447 = vrot.slane %v408, %v446
    %v448 = vlaneseq
    %v449 = vshrl.u32 %v448, 7
    %v450 = vsub.s32 0, %v449
    %v451 = vrot.slane %v409, %v450
    %v452 = vlaneseq
    %v453 = vshrl.u32 %v452, 7
    %v454 = vsub.s32 0, %v453
    %v455 = vrot.slane %v410, %v454
    %v456 = vlaneseq
    %v457 = vshrl.u32 %v456, 7
    %v458 = vsub.s32 0, %v457
    %v459 = vrot.slane %v411, %v458
    %v460 = vlaneseq
    %v461 = vshrl.u32 %v460, 7
    %v462 = vsub.s32 0, %v461
    %v463 = vrot.slane %v412, %v462
    %v464 = vlaneseq
    %v465 = vshrl.u32 %v464, 7
    %v466 = vsub.s32 0, %v465
    %v467 = vrot.slane %v413, %v466
    %v468 = vlaneseq
    %v469 = vshrl.u32 %v468, 7
    %v470 = vsub.s32 0, %v469
    %v471 = vrot.slane %v414, %v470
    %v472 = vlaneseq
    %v473 = vshrl.u32 %v472, 7
    %v474 = vsub.s32 0, %v473
    %v475 = vrot.slane %v415, %v474
    %v504 = vunpack.c.l.b16 %v212
    %v505 = vunpack.c.l.b16 %v213
    %v506 = vunpack.c.l.b16 %v214
    %v507 = vunpack.c.l.b16 %v215
    %v508 = vunpack.c.l.b16 %v216
    %v509 = vunpack.c.l.b16 %v217
    %v510 = vunpack.c.l.b16 %v218
    %v511 = vunpack.c.l.b16 %v219
    %v512 = vunpack.c.l.b16 %v220
    %v513 = vunpack.c.l.b16 %v221
    %v514 = vunpack.c.l.b16 %v222
    %v515 = vunpack.c.l.b16 %v223
    %v516 = vunpack.c.l.b16 %v224
    %v517 = vunpack.c.l.b16 %v225
    %v518 = vunpack.c.l.b16 %v226
    %v519 = vunpack.c.l.b16 %v227
    %v520 = vpack.c.b16 %v505, %v504
    %v521 = vpack.c.b16 %v507, %v506
    %v522 = vpack.c.b16 %v509, %v508
    %v523 = vpack.c.b16 %v511, %v510
    %v524 = vpack.c.b16 %v513, %v512
    %v525 = vpack.c.b16 %v515, %v514
    %v526 = vpack.c.b16 %v517, %v516
    %v527 = vpack.c.b16 %v519, %v518
    %536 = vmatprep.subr.bf16.mxu0 0
    %537 = vmatpush1.bf16.msra.mxu0 %v527
    %538 = vmatprep.subr.bf16.mxu0 0
    %539 = vmatpush1.bf16.msra.mxu0 %v526
    %540 = vmatprep.subr.bf16.mxu0 0
    %541 = vmatpush1.bf16.msra.mxu0 %v525
    %542 = vmatprep.subr.bf16.mxu0 0
    %543 = vmatpush1.bf16.msra.mxu0 %v524
    %544 = vmatprep.subr.bf16.mxu0 0
    %545 = vmatpush1.bf16.msra.mxu0 %v523
    %546 = vmatprep.subr.bf16.mxu0 0
    %547 = vmatpush1.bf16.msra.mxu0 %v522
    %548 = vmatprep.subr.bf16.mxu0 0
    %549 = vmatpush1.bf16.msra.mxu0 %v521
    %550 = vmatprep.subr.bf16.mxu0 0
    %551 = vmatpush1.bf16.msra.mxu0 %v520
    %552 = vmatprep.subr.bf16.mxu0 0
    %553 = vmatpush2.bf16.msra.mxu0 0
    %554 = vmatprep.subr.bf16.mxu0 0
    %555 = vmatpush2.bf16.msra.mxu0 0
    %556 = vmatprep.subr.bf16.mxu0 0
    %557 = vmatpush2.bf16.msra.mxu0 0
    %558 = vmatprep.subr.bf16.mxu0 0
    %559 = vmatpush2.bf16.msra.mxu0 0
    %560 = vmatprep.subr.bf16.mxu0 0
    %561 = vmatpush2.bf16.msra.mxu0 0
    %562 = vmatprep.subr.bf16.mxu0 0
    %563 = vmatpush2.bf16.msra.mxu0 0
    %564 = vmatprep.subr.bf16.mxu0 0
    %565 = vmatpush2.bf16.msra.mxu0 0
    %566 = vmatprep.subr.bf16.mxu0 0
    %567 = vmatpush2.bf16.msra.mxu0 0
    %568 = vmatprep.mubr.bf16.mxu0 0
    %569 = vmatmul.mubr.bf16.gmra.mxu0 %v211
    %v570 = vpop.f32.mrf.mxu0
    %v571 = vadd.f32 %v431, %v570
    %v572 = vpop.f32.mrf.mxu0
    %v573 = vpop.f32.mrf.mxu0
    %v574 = vpop.f32.mrf.mxu0
    %575 = vdwg.mxu0
    %v592 = vunpack.c.l.b16 %v228
    %v593 = vunpack.c.l.b16 %v229
    %v594 = vunpack.c.l.b16 %v230
    %v595 = vunpack.c.l.b16 %v231
    %v596 = vunpack.c.l.b16 %v232
    %v597 = vunpack.c.l.b16 %v233
    %v598 = vunpack.c.l.b16 %v234
    %v599 = vunpack.c.l.b16 %v235
    %v600 = vunpack.c.l.b16 %v236
    %v601 = vunpack.c.l.b16 %v237
    %v602 = vunpack.c.l.b16 %v238
    %v603 = vunpack.c.l.b16 %v239
    %v604 = vunpack.c.l.b16 %v240
    %v605 = vunpack.c.l.b16 %v241
    %v606 = vunpack.c.l.b16 %v242
    %v607 = vunpack.c.l.b16 %v243
    %v608 = vpack.c.b16 %v593, %v592
    %v609 = vpack.c.b16 %v595, %v594
    %v610 = vpack.c.b16 %v597, %v596
    %v611 = vpack.c.b16 %v599, %v598
    %v612 = vpack.c.b16 %v601, %v600
    %v613 = vpack.c.b16 %v603, %v602
    %v614 = vpack.c.b16 %v605, %v604
    %v615 = vpack.c.b16 %v607, %v606
    %624 = vmatprep.subr.bf16.mxu0 0
    %625 = vmatpush1.bf16.msra.mxu0 %v615
    %626 = vmatprep.subr.bf16.mxu0 0
    %627 = vmatpush1.bf16.msra.mxu0 %v614
    %628 = vmatprep.subr.bf16.mxu0 0
    %629 = vmatpush1.bf16.msra.mxu0 %v613
    %630 = vmatprep.subr.bf16.mxu0 0
    %631 = vmatpush1.bf16.msra.mxu0 %v612
    %632 = vmatprep.subr.bf16.mxu0 0
    %633 = vmatpush1.bf16.msra.mxu0 %v611
    %634 = vmatprep.subr.bf16.mxu0 0
    %635 = vmatpush1.bf16.msra.mxu0 %v610
    %636 = vmatprep.subr.bf16.mxu0 0
    %637 = vmatpush1.bf16.msra.mxu0 %v609
    %638 = vmatprep.subr.bf16.mxu0 0
    %639 = vmatpush1.bf16.msra.mxu0 %v608
    %640 = vmatprep.subr.bf16.mxu0 0
    %641 = vmatpush2.bf16.msra.mxu0 0
    %642 = vmatprep.subr.bf16.mxu0 0
    %643 = vmatpush2.bf16.msra.mxu0 0
    %644 = vmatprep.subr.bf16.mxu0 0
    %645 = vmatpush2.bf16.msra.mxu0 0
    %646 = vmatprep.subr.bf16.mxu0 0
    %647 = vmatpush2.bf16.msra.mxu0 0
    %648 = vmatprep.subr.bf16.mxu0 0
    %649 = vmatpush2.bf16.msra.mxu0 0
    %650 = vmatprep.subr.bf16.mxu0 0
    %651 = vmatpush2.bf16.msra.mxu0 0
    %652 = vmatprep.subr.bf16.mxu0 0
    %653 = vmatpush2.bf16.msra.mxu0 0
    %654 = vmatprep.subr.bf16.mxu0 0
    %655 = vmatpush2.bf16.msra.mxu0 0
    %656 = vmatprep.mubr.bf16.mxu0 0
    %657 = vmatmul.mubr.bf16.gmra.mxu0 %v211
    %v658 = vpop.f32.mrf.mxu0
    %v659 = vadd.f32 %v435, %v658
    %v660 = vpop.f32.mrf.mxu0
    %v661 = vpop.f32.mrf.mxu0
    %v662 = vpop.f32.mrf.mxu0
    %663 = vdwg.mxu0
    %v680 = vunpack.c.l.b16 %v244
    %v681 = vunpack.c.l.b16 %v245
    %v682 = vunpack.c.l.b16 %v246
    %v683 = vunpack.c.l.b16 %v247
    %v684 = vunpack.c.l.b16 %v248
    %v685 = vunpack.c.l.b16 %v249
    %v686 = vunpack.c.l.b16 %v250
    %v687 = vunpack.c.l.b16 %v251
    %v688 = vunpack.c.l.b16 %v252
    %v689 = vunpack.c.l.b16 %v253
    %v690 = vunpack.c.l.b16 %v254
    %v691 = vunpack.c.l.b16 %v255
    %v692 = vunpack.c.l.b16 %v256
    %v693 = vunpack.c.l.b16 %v257
    %v694 = vunpack.c.l.b16 %v258
    %v695 = vunpack.c.l.b16 %v259
    %v696 = vpack.c.b16 %v681, %v680
    %v697 = vpack.c.b16 %v683, %v682
    %v698 = vpack.c.b16 %v685, %v684
    %v699 = vpack.c.b16 %v687, %v686
    %v700 = vpack.c.b16 %v689, %v688
    %v701 = vpack.c.b16 %v691, %v690
    %v702 = vpack.c.b16 %v693, %v692
    %v703 = vpack.c.b16 %v695, %v694
    %712 = vmatprep.subr.bf16.mxu0 0
    %713 = vmatpush1.bf16.msra.mxu0 %v703
    %714 = vmatprep.subr.bf16.mxu0 0
    %715 = vmatpush1.bf16.msra.mxu0 %v702
    %716 = vmatprep.subr.bf16.mxu0 0
    %717 = vmatpush1.bf16.msra.mxu0 %v701
    %718 = vmatprep.subr.bf16.mxu0 0
    %719 = vmatpush1.bf16.msra.mxu0 %v700
    %720 = vmatprep.subr.bf16.mxu0 0
    %721 = vmatpush1.bf16.msra.mxu0 %v699
    %722 = vmatprep.subr.bf16.mxu0 0
    %723 = vmatpush1.bf16.msra.mxu0 %v698
    %724 = vmatprep.subr.bf16.mxu0 0
    %725 = vmatpush1.bf16.msra.mxu0 %v697
    %726 = vmatprep.subr.bf16.mxu0 0
    %727 = vmatpush1.bf16.msra.mxu0 %v696
    %728 = vmatprep.subr.bf16.mxu0 0
    %729 = vmatpush2.bf16.msra.mxu0 0
    %730 = vmatprep.subr.bf16.mxu0 0
    %731 = vmatpush2.bf16.msra.mxu0 0
    %732 = vmatprep.subr.bf16.mxu0 0
    %733 = vmatpush2.bf16.msra.mxu0 0
    %734 = vmatprep.subr.bf16.mxu0 0
    %735 = vmatpush2.bf16.msra.mxu0 0
    %736 = vmatprep.subr.bf16.mxu0 0
    %737 = vmatpush2.bf16.msra.mxu0 0
    %738 = vmatprep.subr.bf16.mxu0 0
    %739 = vmatpush2.bf16.msra.mxu0 0
    %740 = vmatprep.subr.bf16.mxu0 0
    %741 = vmatpush2.bf16.msra.mxu0 0
    %742 = vmatprep.subr.bf16.mxu0 0
    %743 = vmatpush2.bf16.msra.mxu0 0
    %744 = vmatprep.mubr.bf16.mxu0 0
    %745 = vmatmul.mubr.bf16.gmra.mxu0 %v211
    %v746 = vpop.f32.mrf.mxu0
    %v747 = vadd.f32 %v439, %v746
    %v748 = vpop.f32.mrf.mxu0
    %v749 = vpop.f32.mrf.mxu0
    %v750 = vpop.f32.mrf.mxu0
    %751 = vdwg.mxu0
    %v768 = vunpack.c.l.b16 %v260
    %v769 = vunpack.c.l.b16 %v261
    %v770 = vunpack.c.l.b16 %v262
    %v771 = vunpack.c.l.b16 %v263
    %v772 = vunpack.c.l.b16 %v264
    %v773 = vunpack.c.l.b16 %v265
    %v774 = vunpack.c.l.b16 %v266
    %v775 = vunpack.c.l.b16 %v267
    %v776 = vunpack.c.l.b16 %v268
    %v777 = vunpack.c.l.b16 %v269
    %v778 = vunpack.c.l.b16 %v270
    %v779 = vunpack.c.l.b16 %v271
    %v780 = vunpack.c.l.b16 %v272
    %v781 = vunpack.c.l.b16 %v273
    %v782 = vunpack.c.l.b16 %v274
    %v783 = vunpack.c.l.b16 %v275
    %v784 = vpack.c.b16 %v769, %v768
    %v785 = vpack.c.b16 %v771, %v770
    %v786 = vpack.c.b16 %v773, %v772
    %v787 = vpack.c.b16 %v775, %v774
    %v788 = vpack.c.b16 %v777, %v776
    %v789 = vpack.c.b16 %v779, %v778
    %v790 = vpack.c.b16 %v781, %v780
    %v791 = vpack.c.b16 %v783, %v782
    %800 = vmatprep.subr.bf16.mxu0 0
    %801 = vmatpush1.bf16.msra.mxu0 %v791
    %802 = vmatprep.subr.bf16.mxu0 0
    %803 = vmatpush1.bf16.msra.mxu0 %v790
    %804 = vmatprep.subr.bf16.mxu0 0
    %805 = vmatpush1.bf16.msra.mxu0 %v789
    %806 = vmatprep.subr.bf16.mxu0 0
    %807 = vmatpush1.bf16.msra.mxu0 %v788
    %808 = vmatprep.subr.bf16.mxu0 0
    %809 = vmatpush1.bf16.msra.mxu0 %v787
    %810 = vmatprep.subr.bf16.mxu0 0
    %811 = vmatpush1.bf16.msra.mxu0 %v786
    %812 = vmatprep.subr.bf16.mxu0 0
    %813 = vmatpush1.bf16.msra.mxu0 %v785
    %814 = vmatprep.subr.bf16.mxu0 0
    %815 = vmatpush1.bf16.msra.mxu0 %v784
    %816 = vmatprep.subr.bf16.mxu0 0
    %817 = vmatpush2.bf16.msra.mxu0 0
    %818 = vmatprep.subr.bf16.mxu0 0
    %819 = vmatpush2.bf16.msra.mxu0 0
    %820 = vmatprep.subr.bf16.mxu0 0
    %821 = vmatpush2.bf16.msra.mxu0 0
    %822 = vmatprep.subr.bf16.mxu0 0
    %823 = vmatpush2.bf16.msra.mxu0 0
    %824 = vmatprep.subr.bf16.mxu0 0
    %825 = vmatpush2.bf16.msra.mxu0 0
    %826 = vmatprep.subr.bf16.mxu0 0
    %827 = vmatpush2.bf16.msra.mxu0 0
    %828 = vmatprep.subr.bf16.mxu0 0
    %829 = vmatpush2.bf16.msra.mxu0 0
    %830 = vmatprep.subr.bf16.mxu0 0
    %831 = vmatpush2.bf16.msra.mxu0 0
    %832 = vmatprep.mubr.bf16.mxu0 0
    %833 = vmatmul.mubr.bf16.gmra.mxu0 %v211
    %v834 = vpop.f32.mrf.mxu0
    %v835 = vadd.f32 %v443, %v834
    %v836 = vpop.f32.mrf.mxu0
    %v837 = vpop.f32.mrf.mxu0
    %v838 = vpop.f32.mrf.mxu0
    %839 = vdwg.mxu0
    %v856 = vunpack.c.l.b16 %v276
    %v857 = vunpack.c.l.b16 %v277
    %v858 = vunpack.c.l.b16 %v278
    %v859 = vunpack.c.l.b16 %v279
    %v860 = vunpack.c.l.b16 %v280
    %v861 = vunpack.c.l.b16 %v281
    %v862 = vunpack.c.l.b16 %v282
    %v863 = vunpack.c.l.b16 %v283
    %v864 = vunpack.c.l.b16 %v284
    %v865 = vunpack.c.l.b16 %v285
    %v866 = vunpack.c.l.b16 %v286
    %v867 = vunpack.c.l.b16 %v287
    %v868 = vunpack.c.l.b16 %v288
    %v869 = vunpack.c.l.b16 %v289
    %v870 = vunpack.c.l.b16 %v290
    %v871 = vunpack.c.l.b16 %v291
    %v872 = vpack.c.b16 %v857, %v856
    %v873 = vpack.c.b16 %v859, %v858
    %v874 = vpack.c.b16 %v861, %v860
    %v875 = vpack.c.b16 %v863, %v862
    %v876 = vpack.c.b16 %v865, %v864
    %v877 = vpack.c.b16 %v867, %v866
    %v878 = vpack.c.b16 %v869, %v868
    %v879 = vpack.c.b16 %v871, %v870
    %888 = vmatprep.subr.bf16.mxu0 0
    %889 = vmatpush1.bf16.msra.mxu0 %v879
    %890 = vmatprep.subr.bf16.mxu0 0
    %891 = vmatpush1.bf16.msra.mxu0 %v878
    %892 = vmatprep.subr.bf16.mxu0 0
    %893 = vmatpush1.bf16.msra.mxu0 %v877
    %894 = vmatprep.subr.bf16.mxu0 0
    %895 = vmatpush1.bf16.msra.mxu0 %v876
    %896 = vmatprep.subr.bf16.mxu0 0
    %897 = vmatpush1.bf16.msra.mxu0 %v875
    %898 = vmatprep.subr.bf16.mxu0 0
    %899 = vmatpush1.bf16.msra.mxu0 %v874
    %900 = vmatprep.subr.bf16.mxu0 0
    %901 = vmatpush1.bf16.msra.mxu0 %v873
    %902 = vmatprep.subr.bf16.mxu0 0
    %903 = vmatpush1.bf16.msra.mxu0 %v872
    %904 = vmatprep.subr.bf16.mxu0 0
    %905 = vmatpush2.bf16.msra.mxu0 0
    %906 = vmatprep.subr.bf16.mxu0 0
    %907 = vmatpush2.bf16.msra.mxu0 0
    %908 = vmatprep.subr.bf16.mxu0 0
    %909 = vmatpush2.bf16.msra.mxu0 0
    %910 = vmatprep.subr.bf16.mxu0 0
    %911 = vmatpush2.bf16.msra.mxu0 0
    %912 = vmatprep.subr.bf16.mxu0 0
    %913 = vmatpush2.bf16.msra.mxu0 0
    %914 = vmatprep.subr.bf16.mxu0 0
    %915 = vmatpush2.bf16.msra.mxu0 0
    %916 = vmatprep.subr.bf16.mxu0 0
    %917 = vmatpush2.bf16.msra.mxu0 0
    %918 = vmatprep.subr.bf16.mxu0 0
    %919 = vmatpush2.bf16.msra.mxu0 0
    %920 = vmatprep.mubr.bf16.mxu0 0
    %921 = vmatmul.mubr.bf16.gmra.mxu0 %v211
    %v922 = vpop.f32.mrf.mxu0
    %v923 = vadd.f32 %v447, %v922
    %v924 = vpop.f32.mrf.mxu0
    %v925 = vpop.f32.mrf.mxu0
    %v926 = vpop.f32.mrf.mxu0
    %927 = vdwg.mxu0
    %v944 = vunpack.c.l.b16 %v292
    %v945 = vunpack.c.l.b16 %v293
    %v946 = vunpack.c.l.b16 %v294
    %v947 = vunpack.c.l.b16 %v295
    %v948 = vunpack.c.l.b16 %v296
    %v949 = vunpack.c.l.b16 %v297
    %v950 = vunpack.c.l.b16 %v298
    %v951 = vunpack.c.l.b16 %v299
    %v952 = vunpack.c.l.b16 %v300
    %v953 = vunpack.c.l.b16 %v301
    %v954 = vunpack.c.l.b16 %v302
    %v955 = vunpack.c.l.b16 %v303
    %v956 = vunpack.c.l.b16 %v304
    %v957 = vunpack.c.l.b16 %v305
    %v958 = vunpack.c.l.b16 %v306
    %v959 = vunpack.c.l.b16 %v307
    %v960 = vpack.c.b16 %v945, %v944
    %v961 = vpack.c.b16 %v947, %v946
    %v962 = vpack.c.b16 %v949, %v948
    %v963 = vpack.c.b16 %v951, %v950
    %v964 = vpack.c.b16 %v953, %v952
    %v965 = vpack.c.b16 %v955, %v954
    %v966 = vpack.c.b16 %v957, %v956
    %v967 = vpack.c.b16 %v959, %v958
    %976 = vmatprep.subr.bf16.mxu0 0
    %977 = vmatpush1.bf16.msra.mxu0 %v967
    %978 = vmatprep.subr.bf16.mxu0 0
    %979 = vmatpush1.bf16.msra.mxu0 %v966
    %980 = vmatprep.subr.bf16.mxu0 0
    %981 = vmatpush1.bf16.msra.mxu0 %v965
    %982 = vmatprep.subr.bf16.mxu0 0
    %983 = vmatpush1.bf16.msra.mxu0 %v964
    %984 = vmatprep.subr.bf16.mxu0 0
    %985 = vmatpush1.bf16.msra.mxu0 %v963
    %986 = vmatprep.subr.bf16.mxu0 0
    %987 = vmatpush1.bf16.msra.mxu0 %v962
    %988 = vmatprep.subr.bf16.mxu0 0
    %989 = vmatpush1.bf16.msra.mxu0 %v961
    %990 = vmatprep.subr.bf16.mxu0 0
    %991 = vmatpush1.bf16.msra.mxu0 %v960
    %992 = vmatprep.subr.bf16.mxu0 0
    %993 = vmatpush2.bf16.msra.mxu0 0
    %994 = vmatprep.subr.bf16.mxu0 0
    %995 = vmatpush2.bf16.msra.mxu0 0
    %996 = vmatprep.subr.bf16.mxu0 0
    %997 = vmatpush2.bf16.msra.mxu0 0
    %998 = vmatprep.subr.bf16.mxu0 0
    %999 = vmatpush2.bf16.msra.mxu0 0
    %1000 = vmatprep.subr.bf16.mxu0 0
    %1001 = vmatpush2.bf16.msra.mxu0 0
    %1002 = vmatprep.subr.bf16.mxu0 0
    %1003 = vmatpush2.bf16.msra.mxu0 0
    %1004 = vmatprep.subr.bf16.mxu0 0
    %1005 = vmatpush2.bf16.msra.mxu0 0
    %1006 = vmatprep.subr.bf16.mxu0 0
    %1007 = vmatpush2.bf16.msra.mxu0 0
    %1008 = vmatprep.mubr.bf16.mxu0 0
    %1009 = vmatmul.mubr.bf16.gmra.mxu0 %v211
    %v1010 = vpop.f32.mrf.mxu0
    %v1011 = vadd.f32 %v451, %v1010
    %v1012 = vpop.f32.mrf.mxu0
    %v1013 = vpop.f32.mrf.mxu0
    %v1014 = vpop.f32.mrf.mxu0
    %1015 = vdwg.mxu0
    %v1032 = vunpack.c.l.b16 %v308
    %v1033 = vunpack.c.l.b16 %v309
    %v1034 = vunpack.c.l.b16 %v310
    %v1035 = vunpack.c.l.b16 %v311
    %v1036 = vunpack.c.l.b16 %v312
    %v1037 = vunpack.c.l.b16 %v313
    %v1038 = vunpack.c.l.b16 %v314
    %v1039 = vunpack.c.l.b16 %v315
    %v1040 = vunpack.c.l.b16 %v316
    %v1041 = vunpack.c.l.b16 %v317
    %v1042 = vunpack.c.l.b16 %v318
    %v1043 = vunpack.c.l.b16 %v319
    %v1044 = vunpack.c.l.b16 %v320
    %v1045 = vunpack.c.l.b16 %v321
    %v1046 = vunpack.c.l.b16 %v322
    %v1047 = vunpack.c.l.b16 %v323
    %v1048 = vpack.c.b16 %v1033, %v1032
    %v1049 = vpack.c.b16 %v1035, %v1034
    %v1050 = vpack.c.b16 %v1037, %v1036
    %v1051 = vpack.c.b16 %v1039, %v1038
    %v1052 = vpack.c.b16 %v1041, %v1040
    %v1053 = vpack.c.b16 %v1043, %v1042
    %v1054 = vpack.c.b16 %v1045, %v1044
    %v1055 = vpack.c.b16 %v1047, %v1046
    %1064 = vmatprep.subr.bf16.mxu0 0
    %1065 = vmatpush1.bf16.msra.mxu0 %v1055
    %1066 = vmatprep.subr.bf16.mxu0 0
    %1067 = vmatpush1.bf16.msra.mxu0 %v1054
    %1068 = vmatprep.subr.bf16.mxu0 0
    %1069 = vmatpush1.bf16.msra.mxu0 %v1053
    %1070 = vmatprep.subr.bf16.mxu0 0
    %1071 = vmatpush1.bf16.msra.mxu0 %v1052
    %1072 = vmatprep.subr.bf16.mxu0 0
    %1073 = vmatpush1.bf16.msra.mxu0 %v1051
    %1074 = vmatprep.subr.bf16.mxu0 0
    %1075 = vmatpush1.bf16.msra.mxu0 %v1050
    %1076 = vmatprep.subr.bf16.mxu0 0
    %1077 = vmatpush1.bf16.msra.mxu0 %v1049
    %1078 = vmatprep.subr.bf16.mxu0 0
    %1079 = vmatpush1.bf16.msra.mxu0 %v1048
    %1080 = vmatprep.subr.bf16.mxu0 0
    %1081 = vmatpush2.bf16.msra.mxu0 0
    %1082 = vmatprep.subr.bf16.mxu0 0
    %1083 = vmatpush2.bf16.msra.mxu0 0
    %1084 = vmatprep.subr.bf16.mxu0 0
    %1085 = vmatpush2.bf16.msra.mxu0 0
    %1086 = vmatprep.subr.bf16.mxu0 0
    %1087 = vmatpush2.bf16.msra.mxu0 0
    %1088 = vmatprep.subr.bf16.mxu0 0
    %1089 = vmatpush2.bf16.msra.mxu0 0
    %1090 = vmatprep.subr.bf16.mxu0 0
    %1091 = vmatpush2.bf16.msra.mxu0 0
    %1092 = vmatprep.subr.bf16.mxu0 0
    %1093 = vmatpush2.bf16.msra.mxu0 0
    %1094 = vmatprep.subr.bf16.mxu0 0
    %1095 = vmatpush2.bf16.msra.mxu0 0
    %1096 = vmatprep.mubr.bf16.mxu0 0
    %1097 = vmatmul.mubr.bf16.gmra.mxu0 %v211
    %v1098 = vpop.f32.mrf.mxu0
    %v1099 = vadd.f32 %v455, %v1098
    %v1100 = vpop.f32.mrf.mxu0
    %v1101 = vpop.f32.mrf.mxu0
    %v1102 = vpop.f32.mrf.mxu0
    %1103 = vdwg.mxu0
    %v1120 = vunpack.c.l.b16 %v324
    %v1121 = vunpack.c.l.b16 %v325
    %v1122 = vunpack.c.l.b16 %v326
    %v1123 = vunpack.c.l.b16 %v327
    %v1124 = vunpack.c.l.b16 %v328
    %v1125 = vunpack.c.l.b16 %v329
    %v1126 = vunpack.c.l.b16 %v330
    %v1127 = vunpack.c.l.b16 %v331
    %v1128 = vunpack.c.l.b16 %v332
    %v1129 = vunpack.c.l.b16 %v333
    %v1130 = vunpack.c.l.b16 %v334
    %v1131 = vunpack.c.l.b16 %v335
    %v1132 = vunpack.c.l.b16 %v336
    %v1133 = vunpack.c.l.b16 %v337
    %v1134 = vunpack.c.l.b16 %v338
    %v1135 = vunpack.c.l.b16 %v339
    %v1136 = vpack.c.b16 %v1121, %v1120
    %v1137 = vpack.c.b16 %v1123, %v1122
    %v1138 = vpack.c.b16 %v1125, %v1124
    %v1139 = vpack.c.b16 %v1127, %v1126
    %v1140 = vpack.c.b16 %v1129, %v1128
    %v1141 = vpack.c.b16 %v1131, %v1130
    %v1142 = vpack.c.b16 %v1133, %v1132
    %v1143 = vpack.c.b16 %v1135, %v1134
    %1152 = vmatprep.subr.bf16.mxu0 0
    %1153 = vmatpush1.bf16.msra.mxu0 %v1143
    %1154 = vmatprep.subr.bf16.mxu0 0
    %1155 = vmatpush1.bf16.msra.mxu0 %v1142
    %1156 = vmatprep.subr.bf16.mxu0 0
    %1157 = vmatpush1.bf16.msra.mxu0 %v1141
    %1158 = vmatprep.subr.bf16.mxu0 0
    %1159 = vmatpush1.bf16.msra.mxu0 %v1140
    %1160 = vmatprep.subr.bf16.mxu0 0
    %1161 = vmatpush1.bf16.msra.mxu0 %v1139
    %1162 = vmatprep.subr.bf16.mxu0 0
    %1163 = vmatpush1.bf16.msra.mxu0 %v1138
    %1164 = vmatprep.subr.bf16.mxu0 0
    %1165 = vmatpush1.bf16.msra.mxu0 %v1137
    %1166 = vmatprep.subr.bf16.mxu0 0
    %1167 = vmatpush1.bf16.msra.mxu0 %v1136
    %1168 = vmatprep.subr.bf16.mxu0 0
    %1169 = vmatpush2.bf16.msra.mxu0 0
    %1170 = vmatprep.subr.bf16.mxu0 0
    %1171 = vmatpush2.bf16.msra.mxu0 0
    %1172 = vmatprep.subr.bf16.mxu0 0
    %1173 = vmatpush2.bf16.msra.mxu0 0
    %1174 = vmatprep.subr.bf16.mxu0 0
    %1175 = vmatpush2.bf16.msra.mxu0 0
    %1176 = vmatprep.subr.bf16.mxu0 0
    %1177 = vmatpush2.bf16.msra.mxu0 0
    %1178 = vmatprep.subr.bf16.mxu0 0
    %1179 = vmatpush2.bf16.msra.mxu0 0
    %1180 = vmatprep.subr.bf16.mxu0 0
    %1181 = vmatpush2.bf16.msra.mxu0 0
    %1182 = vmatprep.subr.bf16.mxu0 0
    %1183 = vmatpush2.bf16.msra.mxu0 0
    %1184 = vmatprep.mubr.bf16.mxu0 0
    %1185 = vmatmul.mubr.bf16.gmra.mxu0 %v211
    %v1186 = vpop.f32.mrf.mxu0
    %v1187 = vadd.f32 %v459, %v1186
    %v1188 = vpop.f32.mrf.mxu0
    %v1189 = vpop.f32.mrf.mxu0
    %v1190 = vpop.f32.mrf.mxu0
    %1191 = vdwg.mxu0
    %v1208 = vunpack.c.l.b16 %v340
    %v1209 = vunpack.c.l.b16 %v341
    %v1210 = vunpack.c.l.b16 %v342
    %v1211 = vunpack.c.l.b16 %v343
    %v1212 = vunpack.c.l.b16 %v344
    %v1213 = vunpack.c.l.b16 %v345
    %v1214 = vunpack.c.l.b16 %v346
    %v1215 = vunpack.c.l.b16 %v347
    %v1216 = vunpack.c.l.b16 %v348
    %v1217 = vunpack.c.l.b16 %v349
    %v1218 = vunpack.c.l.b16 %v350
    %v1219 = vunpack.c.l.b16 %v351
    %v1220 = vunpack.c.l.b16 %v352
    %v1221 = vunpack.c.l.b16 %v353
    %v1222 = vunpack.c.l.b16 %v354
    %v1223 = vunpack.c.l.b16 %v355
    %v1224 = vpack.c.b16 %v1209, %v1208
    %v1225 = vpack.c.b16 %v1211, %v1210
    %v1226 = vpack.c.b16 %v1213, %v1212
    %v1227 = vpack.c.b16 %v1215, %v1214
    %v1228 = vpack.c.b16 %v1217, %v1216
    %v1229 = vpack.c.b16 %v1219, %v1218
    %v1230 = vpack.c.b16 %v1221, %v1220
    %v1231 = vpack.c.b16 %v1223, %v1222
    %1240 = vmatprep.subr.bf16.mxu0 0
    %1241 = vmatpush1.bf16.msra.mxu0 %v1231
    %1242 = vmatprep.subr.bf16.mxu0 0
    %1243 = vmatpush1.bf16.msra.mxu0 %v1230
    %1244 = vmatprep.subr.bf16.mxu0 0
    %1245 = vmatpush1.bf16.msra.mxu0 %v1229
    %1246 = vmatprep.subr.bf16.mxu0 0
    %1247 = vmatpush1.bf16.msra.mxu0 %v1228
    %1248 = vmatprep.subr.bf16.mxu0 0
    %1249 = vmatpush1.bf16.msra.mxu0 %v1227
    %1250 = vmatprep.subr.bf16.mxu0 0
    %1251 = vmatpush1.bf16.msra.mxu0 %v1226
    %1252 = vmatprep.subr.bf16.mxu0 0
    %1253 = vmatpush1.bf16.msra.mxu0 %v1225
    %1254 = vmatprep.subr.bf16.mxu0 0
    %1255 = vmatpush1.bf16.msra.mxu0 %v1224
    %1256 = vmatprep.subr.bf16.mxu0 0
    %1257 = vmatpush2.bf16.msra.mxu0 0
    %1258 = vmatprep.subr.bf16.mxu0 0
    %1259 = vmatpush2.bf16.msra.mxu0 0
    %1260 = vmatprep.subr.bf16.mxu0 0
    %1261 = vmatpush2.bf16.msra.mxu0 0
    %1262 = vmatprep.subr.bf16.mxu0 0
    %1263 = vmatpush2.bf16.msra.mxu0 0
    %1264 = vmatprep.subr.bf16.mxu0 0
    %1265 = vmatpush2.bf16.msra.mxu0 0
    %1266 = vmatprep.subr.bf16.mxu0 0
    %1267 = vmatpush2.bf16.msra.mxu0 0
    %1268 = vmatprep.subr.bf16.mxu0 0
    %1269 = vmatpush2.bf16.msra.mxu0 0
    %1270 = vmatprep.subr.bf16.mxu0 0
    %1271 = vmatpush2.bf16.msra.mxu0 0
    %1272 = vmatprep.mubr.bf16.mxu0 0
    %1273 = vmatmul.mubr.bf16.gmra.mxu0 %v211
    %v1274 = vpop.f32.mrf.mxu0
    %v1275 = vadd.f32 %v463, %v1274
    %v1276 = vpop.f32.mrf.mxu0
    %v1277 = vpop.f32.mrf.mxu0
    %v1278 = vpop.f32.mrf.mxu0
    %1279 = vdwg.mxu0
    %v1296 = vunpack.c.l.b16 %v356
    %v1297 = vunpack.c.l.b16 %v357
    %v1298 = vunpack.c.l.b16 %v358
    %v1299 = vunpack.c.l.b16 %v359
    %v1300 = vunpack.c.l.b16 %v360
    %v1301 = vunpack.c.l.b16 %v361
    %v1302 = vunpack.c.l.b16 %v362
    %v1303 = vunpack.c.l.b16 %v363
    %v1304 = vunpack.c.l.b16 %v364
    %v1305 = vunpack.c.l.b16 %v365
    %v1306 = vunpack.c.l.b16 %v366
    %v1307 = vunpack.c.l.b16 %v367
    %v1308 = vunpack.c.l.b16 %v368
    %v1309 = vunpack.c.l.b16 %v369
    %v1310 = vunpack.c.l.b16 %v370
    %v1311 = vunpack.c.l.b16 %v371
    %v1312 = vpack.c.b16 %v1297, %v1296
    %v1313 = vpack.c.b16 %v1299, %v1298
    %v1314 = vpack.c.b16 %v1301, %v1300
    %v1315 = vpack.c.b16 %v1303, %v1302
    %v1316 = vpack.c.b16 %v1305, %v1304
    %v1317 = vpack.c.b16 %v1307, %v1306
    %v1318 = vpack.c.b16 %v1309, %v1308
    %v1319 = vpack.c.b16 %v1311, %v1310
    %1328 = vmatprep.subr.bf16.mxu0 0
    %1329 = vmatpush1.bf16.msra.mxu0 %v1319
    %1330 = vmatprep.subr.bf16.mxu0 0
    %1331 = vmatpush1.bf16.msra.mxu0 %v1318
    %1332 = vmatprep.subr.bf16.mxu0 0
    %1333 = vmatpush1.bf16.msra.mxu0 %v1317
    %1334 = vmatprep.subr.bf16.mxu0 0
    %1335 = vmatpush1.bf16.msra.mxu0 %v1316
    %1336 = vmatprep.subr.bf16.mxu0 0
    %1337 = vmatpush1.bf16.msra.mxu0 %v1315
    %1338 = vmatprep.subr.bf16.mxu0 0
    %1339 = vmatpush1.bf16.msra.mxu0 %v1314
    %1340 = vmatprep.subr.bf16.mxu0 0
    %1341 = vmatpush1.bf16.msra.mxu0 %v1313
    %1342 = vmatprep.subr.bf16.mxu0 0
    %1343 = vmatpush1.bf16.msra.mxu0 %v1312
    %1344 = vmatprep.subr.bf16.mxu0 0
    %1345 = vmatpush2.bf16.msra.mxu0 0
    %1346 = vmatprep.subr.bf16.mxu0 0
    %1347 = vmatpush2.bf16.msra.mxu0 0
    %1348 = vmatprep.subr.bf16.mxu0 0
    %1349 = vmatpush2.bf16.msra.mxu0 0
    %1350 = vmatprep.subr.bf16.mxu0 0
    %1351 = vmatpush2.bf16.msra.mxu0 0
    %1352 = vmatprep.subr.bf16.mxu0 0
    %1353 = vmatpush2.bf16.msra.mxu0 0
    %1354 = vmatprep.subr.bf16.mxu0 0
    %1355 = vmatpush2.bf16.msra.mxu0 0
    %1356 = vmatprep.subr.bf16.mxu0 0
    %1357 = vmatpush2.bf16.msra.mxu0 0
    %1358 = vmatprep.subr.bf16.mxu0 0
    %1359 = vmatpush2.bf16.msra.mxu0 0
    %1360 = vmatprep.mubr.bf16.mxu0 0
    %1361 = vmatmul.mubr.bf16.gmra.mxu0 %v211
    %v1362 = vpop.f32.mrf.mxu0
    %v1363 = vadd.f32 %v467, %v1362
    %v1364 = vpop.f32.mrf.mxu0
    %v1365 = vpop.f32.mrf.mxu0
    %v1366 = vpop.f32.mrf.mxu0
    %1367 = vdwg.mxu0
    %v1384 = vunpack.c.l.b16 %v372
    %v1385 = vunpack.c.l.b16 %v373
    %v1386 = vunpack.c.l.b16 %v374
    %v1387 = vunpack.c.l.b16 %v375
    %v1388 = vunpack.c.l.b16 %v376
    %v1389 = vunpack.c.l.b16 %v377
    %v1390 = vunpack.c.l.b16 %v378
    %v1391 = vunpack.c.l.b16 %v379
    %v1392 = vunpack.c.l.b16 %v380
    %v1393 = vunpack.c.l.b16 %v381
    %v1394 = vunpack.c.l.b16 %v382
    %v1395 = vunpack.c.l.b16 %v383
    %v1396 = vunpack.c.l.b16 %v384
    %v1397 = vunpack.c.l.b16 %v385
    %v1398 = vunpack.c.l.b16 %v386
    %v1399 = vunpack.c.l.b16 %v387
    %v1400 = vpack.c.b16 %v1385, %v1384
    %v1401 = vpack.c.b16 %v1387, %v1386
    %v1402 = vpack.c.b16 %v1389, %v1388
    %v1403 = vpack.c.b16 %v1391, %v1390
    %v1404 = vpack.c.b16 %v1393, %v1392
    %v1405 = vpack.c.b16 %v1395, %v1394
    %v1406 = vpack.c.b16 %v1397, %v1396
    %v1407 = vpack.c.b16 %v1399, %v1398
    %1416 = vmatprep.subr.bf16.mxu0 0
    %1417 = vmatpush1.bf16.msra.mxu0 %v1407
    %1418 = vmatprep.subr.bf16.mxu0 0
    %1419 = vmatpush1.bf16.msra.mxu0 %v1406
    %1420 = vmatprep.subr.bf16.mxu0 0
    %1421 = vmatpush1.bf16.msra.mxu0 %v1405
    %1422 = vmatprep.subr.bf16.mxu0 0
    %1423 = vmatpush1.bf16.msra.mxu0 %v1404
    %1424 = vmatprep.subr.bf16.mxu0 0
    %1425 = vmatpush1.bf16.msra.mxu0 %v1403
    %1426 = vmatprep.subr.bf16.mxu0 0
    %1427 = vmatpush1.bf16.msra.mxu0 %v1402
    %1428 = vmatprep.subr.bf16.mxu0 0
    %1429 = vmatpush1.bf16.msra.mxu0 %v1401
    %1430 = vmatprep.subr.bf16.mxu0 0
    %1431 = vmatpush1.bf16.msra.mxu0 %v1400
    %1432 = vmatprep.subr.bf16.mxu0 0
    %1433 = vmatpush2.bf16.msra.mxu0 0
    %1434 = vmatprep.subr.bf16.mxu0 0
    %1435 = vmatpush2.bf16.msra.mxu0 0
    %1436 = vmatprep.subr.bf16.mxu0 0
    %1437 = vmatpush2.bf16.msra.mxu0 0
    %1438 = vmatprep.subr.bf16.mxu0 0
    %1439 = vmatpush2.bf16.msra.mxu0 0
    %1440 = vmatprep.subr.bf16.mxu0 0
    %1441 = vmatpush2.bf16.msra.mxu0 0
    %1442 = vmatprep.subr.bf16.mxu0 0
    %1443 = vmatpush2.bf16.msra.mxu0 0
    %1444 = vmatprep.subr.bf16.mxu0 0
    %1445 = vmatpush2.bf16.msra.mxu0 0
    %1446 = vmatprep.subr.bf16.mxu0 0
    %1447 = vmatpush2.bf16.msra.mxu0 0
    %1448 = vmatprep.mubr.bf16.mxu0 0
    %1449 = vmatmul.mubr.bf16.gmra.mxu0 %v211
    %v1450 = vpop.f32.mrf.mxu0
    %v1451 = vadd.f32 %v471, %v1450
    %v1452 = vpop.f32.mrf.mxu0
    %v1453 = vpop.f32.mrf.mxu0
    %v1454 = vpop.f32.mrf.mxu0
    %1455 = vdwg.mxu0
    %v1472 = vunpack.c.l.b16 %v388
    %v1473 = vunpack.c.l.b16 %v389
    %v1474 = vunpack.c.l.b16 %v390
    %v1475 = vunpack.c.l.b16 %v391
    %v1476 = vunpack.c.l.b16 %v392
    %v1477 = vunpack.c.l.b16 %v393
    %v1478 = vunpack.c.l.b16 %v394
    %v1479 = vunpack.c.l.b16 %v395
    %v1480 = vunpack.c.l.b16 %v396
    %v1481 = vunpack.c.l.b16 %v397
    %v1482 = vunpack.c.l.b16 %v398
    %v1483 = vunpack.c.l.b16 %v399
    %v1484 = vunpack.c.l.b16 %v400
    %v1485 = vunpack.c.l.b16 %v401
    %v1486 = vunpack.c.l.b16 %v402
    %v1487 = vunpack.c.l.b16 %v403
    %v1488 = vpack.c.b16 %v1473, %v1472
    %v1489 = vpack.c.b16 %v1475, %v1474
    %v1490 = vpack.c.b16 %v1477, %v1476
    %v1491 = vpack.c.b16 %v1479, %v1478
    %v1492 = vpack.c.b16 %v1481, %v1480
    %v1493 = vpack.c.b16 %v1483, %v1482
    %v1494 = vpack.c.b16 %v1485, %v1484
    %v1495 = vpack.c.b16 %v1487, %v1486
    %1504 = vmatprep.subr.bf16.mxu0 0
    %1505 = vmatpush1.bf16.msra.mxu0 %v1495
    %1506 = vmatprep.subr.bf16.mxu0 0
    %1507 = vmatpush1.bf16.msra.mxu0 %v1494
    %1508 = vmatprep.subr.bf16.mxu0 0
    %1509 = vmatpush1.bf16.msra.mxu0 %v1493
    %1510 = vmatprep.subr.bf16.mxu0 0
    %1511 = vmatpush1.bf16.msra.mxu0 %v1492
    %1512 = vmatprep.subr.bf16.mxu0 0
    %1513 = vmatpush1.bf16.msra.mxu0 %v1491
    %1514 = vmatprep.subr.bf16.mxu0 0
    %1515 = vmatpush1.bf16.msra.mxu0 %v1490
    %1516 = vmatprep.subr.bf16.mxu0 0
    %1517 = vmatpush1.bf16.msra.mxu0 %v1489
    %1518 = vmatprep.subr.bf16.mxu0 0
    %1519 = vmatpush1.bf16.msra.mxu0 %v1488
    %1520 = vmatprep.subr.bf16.mxu0 0
    %1521 = vmatpush2.bf16.msra.mxu0 0
    %1522 = vmatprep.subr.bf16.mxu0 0
    %1523 = vmatpush2.bf16.msra.mxu0 0
    %1524 = vmatprep.subr.bf16.mxu0 0
    %1525 = vmatpush2.bf16.msra.mxu0 0
    %1526 = vmatprep.subr.bf16.mxu0 0
    %1527 = vmatpush2.bf16.msra.mxu0 0
    %1528 = vmatprep.subr.bf16.mxu0 0
    %1529 = vmatpush2.bf16.msra.mxu0 0
    %1530 = vmatprep.subr.bf16.mxu0 0
    %1531 = vmatpush2.bf16.msra.mxu0 0
    %1532 = vmatprep.subr.bf16.mxu0 0
    %1533 = vmatpush2.bf16.msra.mxu0 0
    %1534 = vmatprep.subr.bf16.mxu0 0
    %1535 = vmatpush2.bf16.msra.mxu0 0
    %1536 = vmatprep.mubr.bf16.mxu0 0
    %1537 = vmatmul.mubr.bf16.gmra.mxu0 %v211
    %v1538 = vpop.f32.mrf.mxu0
    %v1539 = vadd.f32 %v475, %v1538
    %v1540 = vpop.f32.mrf.mxu0
    %v1541 = vpop.f32.mrf.mxu0
    %v1542 = vpop.f32.mrf.mxu0
    %1543 = vdwg.mxu0
    %v1544 = vpack.c.bf16 %v571, %v571
    %v1545 = vpack.c.bf16 %v659, %v659
    %v1546 = vpack.c.bf16 %v747, %v747
    %v1547 = vpack.c.bf16 %v835, %v835
    %v1548 = vpack.c.bf16 %v923, %v923
    %v1549 = vpack.c.bf16 %v1011, %v1011
    %v1550 = vpack.c.bf16 %v1099, %v1099
    %v1551 = vpack.c.bf16 %v1187, %v1187
    %v1552 = vpack.c.bf16 %v1275, %v1275
    %v1553 = vpack.c.bf16 %v1363, %v1363
    %v1554 = vpack.c.bf16 %v1451, %v1451
    %v1555 = vpack.c.bf16 %v1539, %v1539
    %vm1556 = vcmask 261120
    %v1558 = vsel %vm1556, %v1544, 0
    %v1561 = vsel %vm1556, %v1548, 0
    %1563 = vmatprep.subr.bf16.mxu0 0
    %1564 = vmatpush1.bf16.xpose.msra.mxu0 0
    %1565 = vmatprep.subr.bf16.mxu0 0
    %1566 = vmatpush1.bf16.xpose.msra.mxu0 0
    %1567 = vmatprep.subr.bf16.mxu0 0
    %1568 = vmatpush1.bf16.xpose.msra.mxu0 0
    %1569 = vmatprep.subr.bf16.mxu0 0
    %1570 = vmatpush1.bf16.xpose.msra.mxu0 0
    %1571 = vmatprep.subr.bf16.mxu0 0
    %1572 = vmatpush1.bf16.xpose.msra.mxu0 0
    %1573 = vmatprep.subr.bf16.mxu0 0
    %1574 = vmatpush1.bf16.xpose.msra.mxu0 0
    %1575 = vmatprep.subr.bf16.mxu0 0
    %1576 = vmatpush1.bf16.xpose.msra.mxu0 0
    %1577 = vmatprep.subr.bf16.mxu0 0
    %1578 = vmatpush1.bf16.xpose.msra.mxu0 %v1561
    %1579 = vmatprep.subr.bf16.mxu0 0
    %1580 = vmatpush2.bf16.xpose.msra.mxu0 0
    %1581 = vmatprep.subr.bf16.mxu0 0
    %1582 = vmatpush2.bf16.xpose.msra.mxu0 0
    %1583 = vmatprep.subr.bf16.mxu0 0
    %1584 = vmatpush2.bf16.xpose.msra.mxu0 0
    %1585 = vmatprep.subr.bf16.mxu0 0
    %1586 = vmatpush2.bf16.xpose.msra.mxu0 0
    %1587 = vmatprep.subr.bf16.mxu0 0
    %1588 = vmatpush2.bf16.xpose.msra.mxu0 0
    %1589 = vmatprep.subr.bf16.mxu0 0
    %1590 = vmatpush2.bf16.xpose.msra.mxu0 0
    %1591 = vmatprep.subr.bf16.mxu0 0
    %1592 = vmatpush2.bf16.xpose.msra.mxu0 0
    %1593 = vmatprep.subr.bf16.mxu0 0
    %1594 = vmatpush2.bf16.xpose.msra.mxu0 0
    %1595 = vmatprep.mubr.bf16.mxu0 0
    %1596 = vmatmul.mubr.bf16.gmra.mxu0 %v1558
    %v1597 = vpop.f32.mrf.mxu0
    %v1598 = vadd.f32 0.0, %v1597
    %v1599 = vpop.f32.mrf.mxu0
    %v1600 = vpop.f32.mrf.mxu0
    %v1601 = vpop.f32.mrf.mxu0
    %1602 = vdwg.mxu0
    %v1604 = vsel %vm1556, %v1545, 0
    %v1607 = vsel %vm1556, %v1549, 0
    %1609 = vmatprep.subr.bf16.mxu0 0
    %1610 = vmatpush1.bf16.xpose.msra.mxu0 0
    %1611 = vmatprep.subr.bf16.mxu0 0
    %1612 = vmatpush1.bf16.xpose.msra.mxu0 0
    %1613 = vmatprep.subr.bf16.mxu0 0
    %1614 = vmatpush1.bf16.xpose.msra.mxu0 0
    %1615 = vmatprep.subr.bf16.mxu0 0
    %1616 = vmatpush1.bf16.xpose.msra.mxu0 0
    %1617 = vmatprep.subr.bf16.mxu0 0
    %1618 = vmatpush1.bf16.xpose.msra.mxu0 0
    %1619 = vmatprep.subr.bf16.mxu0 0
    %1620 = vmatpush1.bf16.xpose.msra.mxu0 0
    %1621 = vmatprep.subr.bf16.mxu0 0
    %1622 = vmatpush1.bf16.xpose.msra.mxu0 0
    %1623 = vmatprep.subr.bf16.mxu0 0
    %1624 = vmatpush1.bf16.xpose.msra.mxu0 %v1607
    %1625 = vmatprep.subr.bf16.mxu0 0
    %1626 = vmatpush2.bf16.xpose.msra.mxu0 0
    %1627 = vmatprep.subr.bf16.mxu0 0
    %1628 = vmatpush2.bf16.xpose.msra.mxu0 0
    %1629 = vmatprep.subr.bf16.mxu0 0
    %1630 = vmatpush2.bf16.xpose.msra.mxu0 0
    %1631 = vmatprep.subr.bf16.mxu0 0
    %1632 = vmatpush2.bf16.xpose.msra.mxu0 0
    %1633 = vmatprep.subr.bf16.mxu0 0
    %1634 = vmatpush2.bf16.xpose.msra.mxu0 0
    %1635 = vmatprep.subr.bf16.mxu0 0
    %1636 = vmatpush2.bf16.xpose.msra.mxu0 0
    %1637 = vmatprep.subr.bf16.mxu0 0
    %1638 = vmatpush2.bf16.xpose.msra.mxu0 0
    %1639 = vmatprep.subr.bf16.mxu0 0
    %1640 = vmatpush2.bf16.xpose.msra.mxu0 0
    %1641 = vmatprep.mubr.bf16.mxu0 0
    %1642 = vmatmul.mubr.bf16.gmra.mxu0 %v1604
    %v1643 = vpop.f32.mrf.mxu0
    %v1644 = vadd.f32 0.0, %v1643
    %v1645 = vpop.f32.mrf.mxu0
    %v1646 = vpop.f32.mrf.mxu0
    %v1647 = vpop.f32.mrf.mxu0
    %1648 = vdwg.mxu0
    %v1650 = vsel %vm1556, %v1546, 0
    %v1653 = vsel %vm1556, %v1550, 0
    %1655 = vmatprep.subr.bf16.mxu0 0
    %1656 = vmatpush1.bf16.xpose.msra.mxu0 0
    %1657 = vmatprep.subr.bf16.mxu0 0
    %1658 = vmatpush1.bf16.xpose.msra.mxu0 0
    %1659 = vmatprep.subr.bf16.mxu0 0
    %1660 = vmatpush1.bf16.xpose.msra.mxu0 0
    %1661 = vmatprep.subr.bf16.mxu0 0
    %1662 = vmatpush1.bf16.xpose.msra.mxu0 0
    %1663 = vmatprep.subr.bf16.mxu0 0
    %1664 = vmatpush1.bf16.xpose.msra.mxu0 0
    %1665 = vmatprep.subr.bf16.mxu0 0
    %1666 = vmatpush1.bf16.xpose.msra.mxu0 0
    %1667 = vmatprep.subr.bf16.mxu0 0
    %1668 = vmatpush1.bf16.xpose.msra.mxu0 0
    %1669 = vmatprep.subr.bf16.mxu0 0
    %1670 = vmatpush1.bf16.xpose.msra.mxu0 %v1653
    %1671 = vmatprep.subr.bf16.mxu0 0
    %1672 = vmatpush2.bf16.xpose.msra.mxu0 0
    %1673 = vmatprep.subr.bf16.mxu0 0
    %1674 = vmatpush2.bf16.xpose.msra.mxu0 0
    %1675 = vmatprep.subr.bf16.mxu0 0
    %1676 = vmatpush2.bf16.xpose.msra.mxu0 0
    %1677 = vmatprep.subr.bf16.mxu0 0
    %1678 = vmatpush2.bf16.xpose.msra.mxu0 0
    %1679 = vmatprep.subr.bf16.mxu0 0
    %1680 = vmatpush2.bf16.xpose.msra.mxu0 0
    %1681 = vmatprep.subr.bf16.mxu0 0
    %1682 = vmatpush2.bf16.xpose.msra.mxu0 0
    %1683 = vmatprep.subr.bf16.mxu0 0
    %1684 = vmatpush2.bf16.xpose.msra.mxu0 0
    %1685 = vmatprep.subr.bf16.mxu0 0
    %1686 = vmatpush2.bf16.xpose.msra.mxu0 0
    %1687 = vmatprep.mubr.bf16.mxu0 0
    %1688 = vmatmul.mubr.bf16.gmra.mxu0 %v1650
    %v1689 = vpop.f32.mrf.mxu0
    %v1690 = vadd.f32 0.0, %v1689
    %v1691 = vpop.f32.mrf.mxu0
    %v1692 = vpop.f32.mrf.mxu0
    %v1693 = vpop.f32.mrf.mxu0
    %1694 = vdwg.mxu0
    %v1696 = vsel %vm1556, %v1547, 0
    %v1699 = vsel %vm1556, %v1551, 0
    %1701 = vmatprep.subr.bf16.mxu0 0
    %1702 = vmatpush1.bf16.xpose.msra.mxu0 0
    %1703 = vmatprep.subr.bf16.mxu0 0
    %1704 = vmatpush1.bf16.xpose.msra.mxu0 0
    %1705 = vmatprep.subr.bf16.mxu0 0
    %1706 = vmatpush1.bf16.xpose.msra.mxu0 0
    %1707 = vmatprep.subr.bf16.mxu0 0
    %1708 = vmatpush1.bf16.xpose.msra.mxu0 0
    %1709 = vmatprep.subr.bf16.mxu0 0
    %1710 = vmatpush1.bf16.xpose.msra.mxu0 0
    %1711 = vmatprep.subr.bf16.mxu0 0
    %1712 = vmatpush1.bf16.xpose.msra.mxu0 0
    %1713 = vmatprep.subr.bf16.mxu0 0
    %1714 = vmatpush1.bf16.xpose.msra.mxu0 0
    %1715 = vmatprep.subr.bf16.mxu0 0
    %1716 = vmatpush1.bf16.xpose.msra.mxu0 %v1699
    %1717 = vmatprep.subr.bf16.mxu0 0
    %1718 = vmatpush2.bf16.xpose.msra.mxu0 0
    %1719 = vmatprep.subr.bf16.mxu0 0
    %1720 = vmatpush2.bf16.xpose.msra.mxu0 0
    %1721 = vmatprep.subr.bf16.mxu0 0
    %1722 = vmatpush2.bf16.xpose.msra.mxu0 0
    %1723 = vmatprep.subr.bf16.mxu0 0
    %1724 = vmatpush2.bf16.xpose.msra.mxu0 0
    %1725 = vmatprep.subr.bf16.mxu0 0
    %1726 = vmatpush2.bf16.xpose.msra.mxu0 0
    %1727 = vmatprep.subr.bf16.mxu0 0
    %1728 = vmatpush2.bf16.xpose.msra.mxu0 0
    %1729 = vmatprep.subr.bf16.mxu0 0
    %1730 = vmatpush2.bf16.xpose.msra.mxu0 0
    %1731 = vmatprep.subr.bf16.mxu0 0
    %1732 = vmatpush2.bf16.xpose.msra.mxu0 0
    %1733 = vmatprep.mubr.bf16.mxu0 0
    %1734 = vmatmul.mubr.bf16.gmra.mxu0 %v1696
    %v1735 = vpop.f32.mrf.mxu0
    %v1736 = vadd.f32 0.0, %v1735
    %v1737 = vpop.f32.mrf.mxu0
    %v1738 = vpop.f32.mrf.mxu0
    %v1739 = vpop.f32.mrf.mxu0
    %1740 = vdwg.mxu0
    %vm1741 = vcmask 64512
    %v1742 = vsel %vm1741, %v1598, -inf
    %1743 = vmax.xlane.f32.xlu0 %v1742
    %v1744 = vpop.xlane.xlu0 %1743
    %v1745 = vsel %vm1741, %v1644, -inf
    %1746 = vmax.xlane.f32.xlu0 %v1745
    %v1747 = vpop.xlane.xlu0 %1746
    %v1748 = vsel %vm1741, %v1690, -inf
    %1749 = vmax.xlane.f32.xlu0 %v1748
    %v1750 = vpop.xlane.xlu0 %1749
    %v1751 = vsel %vm1741, %v1736, -inf
    %1752 = vmax.xlane.f32.xlu0 %v1751
    %v1753 = vpop.xlane.xlu0 %1752
    %v1754 = vsub.f32 %v1598, %v1744
    %v1755 = vsub.f32 %v1644, %v1747
    %v1756 = vsub.f32 %v1690, %v1750
    %v1757 = vsub.f32 %v1736, %v1753
    %v1758 = vmul.f32 %v1754, 1.442695
    %v1759 = vpow.pop %v1758
    %v1760 = vmul.f32 %v1755, 1.442695
    %v1761 = vpow.pop %v1760
    %v1762 = vmul.f32 %v1756, 1.442695
    %v1763 = vpow.pop %v1762
    %v1764 = vmul.f32 %v1757, 1.442695
    %v1765 = vpow.pop %v1764
    %v1766 = vsel %vm1741, %v1759, 0.0
    %1767 = vadd.xlane.f32.xlu0 %v1766
    %v1768 = vpop.xlane.xlu0 %1767
    %v1769 = vsel %vm1741, %v1761, 0.0
    %1770 = vadd.xlane.f32.xlu0 %v1769
    %v1771 = vpop.xlane.xlu0 %1770
    %v1772 = vsel %vm1741, %v1763, 0.0
    %1773 = vadd.xlane.f32.xlu0 %v1772
    %v1774 = vpop.xlane.xlu0 %1773
    %v1775 = vsel %vm1741, %v1765, 0.0
    %1776 = vadd.xlane.f32.xlu0 %v1775
    %v1777 = vpop.xlane.xlu0 %1776
    %v1778 = vrcp.pop %v1768
    %v1779 = vrcp.pop %v1771
    %v1780 = vrcp.pop %v1774
    %v1781 = vrcp.pop %v1777
    %v1782 = vmul.f32 %v1759, %v1778
    %v1783 = vmul.f32 %v1761, %v1779
    %v1784 = vmul.f32 %v1763, %v1780
    %v1785 = vmul.f32 %v1765, %v1781
    %v1786 = vpack.c.bf16 %v1782, %v1782
    %v1787 = vpack.c.bf16 %v1783, %v1783
    %v1788 = vpack.c.bf16 %v1784, %v1784
    %v1789 = vpack.c.bf16 %v1785, %v1785
    %v1791 = vsel %vm1741, %v1786, 0
    %vm1793 = vcmask 1043456
    %v1795 = vsel %vm1793, %v1552, 0
    %1797 = vmatprep.subr.bf16.mxu0 0
    %1798 = vmatpush1.bf16.msra.mxu0 0
    %1799 = vmatprep.subr.bf16.mxu0 0
    %1800 = vmatpush1.bf16.msra.mxu0 0
    %1801 = vmatprep.subr.bf16.mxu0 0
    %1802 = vmatpush1.bf16.msra.mxu0 0
    %1803 = vmatprep.subr.bf16.mxu0 0
    %1804 = vmatpush1.bf16.msra.mxu0 0
    %1805 = vmatprep.subr.bf16.mxu0 0
    %1806 = vmatpush1.bf16.msra.mxu0 0
    %1807 = vmatprep.subr.bf16.mxu0 0
    %1808 = vmatpush1.bf16.msra.mxu0 0
    %1809 = vmatprep.subr.bf16.mxu0 0
    %1810 = vmatpush1.bf16.msra.mxu0 0
    %1811 = vmatprep.subr.bf16.mxu0 0
    %1812 = vmatpush1.bf16.msra.mxu0 %v1795
    %1813 = vmatprep.subr.bf16.mxu0 0
    %1814 = vmatpush2.bf16.msra.mxu0 0
    %1815 = vmatprep.subr.bf16.mxu0 0
    %1816 = vmatpush2.bf16.msra.mxu0 0
    %1817 = vmatprep.subr.bf16.mxu0 0
    %1818 = vmatpush2.bf16.msra.mxu0 0
    %1819 = vmatprep.subr.bf16.mxu0 0
    %1820 = vmatpush2.bf16.msra.mxu0 0
    %1821 = vmatprep.subr.bf16.mxu0 0
    %1822 = vmatpush2.bf16.msra.mxu0 0
    %1823 = vmatprep.subr.bf16.mxu0 0
    %1824 = vmatpush2.bf16.msra.mxu0 0
    %1825 = vmatprep.subr.bf16.mxu0 0
    %1826 = vmatpush2.bf16.msra.mxu0 0
    %1827 = vmatprep.subr.bf16.mxu0 0
    %1828 = vmatpush2.bf16.msra.mxu0 0
    %1829 = vmatprep.mubr.bf16.mxu0 0
    %1830 = vmatmul.mubr.bf16.gmra.mxu0 %v1791
    %v1831 = vpop.f32.mrf.mxu0
    %v1832 = vadd.f32 0.0, %v1831
    %v1833 = vpop.f32.mrf.mxu0
    %v1834 = vpop.f32.mrf.mxu0
    %v1835 = vpop.f32.mrf.mxu0
    %1836 = vdwg.mxu0
    %v1838 = vsel %vm1741, %v1787, 0
    %v1841 = vsel %vm1793, %v1553, 0
    %1843 = vmatprep.subr.bf16.mxu0 0
    %1844 = vmatpush1.bf16.msra.mxu0 0
    %1845 = vmatprep.subr.bf16.mxu0 0
    %1846 = vmatpush1.bf16.msra.mxu0 0
    %1847 = vmatprep.subr.bf16.mxu0 0
    %1848 = vmatpush1.bf16.msra.mxu0 0
    %1849 = vmatprep.subr.bf16.mxu0 0
    %1850 = vmatpush1.bf16.msra.mxu0 0
    %1851 = vmatprep.subr.bf16.mxu0 0
    %1852 = vmatpush1.bf16.msra.mxu0 0
    %1853 = vmatprep.subr.bf16.mxu0 0
    %1854 = vmatpush1.bf16.msra.mxu0 0
    %1855 = vmatprep.subr.bf16.mxu0 0
    %1856 = vmatpush1.bf16.msra.mxu0 0
    %1857 = vmatprep.subr.bf16.mxu0 0
    %1858 = vmatpush1.bf16.msra.mxu0 %v1841
    %1859 = vmatprep.subr.bf16.mxu0 0
    %1860 = vmatpush2.bf16.msra.mxu0 0
    %1861 = vmatprep.subr.bf16.mxu0 0
    %1862 = vmatpush2.bf16.msra.mxu0 0
    %1863 = vmatprep.subr.bf16.mxu0 0
    %1864 = vmatpush2.bf16.msra.mxu0 0
    %1865 = vmatprep.subr.bf16.mxu0 0
    %1866 = vmatpush2.bf16.msra.mxu0 0
    %1867 = vmatprep.subr.bf16.mxu0 0
    %1868 = vmatpush2.bf16.msra.mxu0 0
    %1869 = vmatprep.subr.bf16.mxu0 0
    %1870 = vmatpush2.bf16.msra.mxu0 0
    %1871 = vmatprep.subr.bf16.mxu0 0
    %1872 = vmatpush2.bf16.msra.mxu0 0
    %1873 = vmatprep.subr.bf16.mxu0 0
    %1874 = vmatpush2.bf16.msra.mxu0 0
    %1875 = vmatprep.mubr.bf16.mxu0 0
    %1876 = vmatmul.mubr.bf16.gmra.mxu0 %v1838
    %v1877 = vpop.f32.mrf.mxu0
    %v1878 = vadd.f32 0.0, %v1877
    %v1879 = vpop.f32.mrf.mxu0
    %v1880 = vpop.f32.mrf.mxu0
    %v1881 = vpop.f32.mrf.mxu0
    %1882 = vdwg.mxu0
    %v1884 = vsel %vm1741, %v1788, 0
    %v1887 = vsel %vm1793, %v1554, 0
    %1889 = vmatprep.subr.bf16.mxu0 0
    %1890 = vmatpush1.bf16.msra.mxu0 0
    %1891 = vmatprep.subr.bf16.mxu0 0
    %1892 = vmatpush1.bf16.msra.mxu0 0
    %1893 = vmatprep.subr.bf16.mxu0 0
    %1894 = vmatpush1.bf16.msra.mxu0 0
    %1895 = vmatprep.subr.bf16.mxu0 0
    %1896 = vmatpush1.bf16.msra.mxu0 0
    %1897 = vmatprep.subr.bf16.mxu0 0
    %1898 = vmatpush1.bf16.msra.mxu0 0
    %1899 = vmatprep.subr.bf16.mxu0 0
    %1900 = vmatpush1.bf16.msra.mxu0 0
    %1901 = vmatprep.subr.bf16.mxu0 0
    %1902 = vmatpush1.bf16.msra.mxu0 0
    %1903 = vmatprep.subr.bf16.mxu0 0
    %1904 = vmatpush1.bf16.msra.mxu0 %v1887
    %1905 = vmatprep.subr.bf16.mxu0 0
    %1906 = vmatpush2.bf16.msra.mxu0 0
    %1907 = vmatprep.subr.bf16.mxu0 0
    %1908 = vmatpush2.bf16.msra.mxu0 0
    %1909 = vmatprep.subr.bf16.mxu0 0
    %1910 = vmatpush2.bf16.msra.mxu0 0
    %1911 = vmatprep.subr.bf16.mxu0 0
    %1912 = vmatpush2.bf16.msra.mxu0 0
    %1913 = vmatprep.subr.bf16.mxu0 0
    %1914 = vmatpush2.bf16.msra.mxu0 0
    %1915 = vmatprep.subr.bf16.mxu0 0
    %1916 = vmatpush2.bf16.msra.mxu0 0
    %1917 = vmatprep.subr.bf16.mxu0 0
    %1918 = vmatpush2.bf16.msra.mxu0 0
    %1919 = vmatprep.subr.bf16.mxu0 0
    %1920 = vmatpush2.bf16.msra.mxu0 0
    %1921 = vmatprep.mubr.bf16.mxu0 0
    %1922 = vmatmul.mubr.bf16.gmra.mxu0 %v1884
    %v1923 = vpop.f32.mrf.mxu0
    %v1924 = vadd.f32 0.0, %v1923
    %v1925 = vpop.f32.mrf.mxu0
    %v1926 = vpop.f32.mrf.mxu0
    %v1927 = vpop.f32.mrf.mxu0
    %1928 = vdwg.mxu0
    %v1930 = vsel %vm1741, %v1789, 0
    %v1933 = vsel %vm1793, %v1555, 0
    %1935 = vmatprep.subr.bf16.mxu0 0
    %1936 = vmatpush1.bf16.msra.mxu0 0
    %1937 = vmatprep.subr.bf16.mxu0 0
    %1938 = vmatpush1.bf16.msra.mxu0 0
    %1939 = vmatprep.subr.bf16.mxu0 0
    %1940 = vmatpush1.bf16.msra.mxu0 0
    %1941 = vmatprep.subr.bf16.mxu0 0
    %1942 = vmatpush1.bf16.msra.mxu0 0
    %1943 = vmatprep.subr.bf16.mxu0 0
    %1944 = vmatpush1.bf16.msra.mxu0 0
    %1945 = vmatprep.subr.bf16.mxu0 0
    %1946 = vmatpush1.bf16.msra.mxu0 0
    %1947 = vmatprep.subr.bf16.mxu0 0
    %1948 = vmatpush1.bf16.msra.mxu0 0
    %1949 = vmatprep.subr.bf16.mxu0 0
    %1950 = vmatpush1.bf16.msra.mxu0 %v1933
    %1951 = vmatprep.subr.bf16.mxu0 0
    %1952 = vmatpush2.bf16.msra.mxu0 0
    %1953 = vmatprep.subr.bf16.mxu0 0
    %1954 = vmatpush2.bf16.msra.mxu0 0
    %1955 = vmatprep.subr.bf16.mxu0 0
    %1956 = vmatpush2.bf16.msra.mxu0 0
    %1957 = vmatprep.subr.bf16.mxu0 0
    %1958 = vmatpush2.bf16.msra.mxu0 0
    %1959 = vmatprep.subr.bf16.mxu0 0
    %1960 = vmatpush2.bf16.msra.mxu0 0
    %1961 = vmatprep.subr.bf16.mxu0 0
    %1962 = vmatpush2.bf16.msra.mxu0 0
    %1963 = vmatprep.subr.bf16.mxu0 0
    %1964 = vmatpush2.bf16.msra.mxu0 0
    %1965 = vmatprep.subr.bf16.mxu0 0
    %1966 = vmatpush2.bf16.msra.mxu0 0
    %1967 = vmatprep.mubr.bf16.mxu0 0
    %1968 = vmatmul.mubr.bf16.gmra.mxu0 %v1930
    %v1969 = vpop.f32.mrf.mxu0
    %v1970 = vadd.f32 0.0, %v1969
    %v1971 = vpop.f32.mrf.mxu0
    %v1972 = vpop.f32.mrf.mxu0
    %v1973 = vpop.f32.mrf.mxu0
    %1974 = vdwg.mxu0
    %v1975 = vpack.c.bf16 %v1832, %v1832
    %v1976 = vpack.c.bf16 %v1878, %v1878
    %v1977 = vpack.c.bf16 %v1924, %v1924
    %v1978 = vpack.c.bf16 %v1970, %v1970
    %v1979 = vld [vmem:[%s8] sm:$0xf]
    %v1980 = vld [vmem:[%s8 + $0x4] sm:$0xf]
    %v1981 = vld [vmem:[%s8 + $0x8] sm:$0xf]
    %v1982 = vld [vmem:[%s8 + $0xc] sm:$0xf]
    %v1983 = vld [vmem:[%s8 + $0x10] sm:$0xf]
    %v1984 = vld [vmem:[%s8 + $0x14] sm:$0xf]
    %v1985 = vld [vmem:[%s8 + $0x18] sm:$0xf]
    %v1986 = vld [vmem:[%s8 + $0x1c] sm:$0xf]
    %v1987 = vld [vmem:[%s8 + $0x20] sm:$0xf]
    %v1988 = vld [vmem:[%s8 + $0x24] sm:$0xf]
    %v1989 = vld [vmem:[%s8 + $0x28] sm:$0xf]
    %v1990 = vld [vmem:[%s8 + $0x2c] sm:$0xf]
    %v1991 = vld [vmem:[%s8 + $0x30] sm:$0xf]
    %v1992 = vld [vmem:[%s8 + $0x34] sm:$0xf]
    %v1993 = vld [vmem:[%s8 + $0x38] sm:$0xf]
    %v1994 = vld [vmem:[%s8 + $0x3c] sm:$0xf]
    %v1999 = vunpack.c.l.b16 %v1979
    %v2000 = vunpack.c.l.b16 %v1980
    %v2001 = vunpack.c.l.b16 %v1981
    %v2002 = vunpack.c.l.b16 %v1982
    %v2003 = vpack.c.b16 %v2000, %v1999
    %v2004 = vpack.c.b16 %v2002, %v2001
    %v2008 = vsel %vm1556, %v1975, 0
    %2010 = vmatprep.subr.bf16.mxu0 0
    %2011 = vmatpush1.bf16.msra.mxu0 0
    %2012 = vmatprep.subr.bf16.mxu0 0
    %2013 = vmatpush1.bf16.msra.mxu0 0
    %2014 = vmatprep.subr.bf16.mxu0 0
    %2015 = vmatpush1.bf16.msra.mxu0 0
    %2016 = vmatprep.subr.bf16.mxu0 0
    %2017 = vmatpush1.bf16.msra.mxu0 0
    %2018 = vmatprep.subr.bf16.mxu0 0
    %2019 = vmatpush1.bf16.msra.mxu0 0
    %2020 = vmatprep.subr.bf16.mxu0 0
    %2021 = vmatpush1.bf16.msra.mxu0 0
    %2022 = vmatprep.subr.bf16.mxu0 0
    %2023 = vmatpush1.bf16.msra.mxu0 %v2004
    %2024 = vmatprep.subr.bf16.mxu0 0
    %2025 = vmatpush1.bf16.msra.mxu0 %v2003
    %2026 = vmatprep.subr.bf16.mxu0 0
    %2027 = vmatpush2.bf16.msra.mxu0 0
    %2028 = vmatprep.subr.bf16.mxu0 0
    %2029 = vmatpush2.bf16.msra.mxu0 0
    %2030 = vmatprep.subr.bf16.mxu0 0
    %2031 = vmatpush2.bf16.msra.mxu0 0
    %2032 = vmatprep.subr.bf16.mxu0 0
    %2033 = vmatpush2.bf16.msra.mxu0 0
    %2034 = vmatprep.subr.bf16.mxu0 0
    %2035 = vmatpush2.bf16.msra.mxu0 0
    %2036 = vmatprep.subr.bf16.mxu0 0
    %2037 = vmatpush2.bf16.msra.mxu0 0
    %2038 = vmatprep.subr.bf16.mxu0 0
    %2039 = vmatpush2.bf16.msra.mxu0 0
    %2040 = vmatprep.subr.bf16.mxu0 0
    %2041 = vmatpush2.bf16.msra.mxu0 0
    %2042 = vmatprep.mubr.bf16.mxu0 0
    %2043 = vmatmul.mubr.bf16.gmra.mxu0 %v2008
    %v2044 = vpop.f32.mrf.mxu0
    %v2045 = vadd.f32 0.0, %v2044
    %v2046 = vpop.f32.mrf.mxu0
    %v2047 = vpop.f32.mrf.mxu0
    %v2048 = vpop.f32.mrf.mxu0
    %2049 = vdwg.mxu0
    %v2054 = vunpack.c.l.b16 %v1983
    %v2055 = vunpack.c.l.b16 %v1984
    %v2056 = vunpack.c.l.b16 %v1985
    %v2057 = vunpack.c.l.b16 %v1986
    %v2058 = vpack.c.b16 %v2055, %v2054
    %v2059 = vpack.c.b16 %v2057, %v2056
    %v2063 = vsel %vm1556, %v1976, 0
    %2065 = vmatprep.subr.bf16.mxu0 0
    %2066 = vmatpush1.bf16.msra.mxu0 0
    %2067 = vmatprep.subr.bf16.mxu0 0
    %2068 = vmatpush1.bf16.msra.mxu0 0
    %2069 = vmatprep.subr.bf16.mxu0 0
    %2070 = vmatpush1.bf16.msra.mxu0 0
    %2071 = vmatprep.subr.bf16.mxu0 0
    %2072 = vmatpush1.bf16.msra.mxu0 0
    %2073 = vmatprep.subr.bf16.mxu0 0
    %2074 = vmatpush1.bf16.msra.mxu0 0
    %2075 = vmatprep.subr.bf16.mxu0 0
    %2076 = vmatpush1.bf16.msra.mxu0 0
    %2077 = vmatprep.subr.bf16.mxu0 0
    %2078 = vmatpush1.bf16.msra.mxu0 %v2059
    %2079 = vmatprep.subr.bf16.mxu0 0
    %2080 = vmatpush1.bf16.msra.mxu0 %v2058
    %2081 = vmatprep.subr.bf16.mxu0 0
    %2082 = vmatpush2.bf16.msra.mxu0 0
    %2083 = vmatprep.subr.bf16.mxu0 0
    %2084 = vmatpush2.bf16.msra.mxu0 0
    %2085 = vmatprep.subr.bf16.mxu0 0
    %2086 = vmatpush2.bf16.msra.mxu0 0
    %2087 = vmatprep.subr.bf16.mxu0 0
    %2088 = vmatpush2.bf16.msra.mxu0 0
    %2089 = vmatprep.subr.bf16.mxu0 0
    %2090 = vmatpush2.bf16.msra.mxu0 0
    %2091 = vmatprep.subr.bf16.mxu0 0
    %2092 = vmatpush2.bf16.msra.mxu0 0
    %2093 = vmatprep.subr.bf16.mxu0 0
    %2094 = vmatpush2.bf16.msra.mxu0 0
    %2095 = vmatprep.subr.bf16.mxu0 0
    %2096 = vmatpush2.bf16.msra.mxu0 0
    %2097 = vmatprep.mubr.bf16.mxu0 0
    %2098 = vmatmul.mubr.bf16.gmra.mxu0 %v2063
    %v2099 = vpop.f32.mrf.mxu0
    %v2100 = vadd.f32 0.0, %v2099
    %v2101 = vpop.f32.mrf.mxu0
    %v2102 = vpop.f32.mrf.mxu0
    %v2103 = vpop.f32.mrf.mxu0
    %2104 = vdwg.mxu0
    %v2109 = vunpack.c.l.b16 %v1987
    %v2110 = vunpack.c.l.b16 %v1988
    %v2111 = vunpack.c.l.b16 %v1989
    %v2112 = vunpack.c.l.b16 %v1990
    %v2113 = vpack.c.b16 %v2110, %v2109
    %v2114 = vpack.c.b16 %v2112, %v2111
    %v2118 = vsel %vm1556, %v1977, 0
    %2120 = vmatprep.subr.bf16.mxu0 0
    %2121 = vmatpush1.bf16.msra.mxu0 0
    %2122 = vmatprep.subr.bf16.mxu0 0
    %2123 = vmatpush1.bf16.msra.mxu0 0
    %2124 = vmatprep.subr.bf16.mxu0 0
    %2125 = vmatpush1.bf16.msra.mxu0 0
    %2126 = vmatprep.subr.bf16.mxu0 0
    %2127 = vmatpush1.bf16.msra.mxu0 0
    %2128 = vmatprep.subr.bf16.mxu0 0
    %2129 = vmatpush1.bf16.msra.mxu0 0
    %2130 = vmatprep.subr.bf16.mxu0 0
    %2131 = vmatpush1.bf16.msra.mxu0 0
    %2132 = vmatprep.subr.bf16.mxu0 0
    %2133 = vmatpush1.bf16.msra.mxu0 %v2114
    %2134 = vmatprep.subr.bf16.mxu0 0
    %2135 = vmatpush1.bf16.msra.mxu0 %v2113
    %2136 = vmatprep.subr.bf16.mxu0 0
    %2137 = vmatpush2.bf16.msra.mxu0 0
    %2138 = vmatprep.subr.bf16.mxu0 0
    %2139 = vmatpush2.bf16.msra.mxu0 0
    %2140 = vmatprep.subr.bf16.mxu0 0
    %2141 = vmatpush2.bf16.msra.mxu0 0
    %2142 = vmatprep.subr.bf16.mxu0 0
    %2143 = vmatpush2.bf16.msra.mxu0 0
    %2144 = vmatprep.subr.bf16.mxu0 0
    %2145 = vmatpush2.bf16.msra.mxu0 0
    %2146 = vmatprep.subr.bf16.mxu0 0
    %2147 = vmatpush2.bf16.msra.mxu0 0
    %2148 = vmatprep.subr.bf16.mxu0 0
    %2149 = vmatpush2.bf16.msra.mxu0 0
    %2150 = vmatprep.subr.bf16.mxu0 0
    %2151 = vmatpush2.bf16.msra.mxu0 0
    %2152 = vmatprep.mubr.bf16.mxu0 0
    %2153 = vmatmul.mubr.bf16.gmra.mxu0 %v2118
    %v2154 = vpop.f32.mrf.mxu0
    %v2155 = vadd.f32 0.0, %v2154
    %v2156 = vpop.f32.mrf.mxu0
    %v2157 = vpop.f32.mrf.mxu0
    %v2158 = vpop.f32.mrf.mxu0
    %2159 = vdwg.mxu0
    %v2164 = vunpack.c.l.b16 %v1991
    %v2165 = vunpack.c.l.b16 %v1992
    %v2166 = vunpack.c.l.b16 %v1993
    %v2167 = vunpack.c.l.b16 %v1994
    %v2168 = vpack.c.b16 %v2165, %v2164
    %v2169 = vpack.c.b16 %v2167, %v2166
    %v2173 = vsel %vm1556, %v1978, 0
    %2175 = vmatprep.subr.bf16.mxu0 0
    %2176 = vmatpush1.bf16.msra.mxu0 0
    %2177 = vmatprep.subr.bf16.mxu0 0
    %2178 = vmatpush1.bf16.msra.mxu0 0
    %2179 = vmatprep.subr.bf16.mxu0 0
    %2180 = vmatpush1.bf16.msra.mxu0 0
    %2181 = vmatprep.subr.bf16.mxu0 0
    %2182 = vmatpush1.bf16.msra.mxu0 0
    %2183 = vmatprep.subr.bf16.mxu0 0
    %2184 = vmatpush1.bf16.msra.mxu0 0
    %2185 = vmatprep.subr.bf16.mxu0 0
    %2186 = vmatpush1.bf16.msra.mxu0 0
    %2187 = vmatprep.subr.bf16.mxu0 0
    %2188 = vmatpush1.bf16.msra.mxu0 %v2169
    %2189 = vmatprep.subr.bf16.mxu0 0
    %2190 = vmatpush1.bf16.msra.mxu0 %v2168
    %2191 = vmatprep.subr.bf16.mxu0 0
    %2192 = vmatpush2.bf16.msra.mxu0 0
    %2193 = vmatprep.subr.bf16.mxu0 0
    %2194 = vmatpush2.bf16.msra.mxu0 0
    %2195 = vmatprep.subr.bf16.mxu0 0
    %2196 = vmatpush2.bf16.msra.mxu0 0
    %2197 = vmatprep.subr.bf16.mxu0 0
    %2198 = vmatpush2.bf16.msra.mxu0 0
    %2199 = vmatprep.subr.bf16.mxu0 0
    %2200 = vmatpush2.bf16.msra.mxu0 0
    %2201 = vmatprep.subr.bf16.mxu0 0
    %2202 = vmatpush2.bf16.msra.mxu0 0
    %2203 = vmatprep.subr.bf16.mxu0 0
    %2204 = vmatpush2.bf16.msra.mxu0 0
    %2205 = vmatprep.subr.bf16.mxu0 0
    %2206 = vmatpush2.bf16.msra.mxu0 0
    %2207 = vmatprep.mubr.bf16.mxu0 0
    %2208 = vmatmul.mubr.bf16.gmra.mxu0 %v2173
    %v2209 = vpop.f32.mrf.mxu0
    %v2210 = vadd.f32 0.0, %v2209
    %v2211 = vpop.f32.mrf.mxu0
    %v2212 = vpop.f32.mrf.mxu0
    %v2213 = vpop.f32.mrf.mxu0
    %2214 = vdwg.mxu0
    %v2215 = vadd.f32 %v2045, %v2100
    %v2216 = vadd.f32 %v2215, %v2155
    %v2217 = vadd.f32 %v2216, %v2210
    %v2218 = vld [vmem:[%s9] sm:$0x1]
    %v2220 = vlaneseq
    %v2221 = vshrl.u32 %v2220, 7
    %v2222 = vsub.s32 0, %v2221
    %v2223 = vrot.slane %v2218, %v2222
    %v2225 = vadd.f32 %v2217, %v2223
    %v2226 = vadd.f32 %v210, %v2225
    %v2227 = vld [vmem:[%s10] sm:$0x1]
    %v2228 = vld [vmem:[%s11] sm:$0x1]
    %2229 = vadd.xlane.f32.xlu0 %v2226
    %v2230 = vpop.xlane.xlu0 %2229
    %v2231 = vmul.f32 %v2230, %v187
    %v2232 = vsub.f32 %v2226, %v2231
    %v2233 = vmul.f32 %v2232, %v2232
    %2234 = vadd.xlane.f32.xlu0 %v2233
    %v2235 = vpop.xlane.xlu0 %2234
    %v2236 = vmul.f32 %v2235, %v187
    %v2237 = vadd.f32 %v2236, 1e-12
    %v2238 = vrsqrt.pop %v2237
    %v2239 = vmul.f32 %v2232, %v2238
    %v2241 = vlaneseq
    %v2242 = vshrl.u32 %v2241, 7
    %v2243 = vsub.s32 0, %v2242
    %v2244 = vrot.slane %v2227, %v2243
    %v2246 = vmul.f32 %v2239, %v2244
    %v2248 = vlaneseq
    %v2249 = vshrl.u32 %v2248, 7
    %v2250 = vsub.s32 0, %v2249
    %v2251 = vrot.slane %v2228, %v2250
    %v2253 = vadd.f32 %v2246, %v2251
    %v2254 = vpack.c.bf16 %v2253, %v2253
    %v2255 = vld [vmem:[%s12] sm:$0xff]
    %v2256 = vld [vmem:[%s12 + $0x8] sm:$0xff]
    %v2257 = vld [vmem:[%s12 + $0x10] sm:$0xff]
    %v2258 = vld [vmem:[%s12 + $0x18] sm:$0xff]
    %v2259 = vld [vmem:[%s12 + $0x20] sm:$0xff]
    %v2260 = vld [vmem:[%s12 + $0x28] sm:$0xff]
    %v2261 = vld [vmem:[%s12 + $0x30] sm:$0xff]
    %v2262 = vld [vmem:[%s12 + $0x38] sm:$0xff]
    %v2263 = vld [vmem:[%s12 + $0x40] sm:$0xff]
    %v2264 = vld [vmem:[%s12 + $0x48] sm:$0xff]
    %v2265 = vld [vmem:[%s12 + $0x50] sm:$0xff]
    %v2266 = vld [vmem:[%s12 + $0x58] sm:$0xff]
    %v2267 = vld [vmem:[%s12 + $0x60] sm:$0xff]
    %v2268 = vld [vmem:[%s12 + $0x68] sm:$0xff]
    %v2269 = vld [vmem:[%s12 + $0x70] sm:$0xff]
    %v2270 = vld [vmem:[%s12 + $0x78] sm:$0xff]
    %v2271 = vld [vmem:[%s13] sm:$0x3]
    %v2273 = vlaneseq
    %v2274 = vshrl.u32 %v2273, 7
    %v2275 = vsub.s32 0, %v2274
    %v2276 = vrot.slane %v2271, %v2275
    %v2277 = vlaneseq
    %v2278 = vshrl.u32 %v2277, 7
    %v2279 = vsub.s32 1, %v2278
    %v2280 = vrot.slane %v2271, %v2279
    %v2299 = vunpack.c.l.b16 %v2255
    %v2300 = vunpack.c.h.b16 %v2255
    %v2301 = vunpack.c.l.b16 %v2256
    %v2302 = vunpack.c.h.b16 %v2256
    %v2303 = vunpack.c.l.b16 %v2257
    %v2304 = vunpack.c.h.b16 %v2257
    %v2305 = vunpack.c.l.b16 %v2258
    %v2306 = vunpack.c.h.b16 %v2258
    %v2307 = vunpack.c.l.b16 %v2259
    %v2308 = vunpack.c.h.b16 %v2259
    %v2309 = vunpack.c.l.b16 %v2260
    %v2310 = vunpack.c.h.b16 %v2260
    %v2311 = vunpack.c.l.b16 %v2261
    %v2312 = vunpack.c.h.b16 %v2261
    %v2313 = vunpack.c.l.b16 %v2262
    %v2314 = vunpack.c.h.b16 %v2262
    %v2315 = vunpack.c.l.b16 %v2263
    %v2316 = vunpack.c.h.b16 %v2263
    %v2317 = vunpack.c.l.b16 %v2264
    %v2318 = vunpack.c.h.b16 %v2264
    %v2319 = vunpack.c.l.b16 %v2265
    %v2320 = vunpack.c.h.b16 %v2265
    %v2321 = vunpack.c.l.b16 %v2266
    %v2322 = vunpack.c.h.b16 %v2266
    %v2323 = vunpack.c.l.b16 %v2267
    %v2324 = vunpack.c.h.b16 %v2267
    %v2325 = vunpack.c.l.b16 %v2268
    %v2326 = vunpack.c.h.b16 %v2268
    %v2327 = vunpack.c.l.b16 %v2269
    %v2328 = vunpack.c.h.b16 %v2269
    %v2329 = vunpack.c.l.b16 %v2270
    %v2330 = vunpack.c.h.b16 %v2270
    %v2331 = vpack.c.b16 %v2301, %v2299
    %v2332 = vpack.c.b16 %v2302, %v2300
    %v2333 = vpack.c.b16 %v2305, %v2303
    %v2334 = vpack.c.b16 %v2306, %v2304
    %v2335 = vpack.c.b16 %v2309, %v2307
    %v2336 = vpack.c.b16 %v2310, %v2308
    %v2337 = vpack.c.b16 %v2313, %v2311
    %v2338 = vpack.c.b16 %v2314, %v2312
    %v2339 = vpack.c.b16 %v2317, %v2315
    %v2340 = vpack.c.b16 %v2318, %v2316
    %v2341 = vpack.c.b16 %v2321, %v2319
    %v2342 = vpack.c.b16 %v2322, %v2320
    %v2343 = vpack.c.b16 %v2325, %v2323
    %v2344 = vpack.c.b16 %v2326, %v2324
    %v2345 = vpack.c.b16 %v2329, %v2327
    %v2346 = vpack.c.b16 %v2330, %v2328
    %2363 = vmatprep.subr.bf16.mxu0 %v2346
    %2364 = vmatpush1.bf16.msra.mxu0 %v2345
    %2365 = vmatprep.subr.bf16.mxu0 %v2344
    %2366 = vmatpush1.bf16.msra.mxu0 %v2343
    %2367 = vmatprep.subr.bf16.mxu0 %v2342
    %2368 = vmatpush1.bf16.msra.mxu0 %v2341
    %2369 = vmatprep.subr.bf16.mxu0 %v2340
    %2370 = vmatpush1.bf16.msra.mxu0 %v2339
    %2371 = vmatprep.subr.bf16.mxu0 %v2338
    %2372 = vmatpush1.bf16.msra.mxu0 %v2337
    %2373 = vmatprep.subr.bf16.mxu0 %v2336
    %2374 = vmatpush1.bf16.msra.mxu0 %v2335
    %2375 = vmatprep.subr.bf16.mxu0 %v2334
    %2376 = vmatpush1.bf16.msra.mxu0 %v2333
    %2377 = vmatprep.subr.bf16.mxu0 %v2332
    %2378 = vmatpush1.bf16.msra.mxu0 %v2331
    %2379 = vmatprep.subr.bf16.mxu0 0
    %2380 = vmatpush2.bf16.msra.mxu0 0
    %2381 = vmatprep.subr.bf16.mxu0 0
    %2382 = vmatpush2.bf16.msra.mxu0 0
    %2383 = vmatprep.subr.bf16.mxu0 0
    %2384 = vmatpush2.bf16.msra.mxu0 0
    %2385 = vmatprep.subr.bf16.mxu0 0
    %2386 = vmatpush2.bf16.msra.mxu0 0
    %2387 = vmatprep.subr.bf16.mxu0 0
    %2388 = vmatpush2.bf16.msra.mxu0 0
    %2389 = vmatprep.subr.bf16.mxu0 0
    %2390 = vmatpush2.bf16.msra.mxu0 0
    %2391 = vmatprep.subr.bf16.mxu0 0
    %2392 = vmatpush2.bf16.msra.mxu0 0
    %2393 = vmatprep.subr.bf16.mxu0 0
    %2394 = vmatpush2.bf16.msra.mxu0 0
    %2395 = vmatprep.mubr.bf16.mxu0 0
    %2396 = vmatmul.mubr.bf16.gmra.mxu0 %v2254
    %v2397 = vpop.f32.mrf.mxu0
    %v2398 = vadd.f32 %v2276, %v2397
    %v2399 = vpop.f32.mrf.mxu0
    %v2400 = vadd.f32 %v2280, %v2399
    %v2401 = vpop.f32.mrf.mxu0
    %v2402 = vpop.f32.mrf.mxu0
    %2403 = vdwg.mxu0
    %v2404 = vmul.f32 %v2398, 0.5
    %v2405 = vmul.f32 %v2400, 0.5
    %v2406 = vmul.f32 %v2398, 0.044715
    %v2407 = vmul.f32 %v2400, 0.044715
    %v2408 = vmul.f32 %v2406, %v2398
    %v2409 = vmul.f32 %v2407, %v2400
    %v2410 = vmul.f32 %v2408, %v2398
    %v2411 = vmul.f32 %v2409, %v2400
    %v2412 = vadd.f32 %v2398, %v2410
    %v2413 = vadd.f32 %v2400, %v2411
    %v2414 = vmul.f32 %v2412, 0.7978846
    %v2415 = vmul.f32 %v2413, 0.7978846
    %v2416 = vtanh.pop %v2414
    %v2417 = vtanh.pop %v2415
    %v2418 = vadd.f32 %v2416, 1.0
    %v2419 = vadd.f32 %v2417, 1.0
    %v2420 = vmul.f32 %v2404, %v2418
    %v2421 = vmul.f32 %v2405, %v2419
    %v2422 = vpack.c.bf16 %v2420, %v2420
    %v2423 = vpack.c.bf16 %v2421, %v2421
    %v2424 = vld [vmem:[%s14] sm:$0xf]
    %v2425 = vld [vmem:[%s14 + $0x4] sm:$0xf]
    %v2426 = vld [vmem:[%s14 + $0x8] sm:$0xf]
    %v2427 = vld [vmem:[%s14 + $0xc] sm:$0xf]
    %v2428 = vld [vmem:[%s14 + $0x10] sm:$0xf]
    %v2429 = vld [vmem:[%s14 + $0x14] sm:$0xf]
    %v2430 = vld [vmem:[%s14 + $0x18] sm:$0xf]
    %v2431 = vld [vmem:[%s14 + $0x1c] sm:$0xf]
    %v2432 = vld [vmem:[%s14 + $0x20] sm:$0xf]
    %v2433 = vld [vmem:[%s14 + $0x24] sm:$0xf]
    %v2434 = vld [vmem:[%s14 + $0x28] sm:$0xf]
    %v2435 = vld [vmem:[%s14 + $0x2c] sm:$0xf]
    %v2436 = vld [vmem:[%s14 + $0x30] sm:$0xf]
    %v2437 = vld [vmem:[%s14 + $0x34] sm:$0xf]
    %v2438 = vld [vmem:[%s14 + $0x38] sm:$0xf]
    %v2439 = vld [vmem:[%s14 + $0x3c] sm:$0xf]
    %v2440 = vld [vmem:[%s14 + $0x40] sm:$0xf]
    %v2441 = vld [vmem:[%s14 + $0x44] sm:$0xf]
    %v2442 = vld [vmem:[%s14 + $0x48] sm:$0xf]
    %v2443 = vld [vmem:[%s14 + $0x4c] sm:$0xf]
    %v2444 = vld [vmem:[%s14 + $0x50] sm:$0xf]
    %v2445 = vld [vmem:[%s14 + $0x54] sm:$0xf]
    %v2446 = vld [vmem:[%s14 + $0x58] sm:$0xf]
    %v2447 = vld [vmem:[%s14 + $0x5c] sm:$0xf]
    %v2448 = vld [vmem:[%s14 + $0x60] sm:$0xf]
    %v2449 = vld [vmem:[%s14 + $0x64] sm:$0xf]
    %v2450 = vld [vmem:[%s14 + $0x68] sm:$0xf]
    %v2451 = vld [vmem:[%s14 + $0x6c] sm:$0xf]
    %v2452 = vld [vmem:[%s14 + $0x70] sm:$0xf]
    %v2453 = vld [vmem:[%s14 + $0x74] sm:$0xf]
    %v2454 = vld [vmem:[%s14 + $0x78] sm:$0xf]
    %v2455 = vld [vmem:[%s14 + $0x7c] sm:$0xf]
    %v2456 = vld [vmem:[%s15] sm:$0x1]
    %v2458 = vlaneseq
    %v2459 = vshrl.u32 %v2458, 7
    %v2460 = vsub.s32 0, %v2459
    %v2461 = vrot.slane %v2456, %v2460
    %v2495 = vunpack.c.l.b16 %v2424
    %v2496 = vunpack.c.l.b16 %v2425
    %v2497 = vunpack.c.l.b16 %v2426
    %v2498 = vunpack.c.l.b16 %v2427
    %v2499 = vunpack.c.l.b16 %v2428
    %v2500 = vunpack.c.l.b16 %v2429
    %v2501 = vunpack.c.l.b16 %v2430
    %v2502 = vunpack.c.l.b16 %v2431
    %v2503 = vunpack.c.l.b16 %v2432
    %v2504 = vunpack.c.l.b16 %v2433
    %v2505 = vunpack.c.l.b16 %v2434
    %v2506 = vunpack.c.l.b16 %v2435
    %v2507 = vunpack.c.l.b16 %v2436
    %v2508 = vunpack.c.l.b16 %v2437
    %v2509 = vunpack.c.l.b16 %v2438
    %v2510 = vunpack.c.l.b16 %v2439
    %v2511 = vunpack.c.l.b16 %v2440
    %v2512 = vunpack.c.l.b16 %v2441
    %v2513 = vunpack.c.l.b16 %v2442
    %v2514 = vunpack.c.l.b16 %v2443
    %v2515 = vunpack.c.l.b16 %v2444
    %v2516 = vunpack.c.l.b16 %v2445
    %v2517 = vunpack.c.l.b16 %v2446
    %v2518 = vunpack.c.l.b16 %v2447
    %v2519 = vunpack.c.l.b16 %v2448
    %v2520 = vunpack.c.l.b16 %v2449
    %v2521 = vunpack.c.l.b16 %v2450
    %v2522 = vunpack.c.l.b16 %v2451
    %v2523 = vunpack.c.l.b16 %v2452
    %v2524 = vunpack.c.l.b16 %v2453
    %v2525 = vunpack.c.l.b16 %v2454
    %v2526 = vunpack.c.l.b16 %v2455
    %v2527 = vpack.c.b16 %v2496, %v2495
    %v2528 = vpack.c.b16 %v2498, %v2497
    %v2529 = vpack.c.b16 %v2500, %v2499
    %v2530 = vpack.c.b16 %v2502, %v2501
    %v2531 = vpack.c.b16 %v2504, %v2503
    %v2532 = vpack.c.b16 %v2506, %v2505
    %v2533 = vpack.c.b16 %v2508, %v2507
    %v2534 = vpack.c.b16 %v2510, %v2509
    %v2535 = vpack.c.b16 %v2512, %v2511
    %v2536 = vpack.c.b16 %v2514, %v2513
    %v2537 = vpack.c.b16 %v2516, %v2515
    %v2538 = vpack.c.b16 %v2518, %v2517
    %v2539 = vpack.c.b16 %v2520, %v2519
    %v2540 = vpack.c.b16 %v2522, %v2521
    %v2541 = vpack.c.b16 %v2524, %v2523
    %v2542 = vpack.c.b16 %v2526, %v2525
    %2559 = vmatprep.subr.bf16.mxu0 0
    %2560 = vmatpush1.bf16.msra.mxu0 %v2534
    %2561 = vmatprep.subr.bf16.mxu0 0
    %2562 = vmatpush1.bf16.msra.mxu0 %v2533
    %2563 = vmatprep.subr.bf16.mxu0 0
    %2564 = vmatpush1.bf16.msra.mxu0 %v2532
    %2565 = vmatprep.subr.bf16.mxu0 0
    %2566 = vmatpush1.bf16.msra.mxu0 %v2531
    %2567 = vmatprep.subr.bf16.mxu0 0
    %2568 = vmatpush1.bf16.msra.mxu0 %v2530
    %2569 = vmatprep.subr.bf16.mxu0 0
    %2570 = vmatpush1.bf16.msra.mxu0 %v2529
    %2571 = vmatprep.subr.bf16.mxu0 0
    %2572 = vmatpush1.bf16.msra.mxu0 %v2528
    %2573 = vmatprep.subr.bf16.mxu0 0
    %2574 = vmatpush1.bf16.msra.mxu0 %v2527
    %2575 = vmatprep.subr.bf16.mxu0 0
    %2576 = vmatpush2.bf16.msra.mxu0 %v2542
    %2577 = vmatprep.subr.bf16.mxu0 0
    %2578 = vmatpush2.bf16.msra.mxu0 %v2541
    %2579 = vmatprep.subr.bf16.mxu0 0
    %2580 = vmatpush2.bf16.msra.mxu0 %v2540
    %2581 = vmatprep.subr.bf16.mxu0 0
    %2582 = vmatpush2.bf16.msra.mxu0 %v2539
    %2583 = vmatprep.subr.bf16.mxu0 0
    %2584 = vmatpush2.bf16.msra.mxu0 %v2538
    %2585 = vmatprep.subr.bf16.mxu0 0
    %2586 = vmatpush2.bf16.msra.mxu0 %v2537
    %2587 = vmatprep.subr.bf16.mxu0 0
    %2588 = vmatpush2.bf16.msra.mxu0 %v2536
    %2589 = vmatprep.subr.bf16.mxu0 0
    %2590 = vmatpush2.bf16.msra.mxu0 %v2535
    %2591 = vmatprep.mubr.bf16.mxu0 %v2423
    %2592 = vmatmul.mubr.bf16.gmra.mxu0 %v2422
    %v2593 = vpop.f32.mrf.mxu0
    %v2594 = vadd.f32 %v2461, %v2593
    %v2595 = vpop.f32.mrf.mxu0
    %v2596 = vpop.f32.mrf.mxu0
    %v2597 = vpop.f32.mrf.mxu0
    %2598 = vdwg.mxu0
    %v2599 = vadd.f32 %v2253, %v2594
    %v2600 = vld [vmem:[%s16] sm:$0x1]
    %v2601 = vld [vmem:[%s17] sm:$0x1]
    %2602 = vadd.xlane.f32.xlu0 %v2599
    %v2603 = vpop.xlane.xlu0 %2602
    %v2604 = vmul.f32 %v2603, %v187
    %v2605 = vsub.f32 %v2599, %v2604
    %v2606 = vmul.f32 %v2605, %v2605
    %2607 = vadd.xlane.f32.xlu0 %v2606
    %v2608 = vpop.xlane.xlu0 %2607
    %v2609 = vmul.f32 %v2608, %v187
    %v2610 = vadd.f32 %v2609, 1e-12
    %v2611 = vrsqrt.pop %v2610
    %v2612 = vmul.f32 %v2605, %v2611
    %v2614 = vlaneseq
    %v2615 = vshrl.u32 %v2614, 7
    %v2616 = vsub.s32 0, %v2615
    %v2617 = vrot.slane %v2600, %v2616
    %v2619 = vmul.f32 %v2612, %v2617
    %v2621 = vlaneseq
    %v2622 = vshrl.u32 %v2621, 7
    %v2623 = vsub.s32 0, %v2622
    %v2624 = vrot.slane %v2601, %v2623
    %v2626 = vadd.f32 %v2619, %v2624
    %v2627 = vpack.c.bf16 %v2626, %v2626
    %s2628 = scalar_lea.vmem %s6, 768
    %v2629 = vld [vmem:[%s2628] sm:$0xf]
    %v2630 = vld [vmem:[%s2628 + $0x4] sm:$0xf]
    %v2631 = vld [vmem:[%s2628 + $0x8] sm:$0xf]
    %v2632 = vld [vmem:[%s2628 + $0xc] sm:$0xf]
    %v2633 = vld [vmem:[%s2628 + $0x10] sm:$0xf]
    %v2634 = vld [vmem:[%s2628 + $0x14] sm:$0xf]
    %v2635 = vld [vmem:[%s2628 + $0x18] sm:$0xf]
    %v2636 = vld [vmem:[%s2628 + $0x1c] sm:$0xf]
    %v2637 = vld [vmem:[%s2628 + $0x20] sm:$0xf]
    %v2638 = vld [vmem:[%s2628 + $0x24] sm:$0xf]
    %v2639 = vld [vmem:[%s2628 + $0x28] sm:$0xf]
    %v2640 = vld [vmem:[%s2628 + $0x2c] sm:$0xf]
    %v2641 = vld [vmem:[%s2628 + $0x30] sm:$0xf]
    %v2642 = vld [vmem:[%s2628 + $0x34] sm:$0xf]
    %v2643 = vld [vmem:[%s2628 + $0x38] sm:$0xf]
    %v2644 = vld [vmem:[%s2628 + $0x3c] sm:$0xf]
    %v2645 = vld [vmem:[%s2628 + $0x40] sm:$0xf]
    %v2646 = vld [vmem:[%s2628 + $0x44] sm:$0xf]
    %v2647 = vld [vmem:[%s2628 + $0x48] sm:$0xf]
    %v2648 = vld [vmem:[%s2628 + $0x4c] sm:$0xf]
    %v2649 = vld [vmem:[%s2628 + $0x50] sm:$0xf]
    %v2650 = vld [vmem:[%s2628 + $0x54] sm:$0xf]
    %v2651 = vld [vmem:[%s2628 + $0x58] sm:$0xf]
    %v2652 = vld [vmem:[%s2628 + $0x5c] sm:$0xf]
    %v2653 = vld [vmem:[%s2628 + $0x60] sm:$0xf]
    %v2654 = vld [vmem:[%s2628 + $0x64] sm:$0xf]
    %v2655 = vld [vmem:[%s2628 + $0x68] sm:$0xf]
    %v2656 = vld [vmem:[%s2628 + $0x6c] sm:$0xf]
    %v2657 = vld [vmem:[%s2628 + $0x70] sm:$0xf]
    %v2658 = vld [vmem:[%s2628 + $0x74] sm:$0xf]
    %v2659 = vld [vmem:[%s2628 + $0x78] sm:$0xf]
    %v2660 = vld [vmem:[%s2628 + $0x7c] sm:$0xf]
    %v2661 = vld [vmem:[%s2628 + $0x80] sm:$0xf]
    %v2662 = vld [vmem:[%s2628 + $0x84] sm:$0xf]
    %v2663 = vld [vmem:[%s2628 + $0x88] sm:$0xf]
    %v2664 = vld [vmem:[%s2628 + $0x8c] sm:$0xf]
    %v2665 = vld [vmem:[%s2628 + $0x90] sm:$0xf]
    %v2666 = vld [vmem:[%s2628 + $0x94] sm:$0xf]
    %v2667 = vld [vmem:[%s2628 + $0x98] sm:$0xf]
    %v2668 = vld [vmem:[%s2628 + $0x9c] sm:$0xf]
    %v2669 = vld [vmem:[%s2628 + $0xa0] sm:$0xf]
    %v2670 = vld [vmem:[%s2628 + $0xa4] sm:$0xf]
    %v2671 = vld [vmem:[%s2628 + $0xa8] sm:$0xf]
    %v2672 = vld [vmem:[%s2628 + $0xac] sm:$0xf]
    %v2673 = vld [vmem:[%s2628 + $0xb0] sm:$0xf]
    %v2674 = vld [vmem:[%s2628 + $0xb4] sm:$0xf]
    %v2675 = vld [vmem:[%s2628 + $0xb8] sm:$0xf]
    %v2676 = vld [vmem:[%s2628 + $0xbc] sm:$0xf]
    %v2677 = vld [vmem:[%s2628 + $0xc0] sm:$0xf]
    %v2678 = vld [vmem:[%s2628 + $0xc4] sm:$0xf]
    %v2679 = vld [vmem:[%s2628 + $0xc8] sm:$0xf]
    %v2680 = vld [vmem:[%s2628 + $0xcc] sm:$0xf]
    %v2681 = vld [vmem:[%s2628 + $0xd0] sm:$0xf]
    %v2682 = vld [vmem:[%s2628 + $0xd4] sm:$0xf]
    %v2683 = vld [vmem:[%s2628 + $0xd8] sm:$0xf]
    %v2684 = vld [vmem:[%s2628 + $0xdc] sm:$0xf]
    %v2685 = vld [vmem:[%s2628 + $0xe0] sm:$0xf]
    %v2686 = vld [vmem:[%s2628 + $0xe4] sm:$0xf]
    %v2687 = vld [vmem:[%s2628 + $0xe8] sm:$0xf]
    %v2688 = vld [vmem:[%s2628 + $0xec] sm:$0xf]
    %v2689 = vld [vmem:[%s2628 + $0xf0] sm:$0xf]
    %v2690 = vld [vmem:[%s2628 + $0xf4] sm:$0xf]
    %v2691 = vld [vmem:[%s2628 + $0xf8] sm:$0xf]
    %v2692 = vld [vmem:[%s2628 + $0xfc] sm:$0xf]
    %v2693 = vld [vmem:[%s2628 + $0x100] sm:$0xf]
    %v2694 = vld [vmem:[%s2628 + $0x104] sm:$0xf]
    %v2695 = vld [vmem:[%s2628 + $0x108] sm:$0xf]
    %v2696 = vld [vmem:[%s2628 + $0x10c] sm:$0xf]
    %v2697 = vld [vmem:[%s2628 + $0x110] sm:$0xf]
    %v2698 = vld [vmem:[%s2628 + $0x114] sm:$0xf]
    %v2699 = vld [vmem:[%s2628 + $0x118] sm:$0xf]
    %v2700 = vld [vmem:[%s2628 + $0x11c] sm:$0xf]
    %v2701 = vld [vmem:[%s2628 + $0x120] sm:$0xf]
    %v2702 = vld [vmem:[%s2628 + $0x124] sm:$0xf]
    %v2703 = vld [vmem:[%s2628 + $0x128] sm:$0xf]
    %v2704 = vld [vmem:[%s2628 + $0x12c] sm:$0xf]
    %v2705 = vld [vmem:[%s2628 + $0x130] sm:$0xf]
    %v2706 = vld [vmem:[%s2628 + $0x134] sm:$0xf]
    %v2707 = vld [vmem:[%s2628 + $0x138] sm:$0xf]
    %v2708 = vld [vmem:[%s2628 + $0x13c] sm:$0xf]
    %v2709 = vld [vmem:[%s2628 + $0x140] sm:$0xf]
    %v2710 = vld [vmem:[%s2628 + $0x144] sm:$0xf]
    %v2711 = vld [vmem:[%s2628 + $0x148] sm:$0xf]
    %v2712 = vld [vmem:[%s2628 + $0x14c] sm:$0xf]
    %v2713 = vld [vmem:[%s2628 + $0x150] sm:$0xf]
    %v2714 = vld [vmem:[%s2628 + $0x154] sm:$0xf]
    %v2715 = vld [vmem:[%s2628 + $0x158] sm:$0xf]
    %v2716 = vld [vmem:[%s2628 + $0x15c] sm:$0xf]
    %v2717 = vld [vmem:[%s2628 + $0x160] sm:$0xf]
    %v2718 = vld [vmem:[%s2628 + $0x164] sm:$0xf]
    %v2719 = vld [vmem:[%s2628 + $0x168] sm:$0xf]
    %v2720 = vld [vmem:[%s2628 + $0x16c] sm:$0xf]
    %v2721 = vld [vmem:[%s2628 + $0x170] sm:$0xf]
    %v2722 = vld [vmem:[%s2628 + $0x174] sm:$0xf]
    %v2723 = vld [vmem:[%s2628 + $0x178] sm:$0xf]
    %v2724 = vld [vmem:[%s2628 + $0x17c] sm:$0xf]
    %v2725 = vld [vmem:[%s2628 + $0x180] sm:$0xf]
    %v2726 = vld [vmem:[%s2628 + $0x184] sm:$0xf]
    %v2727 = vld [vmem:[%s2628 + $0x188] sm:$0xf]
    %v2728 = vld [vmem:[%s2628 + $0x18c] sm:$0xf]
    %v2729 = vld [vmem:[%s2628 + $0x190] sm:$0xf]
    %v2730 = vld [vmem:[%s2628 + $0x194] sm:$0xf]
    %v2731 = vld [vmem:[%s2628 + $0x198] sm:$0xf]
    %v2732 = vld [vmem:[%s2628 + $0x19c] sm:$0xf]
    %v2733 = vld [vmem:[%s2628 + $0x1a0] sm:$0xf]
    %v2734 = vld [vmem:[%s2628 + $0x1a4] sm:$0xf]
    %v2735 = vld [vmem:[%s2628 + $0x1a8] sm:$0xf]
    %v2736 = vld [vmem:[%s2628 + $0x1ac] sm:$0xf]
    %v2737 = vld [vmem:[%s2628 + $0x1b0] sm:$0xf]
    %v2738 = vld [vmem:[%s2628 + $0x1b4] sm:$0xf]
    %v2739 = vld [vmem:[%s2628 + $0x1b8] sm:$0xf]
    %v2740 = vld [vmem:[%s2628 + $0x1bc] sm:$0xf]
    %v2741 = vld [vmem:[%s2628 + $0x1c0] sm:$0xf]
    %v2742 = vld [vmem:[%s2628 + $0x1c4] sm:$0xf]
    %v2743 = vld [vmem:[%s2628 + $0x1c8] sm:$0xf]
    %v2744 = vld [vmem:[%s2628 + $0x1cc] sm:$0xf]
    %v2745 = vld [vmem:[%s2628 + $0x1d0] sm:$0xf]
    %v2746 = vld [vmem:[%s2628 + $0x1d4] sm:$0xf]
    %v2747 = vld [vmem:[%s2628 + $0x1d8] sm:$0xf]
    %v2748 = vld [vmem:[%s2628 + $0x1dc] sm:$0xf]
    %v2749 = vld [vmem:[%s2628 + $0x1e0] sm:$0xf]
    %v2750 = vld [vmem:[%s2628 + $0x1e4] sm:$0xf]
    %v2751 = vld [vmem:[%s2628 + $0x1e8] sm:$0xf]
    %v2752 = vld [vmem:[%s2628 + $0x1ec] sm:$0xf]
    %v2753 = vld [vmem:[%s2628 + $0x1f0] sm:$0xf]
    %v2754 = vld [vmem:[%s2628 + $0x1f4] sm:$0xf]
    %v2755 = vld [vmem:[%s2628 + $0x1f8] sm:$0xf]
    %v2756 = vld [vmem:[%s2628 + $0x1fc] sm:$0xf]
    %v2757 = vld [vmem:[%s2628 + $0x200] sm:$0xf]
    %v2758 = vld [vmem:[%s2628 + $0x204] sm:$0xf]
    %v2759 = vld [vmem:[%s2628 + $0x208] sm:$0xf]
    %v2760 = vld [vmem:[%s2628 + $0x20c] sm:$0xf]
    %v2761 = vld [vmem:[%s2628 + $0x210] sm:$0xf]
    %v2762 = vld [vmem:[%s2628 + $0x214] sm:$0xf]
    %v2763 = vld [vmem:[%s2628 + $0x218] sm:$0xf]
    %v2764 = vld [vmem:[%s2628 + $0x21c] sm:$0xf]
    %v2765 = vld [vmem:[%s2628 + $0x220] sm:$0xf]
    %v2766 = vld [vmem:[%s2628 + $0x224] sm:$0xf]
    %v2767 = vld [vmem:[%s2628 + $0x228] sm:$0xf]
    %v2768 = vld [vmem:[%s2628 + $0x22c] sm:$0xf]
    %v2769 = vld [vmem:[%s2628 + $0x230] sm:$0xf]
    %v2770 = vld [vmem:[%s2628 + $0x234] sm:$0xf]
    %v2771 = vld [vmem:[%s2628 + $0x238] sm:$0xf]
    %v2772 = vld [vmem:[%s2628 + $0x23c] sm:$0xf]
    %v2773 = vld [vmem:[%s2628 + $0x240] sm:$0xf]
    %v2774 = vld [vmem:[%s2628 + $0x244] sm:$0xf]
    %v2775 = vld [vmem:[%s2628 + $0x248] sm:$0xf]
    %v2776 = vld [vmem:[%s2628 + $0x24c] sm:$0xf]
    %v2777 = vld [vmem:[%s2628 + $0x250] sm:$0xf]
    %v2778 = vld [vmem:[%s2628 + $0x254] sm:$0xf]
    %v2779 = vld [vmem:[%s2628 + $0x258] sm:$0xf]
    %v2780 = vld [vmem:[%s2628 + $0x25c] sm:$0xf]
    %v2781 = vld [vmem:[%s2628 + $0x260] sm:$0xf]
    %v2782 = vld [vmem:[%s2628 + $0x264] sm:$0xf]
    %v2783 = vld [vmem:[%s2628 + $0x268] sm:$0xf]
    %v2784 = vld [vmem:[%s2628 + $0x26c] sm:$0xf]
    %v2785 = vld [vmem:[%s2628 + $0x270] sm:$0xf]
    %v2786 = vld [vmem:[%s2628 + $0x274] sm:$0xf]
    %v2787 = vld [vmem:[%s2628 + $0x278] sm:$0xf]
    %v2788 = vld [vmem:[%s2628 + $0x27c] sm:$0xf]
    %v2789 = vld [vmem:[%s2628 + $0x280] sm:$0xf]
    %v2790 = vld [vmem:[%s2628 + $0x284] sm:$0xf]
    %v2791 = vld [vmem:[%s2628 + $0x288] sm:$0xf]
    %v2792 = vld [vmem:[%s2628 + $0x28c] sm:$0xf]
    %v2793 = vld [vmem:[%s2628 + $0x290] sm:$0xf]
    %v2794 = vld [vmem:[%s2628 + $0x294] sm:$0xf]
    %v2795 = vld [vmem:[%s2628 + $0x298] sm:$0xf]
    %v2796 = vld [vmem:[%s2628 + $0x29c] sm:$0xf]
    %v2797 = vld [vmem:[%s2628 + $0x2a0] sm:$0xf]
    %v2798 = vld [vmem:[%s2628 + $0x2a4] sm:$0xf]
    %v2799 = vld [vmem:[%s2628 + $0x2a8] sm:$0xf]
    %v2800 = vld [vmem:[%s2628 + $0x2ac] sm:$0xf]
    %v2801 = vld [vmem:[%s2628 + $0x2b0] sm:$0xf]
    %v2802 = vld [vmem:[%s2628 + $0x2b4] sm:$0xf]
    %v2803 = vld [vmem:[%s2628 + $0x2b8] sm:$0xf]
    %v2804 = vld [vmem:[%s2628 + $0x2bc] sm:$0xf]
    %v2805 = vld [vmem:[%s2628 + $0x2c0] sm:$0xf]
    %v2806 = vld [vmem:[%s2628 + $0x2c4] sm:$0xf]
    %v2807 = vld [vmem:[%s2628 + $0x2c8] sm:$0xf]
    %v2808 = vld [vmem:[%s2628 + $0x2cc] sm:$0xf]
    %v2809 = vld [vmem:[%s2628 + $0x2d0] sm:$0xf]
    %v2810 = vld [vmem:[%s2628 + $0x2d4] sm:$0xf]
    %v2811 = vld [vmem:[%s2628 + $0x2d8] sm:$0xf]
    %v2812 = vld [vmem:[%s2628 + $0x2dc] sm:$0xf]
    %v2813 = vld [vmem:[%s2628 + $0x2e0] sm:$0xf]
    %v2814 = vld [vmem:[%s2628 + $0x2e4] sm:$0xf]
    %v2815 = vld [vmem:[%s2628 + $0x2e8] sm:$0xf]
    %v2816 = vld [vmem:[%s2628 + $0x2ec] sm:$0xf]
    %v2817 = vld [vmem:[%s2628 + $0x2f0] sm:$0xf]
    %v2818 = vld [vmem:[%s2628 + $0x2f4] sm:$0xf]
    %v2819 = vld [vmem:[%s2628 + $0x2f8] sm:$0xf]
    %v2820 = vld [vmem:[%s2628 + $0x2fc] sm:$0xf]
    %s2821 = scalar_lea.vmem %s7, 12
    %v2822 = vld [vmem:[%s2821] sm:$0x1]
    %v2823 = vld [vmem:[%s2821 + $0x1] sm:$0x1]
    %v2824 = vld [vmem:[%s2821 + $0x2] sm:$0x1]
    %v2825 = vld [vmem:[%s2821 + $0x3] sm:$0x1]
    %v2826 = vld [vmem:[%s2821 + $0x4] sm:$0x1]
    %v2827 = vld [vmem:[%s2821 + $0x5] sm:$0x1]
    %v2828 = vld [vmem:[%s2821 + $0x6] sm:$0x1]
    %v2829 = vld [vmem:[%s2821 + $0x7] sm:$0x1]
    %v2830 = vld [vmem:[%s2821 + $0x8] sm:$0x1]
    %v2831 = vld [vmem:[%s2821 + $0x9] sm:$0x1]
    %v2832 = vld [vmem:[%s2821 + $0xa] sm:$0x1]
    %v2833 = vld [vmem:[%s2821 + $0xb] sm:$0x1]
    %v2846 = vlaneseq
    %v2847 = vshrl.u32 %v2846, 7
    %v2848 = vsub.s32 0, %v2847
    %v2849 = vrot.slane %v2822, %v2848
    %v2850 = vlaneseq
    %v2851 = vshrl.u32 %v2850, 7
    %v2852 = vsub.s32 0, %v2851
    %v2853 = vrot.slane %v2823, %v2852
    %v2854 = vlaneseq
    %v2855 = vshrl.u32 %v2854, 7
    %v2856 = vsub.s32 0, %v2855
    %v2857 = vrot.slane %v2824, %v2856
    %v2858 = vlaneseq
    %v2859 = vshrl.u32 %v2858, 7
    %v2860 = vsub.s32 0, %v2859
    %v2861 = vrot.slane %v2825, %v2860
    %v2862 = vlaneseq
    %v2863 = vshrl.u32 %v2862, 7
    %v2864 = vsub.s32 0, %v2863
    %v2865 = vrot.slane %v2826, %v2864
    %v2866 = vlaneseq
    %v2867 = vshrl.u32 %v2866, 7
    %v2868 = vsub.s32 0, %v2867
    %v2869 = vrot.slane %v2827, %v2868
    %v2870 = vlaneseq
    %v2871 = vshrl.u32 %v2870, 7
    %v2872 = vsub.s32 0, %v2871
    %v2873 = vrot.slane %v2828, %v2872
    %v2874 = vlaneseq
    %v2875 = vshrl.u32 %v2874, 7
    %v2876 = vsub.s32 0, %v2875
    %v2877 = vrot.slane %v2829, %v2876
    %v2878 = vlaneseq
    %v2879 = vshrl.u32 %v2878, 7
    %v2880 = vsub.s32 0, %v2879
    %v2881 = vrot.slane %v2830, %v2880
    %v2882 = vlaneseq
    %v2883 = vshrl.u32 %v2882, 7
    %v2884 = vsub.s32 0, %v2883
    %v2885 = vrot.slane %v2831, %v2884
    %v2886 = vlaneseq
    %v2887 = vshrl.u32 %v2886, 7
    %v2888 = vsub.s32 0, %v2887
    %v2889 = vrot.slane %v2832, %v2888
    %v2890 = vlaneseq
    %v2891 = vshrl.u32 %v2890, 7
    %v2892 = vsub.s32 0, %v2891
    %v2893 = vrot.slane %v2833, %v2892
    %v2922 = vunpack.c.l.b16 %v2629
    %v2923 = vunpack.c.l.b16 %v2630
    %v2924 = vunpack.c.l.b16 %v2631
    %v2925 = vunpack.c.l.b16 %v2632
    %v2926 = vunpack.c.l.b16 %v2633
    %v2927 = vunpack.c.l.b16 %v2634
    %v2928 = vunpack.c.l.b16 %v2635
    %v2929 = vunpack.c.l.b16 %v2636
    %v2930 = vunpack.c.l.b16 %v2637
    %v2931 = vunpack.c.l.b16 %v2638
    %v2932 = vunpack.c.l.b16 %v2639
    %v2933 = vunpack.c.l.b16 %v2640
    %v2934 = vunpack.c.l.b16 %v2641
    %v2935 = vunpack.c.l.b16 %v2642
    %v2936 = vunpack.c.l.b16 %v2643
    %v2937 = vunpack.c.l.b16 %v2644
    %v2938 = vpack.c.b16 %v2923, %v2922
    %v2939 = vpack.c.b16 %v2925, %v2924
    %v2940 = vpack.c.b16 %v2927, %v2926
    %v2941 = vpack.c.b16 %v2929, %v2928
    %v2942 = vpack.c.b16 %v2931, %v2930
    %v2943 = vpack.c.b16 %v2933, %v2932
    %v2944 = vpack.c.b16 %v2935, %v2934
    %v2945 = vpack.c.b16 %v2937, %v2936
    %2954 = vmatprep.subr.bf16.mxu0 0
    %2955 = vmatpush1.bf16.msra.mxu0 %v2945
    %2956 = vmatprep.subr.bf16.mxu0 0
    %2957 = vmatpush1.bf16.msra.mxu0 %v2944
    %2958 = vmatprep.subr.bf16.mxu0 0
    %2959 = vmatpush1.bf16.msra.mxu0 %v2943
    %2960 = vmatprep.subr.bf16.mxu0 0
    %2961 = vmatpush1.bf16.msra.mxu0 %v2942
    %2962 = vmatprep.subr.bf16.mxu0 0
    %2963 = vmatpush1.bf16.msra.mxu0 %v2941
    %2964 = vmatprep.subr.bf16.mxu0 0
    %2965 = vmatpush1.bf16.msra.mxu0 %v2940
    %2966 = vmatprep.subr.bf16.mxu0 0
    %2967 = vmatpush1.bf16.msra.mxu0 %v2939
    %2968 = vmatprep.subr.bf16.mxu0 0
    %2969 = vmatpush1.bf16.msra.mxu0 %v2938
    %2970 = vmatprep.subr.bf16.mxu0 0
    %2971 = vmatpush2.bf16.msra.mxu0 0
    %2972 = vmatprep.subr.bf16.mxu0 0
    %2973 = vmatpush2.bf16.msra.mxu0 0
    %2974 = vmatprep.subr.bf16.mxu0 0
    %2975 = vmatpush2.bf16.msra.mxu0 0
    %2976 = vmatprep.subr.bf16.mxu0 0
    %2977 = vmatpush2.bf16.msra.mxu0 0
    %2978 = vmatprep.subr.bf16.mxu0 0
    %2979 = vmatpush2.bf16.msra.mxu0 0
    %2980 = vmatprep.subr.bf16.mxu0 0
    %2981 = vmatpush2.bf16.msra.mxu0 0
    %2982 = vmatprep.subr.bf16.mxu0 0
    %2983 = vmatpush2.bf16.msra.mxu0 0
    %2984 = vmatprep.subr.bf16.mxu0 0
    %2985 = vmatpush2.bf16.msra.mxu0 0
    %2986 = vmatprep.mubr.bf16.mxu0 0
    %2987 = vmatmul.mubr.bf16.gmra.mxu0 %v2627
    %v2988 = vpop.f32.mrf.mxu0
    %v2989 = vadd.f32 %v2849, %v2988
    %v2990 = vpop.f32.mrf.mxu0
    %v2991 = vpop.f32.mrf.mxu0
    %v2992 = vpop.f32.mrf.mxu0
    %2993 = vdwg.mxu0
    %v3010 = vunpack.c.l.b16 %v2645
    %v3011 = vunpack.c.l.b16 %v2646
    %v3012 = vunpack.c.l.b16 %v2647
    %v3013 = vunpack.c.l.b16 %v2648
    %v3014 = vunpack.c.l.b16 %v2649
    %v3015 = vunpack.c.l.b16 %v2650
    %v3016 = vunpack.c.l.b16 %v2651
    %v3017 = vunpack.c.l.b16 %v2652
    %v3018 = vunpack.c.l.b16 %v2653
    %v3019 = vunpack.c.l.b16 %v2654
    %v3020 = vunpack.c.l.b16 %v2655
    %v3021 = vunpack.c.l.b16 %v2656
    %v3022 = vunpack.c.l.b16 %v2657
    %v3023 = vunpack.c.l.b16 %v2658
    %v3024 = vunpack.c.l.b16 %v2659
    %v3025 = vunpack.c.l.b16 %v2660
    %v3026 = vpack.c.b16 %v3011, %v3010
    %v3027 = vpack.c.b16 %v3013, %v3012
    %v3028 = vpack.c.b16 %v3015, %v3014
    %v3029 = vpack.c.b16 %v3017, %v3016
    %v3030 = vpack.c.b16 %v3019, %v3018
    %v3031 = vpack.c.b16 %v3021, %v3020
    %v3032 = vpack.c.b16 %v3023, %v3022
    %v3033 = vpack.c.b16 %v3025, %v3024
    %3042 = vmatprep.subr.bf16.mxu0 0
    %3043 = vmatpush1.bf16.msra.mxu0 %v3033
    %3044 = vmatprep.subr.bf16.mxu0 0
    %3045 = vmatpush1.bf16.msra.mxu0 %v3032
    %3046 = vmatprep.subr.bf16.mxu0 0
    %3047 = vmatpush1.bf16.msra.mxu0 %v3031
    %3048 = vmatprep.subr.bf16.mxu0 0
    %3049 = vmatpush1.bf16.msra.mxu0 %v3030
    %3050 = vmatprep.subr.bf16.mxu0 0
    %3051 = vmatpush1.bf16.msra.mxu0 %v3029
    %3052 = vmatprep.subr.bf16.mxu0 0
    %3053 = vmatpush1.bf16.msra.mxu0 %v3028
    %3054 = vmatprep.subr.bf16.mxu0 0
    %3055 = vmatpush1.bf16.msra.mxu0 %v3027
    %3056 = vmatprep.subr.bf16.mxu0 0
    %3057 = vmatpush1.bf16.msra.mxu0 %v3026
    %3058 = vmatprep.subr.bf16.mxu0 0
    %3059 = vmatpush2.bf16.msra.mxu0 0
    %3060 = vmatprep.subr.bf16.mxu0 0
    %3061 = vmatpush2.bf16.msra.mxu0 0
    %3062 = vmatprep.subr.bf16.mxu0 0
    %3063 = vmatpush2.bf16.msra.mxu0 0
    %3064 = vmatprep.subr.bf16.mxu0 0
    %3065 = vmatpush2.bf16.msra.mxu0 0
    %3066 = vmatprep.subr.bf16.mxu0 0
    %3067 = vmatpush2.bf16.msra.mxu0 0
    %3068 = vmatprep.subr.bf16.mxu0 0
    %3069 = vmatpush2.bf16.msra.mxu0 0
    %3070 = vmatprep.subr.bf16.mxu0 0
    %3071 = vmatpush2.bf16.msra.mxu0 0
    %3072 = vmatprep.subr.bf16.mxu0 0
    %3073 = vmatpush2.bf16.msra.mxu0 0
    %3074 = vmatprep.mubr.bf16.mxu0 0
    %3075 = vmatmul.mubr.bf16.gmra.mxu0 %v2627
    %v3076 = vpop.f32.mrf.mxu0
    %v3077 = vadd.f32 %v2853, %v3076
    %v3078 = vpop.f32.mrf.mxu0
    %v3079 = vpop.f32.mrf.mxu0
    %v3080 = vpop.f32.mrf.mxu0
    %3081 = vdwg.mxu0
    %v3098 = vunpack.c.l.b16 %v2661
    %v3099 = vunpack.c.l.b16 %v2662
    %v3100 = vunpack.c.l.b16 %v2663
    %v3101 = vunpack.c.l.b16 %v2664
    %v3102 = vunpack.c.l.b16 %v2665
    %v3103 = vunpack.c.l.b16 %v2666
    %v3104 = vunpack.c.l.b16 %v2667
    %v3105 = vunpack.c.l.b16 %v2668
    %v3106 = vunpack.c.l.b16 %v2669
    %v3107 = vunpack.c.l.b16 %v2670
    %v3108 = vunpack.c.l.b16 %v2671
    %v3109 = vunpack.c.l.b16 %v2672
    %v3110 = vunpack.c.l.b16 %v2673
    %v3111 = vunpack.c.l.b16 %v2674
    %v3112 = vunpack.c.l.b16 %v2675
    %v3113 = vunpack.c.l.b16 %v2676
    %v3114 = vpack.c.b16 %v3099, %v3098
    %v3115 = vpack.c.b16 %v3101, %v3100
    %v3116 = vpack.c.b16 %v3103, %v3102
    %v3117 = vpack.c.b16 %v3105, %v3104
    %v3118 = vpack.c.b16 %v3107, %v3106
    %v3119 = vpack.c.b16 %v3109, %v3108
    %v3120 = vpack.c.b16 %v3111, %v3110
    %v3121 = vpack.c.b16 %v3113, %v3112
    %3130 = vmatprep.subr.bf16.mxu0 0
    %3131 = vmatpush1.bf16.msra.mxu0 %v3121
    %3132 = vmatprep.subr.bf16.mxu0 0
    %3133 = vmatpush1.bf16.msra.mxu0 %v3120
    %3134 = vmatprep.subr.bf16.mxu0 0
    %3135 = vmatpush1.bf16.msra.mxu0 %v3119
    %3136 = vmatprep.subr.bf16.mxu0 0
    %3137 = vmatpush1.bf16.msra.mxu0 %v3118
    %3138 = vmatprep.subr.bf16.mxu0 0
    %3139 = vmatpush1.bf16.msra.mxu0 %v3117
    %3140 = vmatprep.subr.bf16.mxu0 0
    %3141 = vmatpush1.bf16.msra.mxu0 %v3116
    %3142 = vmatprep.subr.bf16.mxu0 0
    %3143 = vmatpush1.bf16.msra.mxu0 %v3115
    %3144 = vmatprep.subr.bf16.mxu0 0
    %3145 = vmatpush1.bf16.msra.mxu0 %v3114
    %3146 = vmatprep.subr.bf16.mxu0 0
    %3147 = vmatpush2.bf16.msra.mxu0 0
    %3148 = vmatprep.subr.bf16.mxu0 0
    %3149 = vmatpush2.bf16.msra.mxu0 0
    %3150 = vmatprep.subr.bf16.mxu0 0
    %3151 = vmatpush2.bf16.msra.mxu0 0
    %3152 = vmatprep.subr.bf16.mxu0 0
    %3153 = vmatpush2.bf16.msra.mxu0 0
    %3154 = vmatprep.subr.bf16.mxu0 0
    %3155 = vmatpush2.bf16.msra.mxu0 0
    %3156 = vmatprep.subr.bf16.mxu0 0
    %3157 = vmatpush2.bf16.msra.mxu0 0
    %3158 = vmatprep.subr.bf16.mxu0 0
    %3159 = vmatpush2.bf16.msra.mxu0 0
    %3160 = vmatprep.subr.bf16.mxu0 0
    %3161 = vmatpush2.bf16.msra.mxu0 0
    %3162 = vmatprep.mubr.bf16.mxu0 0
    %3163 = vmatmul.mubr.bf16.gmra.mxu0 %v2627
    %v3164 = vpop.f32.mrf.mxu0
    %v3165 = vadd.f32 %v2857, %v3164
    %v3166 = vpop.f32.mrf.mxu0
    %v3167 = vpop.f32.mrf.mxu0
    %v3168 = vpop.f32.mrf.mxu0
    %3169 = vdwg.mxu0
    %v3186 = vunpack.c.l.b16 %v2677
    %v3187 = vunpack.c.l.b16 %v2678
    %v3188 = vunpack.c.l.b16 %v2679
    %v3189 = vunpack.c.l.b16 %v2680
    %v3190 = vunpack.c.l.b16 %v2681
    %v3191 = vunpack.c.l.b16 %v2682
    %v3192 = vunpack.c.l.b16 %v2683
    %v3193 = vunpack.c.l.b16 %v2684
    %v3194 = vunpack.c.l.b16 %v2685
    %v3195 = vunpack.c.l.b16 %v2686
    %v3196 = vunpack.c.l.b16 %v2687
    %v3197 = vunpack.c.l.b16 %v2688
    %v3198 = vunpack.c.l.b16 %v2689
    %v3199 = vunpack.c.l.b16 %v2690
    %v3200 = vunpack.c.l.b16 %v2691
    %v3201 = vunpack.c.l.b16 %v2692
    %v3202 = vpack.c.b16 %v3187, %v3186
    %v3203 = vpack.c.b16 %v3189, %v3188
    %v3204 = vpack.c.b16 %v3191, %v3190
    %v3205 = vpack.c.b16 %v3193, %v3192
    %v3206 = vpack.c.b16 %v3195, %v3194
    %v3207 = vpack.c.b16 %v3197, %v3196
    %v3208 = vpack.c.b16 %v3199, %v3198
    %v3209 = vpack.c.b16 %v3201, %v3200
    %3218 = vmatprep.subr.bf16.mxu0 0
    %3219 = vmatpush1.bf16.msra.mxu0 %v3209
    %3220 = vmatprep.subr.bf16.mxu0 0
    %3221 = vmatpush1.bf16.msra.mxu0 %v3208
    %3222 = vmatprep.subr.bf16.mxu0 0
    %3223 = vmatpush1.bf16.msra.mxu0 %v3207
    %3224 = vmatprep.subr.bf16.mxu0 0
    %3225 = vmatpush1.bf16.msra.mxu0 %v3206
    %3226 = vmatprep.subr.bf16.mxu0 0
    %3227 = vmatpush1.bf16.msra.mxu0 %v3205
    %3228 = vmatprep.subr.bf16.mxu0 0
    %3229 = vmatpush1.bf16.msra.mxu0 %v3204
    %3230 = vmatprep.subr.bf16.mxu0 0
    %3231 = vmatpush1.bf16.msra.mxu0 %v3203
    %3232 = vmatprep.subr.bf16.mxu0 0
    %3233 = vmatpush1.bf16.msra.mxu0 %v3202
    %3234 = vmatprep.subr.bf16.mxu0 0
    %3235 = vmatpush2.bf16.msra.mxu0 0
    %3236 = vmatprep.subr.bf16.mxu0 0
    %3237 = vmatpush2.bf16.msra.mxu0 0
    %3238 = vmatprep.subr.bf16.mxu0 0
    %3239 = vmatpush2.bf16.msra.mxu0 0
    %3240 = vmatprep.subr.bf16.mxu0 0
    %3241 = vmatpush2.bf16.msra.mxu0 0
    %3242 = vmatprep.subr.bf16.mxu0 0
    %3243 = vmatpush2.bf16.msra.mxu0 0
    %3244 = vmatprep.subr.bf16.mxu0 0
    %3245 = vmatpush2.bf16.msra.mxu0 0
    %3246 = vmatprep.subr.bf16.mxu0 0
    %3247 = vmatpush2.bf16.msra.mxu0 0
    %3248 = vmatprep.subr.bf16.mxu0 0
    %3249 = vmatpush2.bf16.msra.mxu0 0
    %3250 = vmatprep.mubr.bf16.mxu0 0
    %3251 = vmatmul.mubr.bf16.gmra.mxu0 %v2627
    %v3252 = vpop.f32.mrf.mxu0
    %v3253 = vadd.f32 %v2861, %v3252
    %v3254 = vpop.f32.mrf.mxu0
    %v3255 = vpop.f32.mrf.mxu0
    %v3256 = vpop.f32.mrf.mxu0
    %3257 = vdwg.mxu0
    %v3274 = vunpack.c.l.b16 %v2693
    %v3275 = vunpack.c.l.b16 %v2694
    %v3276 = vunpack.c.l.b16 %v2695
    %v3277 = vunpack.c.l.b16 %v2696
    %v3278 = vunpack.c.l.b16 %v2697
    %v3279 = vunpack.c.l.b16 %v2698
    %v3280 = vunpack.c.l.b16 %v2699
    %v3281 = vunpack.c.l.b16 %v2700
    %v3282 = vunpack.c.l.b16 %v2701
    %v3283 = vunpack.c.l.b16 %v2702
    %v3284 = vunpack.c.l.b16 %v2703
    %v3285 = vunpack.c.l.b16 %v2704
    %v3286 = vunpack.c.l.b16 %v2705
    %v3287 = vunpack.c.l.b16 %v2706
    %v3288 = vunpack.c.l.b16 %v2707
    %v3289 = vunpack.c.l.b16 %v2708
    %v3290 = vpack.c.b16 %v3275, %v3274
    %v3291 = vpack.c.b16 %v3277, %v3276
    %v3292 = vpack.c.b16 %v3279, %v3278
    %v3293 = vpack.c.b16 %v3281, %v3280
    %v3294 = vpack.c.b16 %v3283, %v3282
    %v3295 = vpack.c.b16 %v3285, %v3284
    %v3296 = vpack.c.b16 %v3287, %v3286
    %v3297 = vpack.c.b16 %v3289, %v3288
    %3306 = vmatprep.subr.bf16.mxu0 0
    %3307 = vmatpush1.bf16.msra.mxu0 %v3297
    %3308 = vmatprep.subr.bf16.mxu0 0
    %3309 = vmatpush1.bf16.msra.mxu0 %v3296
    %3310 = vmatprep.subr.bf16.mxu0 0
    %3311 = vmatpush1.bf16.msra.mxu0 %v3295
    %3312 = vmatprep.subr.bf16.mxu0 0
    %3313 = vmatpush1.bf16.msra.mxu0 %v3294
    %3314 = vmatprep.subr.bf16.mxu0 0
    %3315 = vmatpush1.bf16.msra.mxu0 %v3293
    %3316 = vmatprep.subr.bf16.mxu0 0
    %3317 = vmatpush1.bf16.msra.mxu0 %v3292
    %3318 = vmatprep.subr.bf16.mxu0 0
    %3319 = vmatpush1.bf16.msra.mxu0 %v3291
    %3320 = vmatprep.subr.bf16.mxu0 0
    %3321 = vmatpush1.bf16.msra.mxu0 %v3290
    %3322 = vmatprep.subr.bf16.mxu0 0
    %3323 = vmatpush2.bf16.msra.mxu0 0
    %3324 = vmatprep.subr.bf16.mxu0 0
    %3325 = vmatpush2.bf16.msra.mxu0 0
    %3326 = vmatprep.subr.bf16.mxu0 0
    %3327 = vmatpush2.bf16.msra.mxu0 0
    %3328 = vmatprep.subr.bf16.mxu0 0
    %3329 = vmatpush2.bf16.msra.mxu0 0
    %3330 = vmatprep.subr.bf16.mxu0 0
    %3331 = vmatpush2.bf16.msra.mxu0 0
    %3332 = vmatprep.subr.bf16.mxu0 0
    %3333 = vmatpush2.bf16.msra.mxu0 0
    %3334 = vmatprep.subr.bf16.mxu0 0
    %3335 = vmatpush2.bf16.msra.mxu0 0
    %3336 = vmatprep.subr.bf16.mxu0 0
    %3337 = vmatpush2.bf16.msra.mxu0 0
    %3338 = vmatprep.mubr.bf16.mxu0 0
    %3339 = vmatmul.mubr.bf16.gmra.mxu0 %v2627
    %v3340 = vpop.f32.mrf.mxu0
    %v3341 = vadd.f32 %v2865, %v3340
    %v3342 = vpop.f32.mrf.mxu0
    %v3343 = vpop.f32.mrf.mxu0
    %v3344 = vpop.f32.mrf.mxu0
    %3345 = vdwg.mxu0
    %v3362 = vunpack.c.l.b16 %v2709
    %v3363 = vunpack.c.l.b16 %v2710
    %v3364 = vunpack.c.l.b16 %v2711
    %v3365 = vunpack.c.l.b16 %v2712
    %v3366 = vunpack.c.l.b16 %v2713
    %v3367 = vunpack.c.l.b16 %v2714
    %v3368 = vunpack.c.l.b16 %v2715
    %v3369 = vunpack.c.l.b16 %v2716
    %v3370 = vunpack.c.l.b16 %v2717
    %v3371 = vunpack.c.l.b16 %v2718
    %v3372 = vunpack.c.l.b16 %v2719
    %v3373 = vunpack.c.l.b16 %v2720
    %v3374 = vunpack.c.l.b16 %v2721
    %v3375 = vunpack.c.l.b16 %v2722
    %v3376 = vunpack.c.l.b16 %v2723
    %v3377 = vunpack.c.l.b16 %v2724
    %v3378 = vpack.c.b16 %v3363, %v3362
    %v3379 = vpack.c.b16 %v3365, %v3364
    %v3380 = vpack.c.b16 %v3367, %v3366
    %v3381 = vpack.c.b16 %v3369, %v3368
    %v3382 = vpack.c.b16 %v3371, %v3370
    %v3383 = vpack.c.b16 %v3373, %v3372
    %v3384 = vpack.c.b16 %v3375, %v3374
    %v3385 = vpack.c.b16 %v3377, %v3376
    %3394 = vmatprep.subr.bf16.mxu0 0
    %3395 = vmatpush1.bf16.msra.mxu0 %v3385
    %3396 = vmatprep.subr.bf16.mxu0 0
    %3397 = vmatpush1.bf16.msra.mxu0 %v3384
    %3398 = vmatprep.subr.bf16.mxu0 0
    %3399 = vmatpush1.bf16.msra.mxu0 %v3383
    %3400 = vmatprep.subr.bf16.mxu0 0
    %3401 = vmatpush1.bf16.msra.mxu0 %v3382
    %3402 = vmatprep.subr.bf16.mxu0 0
    %3403 = vmatpush1.bf16.msra.mxu0 %v3381
    %3404 = vmatprep.subr.bf16.mxu0 0
    %3405 = vmatpush1.bf16.msra.mxu0 %v3380
    %3406 = vmatprep.subr.bf16.mxu0 0
    %3407 = vmatpush1.bf16.msra.mxu0 %v3379
    %3408 = vmatprep.subr.bf16.mxu0 0
    %3409 = vmatpush1.bf16.msra.mxu0 %v3378
    %3410 = vmatprep.subr.bf16.mxu0 0
    %3411 = vmatpush2.bf16.msra.mxu0 0
    %3412 = vmatprep.subr.bf16.mxu0 0
    %3413 = vmatpush2.bf16.msra.mxu0 0
    %3414 = vmatprep.subr.bf16.mxu0 0
    %3415 = vmatpush2.bf16.msra.mxu0 0
    %3416 = vmatprep.subr.bf16.mxu0 0
    %3417 = vmatpush2.bf16.msra.mxu0 0
    %3418 = vmatprep.subr.bf16.mxu0 0
    %3419 = vmatpush2.bf16.msra.mxu0 0
    %3420 = vmatprep.subr.bf16.mxu0 0
    %3421 = vmatpush2.bf16.msra.mxu0 0
    %3422 = vmatprep.subr.bf16.mxu0 0
    %3423 = vmatpush2.bf16.msra.mxu0 0
    %3424 = vmatprep.subr.bf16.mxu0 0
    %3425 = vmatpush2.bf16.msra.mxu0 0
    %3426 = vmatprep.mubr.bf16.mxu0 0
    %3427 = vmatmul.mubr.bf16.gmra.mxu0 %v2627
    %v3428 = vpop.f32.mrf.mxu0
    %v3429 = vadd.f32 %v2869, %v3428
    %v3430 = vpop.f32.mrf.mxu0
    %v3431 = vpop.f32.mrf.mxu0
    %v3432 = vpop.f32.mrf.mxu0
    %3433 = vdwg.mxu0
    %v3450 = vunpack.c.l.b16 %v2725
    %v3451 = vunpack.c.l.b16 %v2726
    %v3452 = vunpack.c.l.b16 %v2727
    %v3453 = vunpack.c.l.b16 %v2728
    %v3454 = vunpack.c.l.b16 %v2729
    %v3455 = vunpack.c.l.b16 %v2730
    %v3456 = vunpack.c.l.b16 %v2731
    %v3457 = vunpack.c.l.b16 %v2732
    %v3458 = vunpack.c.l.b16 %v2733
    %v3459 = vunpack.c.l.b16 %v2734
    %v3460 = vunpack.c.l.b16 %v2735
    %v3461 = vunpack.c.l.b16 %v2736
    %v3462 = vunpack.c.l.b16 %v2737
    %v3463 = vunpack.c.l.b16 %v2738
    %v3464 = vunpack.c.l.b16 %v2739
    %v3465 = vunpack.c.l.b16 %v2740
    %v3466 = vpack.c.b16 %v3451, %v3450
    %v3467 = vpack.c.b16 %v3453, %v3452
    %v3468 = vpack.c.b16 %v3455, %v3454
    %v3469 = vpack.c.b16 %v3457, %v3456
    %v3470 = vpack.c.b16 %v3459, %v3458
    %v3471 = vpack.c.b16 %v3461, %v3460
    %v3472 = vpack.c.b16 %v3463, %v3462
    %v3473 = vpack.c.b16 %v3465, %v3464
    %3482 = vmatprep.subr.bf16.mxu0 0
    %3483 = vmatpush1.bf16.msra.mxu0 %v3473
    %3484 = vmatprep.subr.bf16.mxu0 0
    %3485 = vmatpush1.bf16.msra.mxu0 %v3472
    %3486 = vmatprep.subr.bf16.mxu0 0
    %3487 = vmatpush1.bf16.msra.mxu0 %v3471
    %3488 = vmatprep.subr.bf16.mxu0 0
    %3489 = vmatpush1.bf16.msra.mxu0 %v3470
    %3490 = vmatprep.subr.bf16.mxu0 0
    %3491 = vmatpush1.bf16.msra.mxu0 %v3469
    %3492 = vmatprep.subr.bf16.mxu0 0
    %3493 = vmatpush1.bf16.msra.mxu0 %v3468
    %3494 = vmatprep.subr.bf16.mxu0 0
    %3495 = vmatpush1.bf16.msra.mxu0 %v3467
    %3496 = vmatprep.subr.bf16.mxu0 0
    %3497 = vmatpush1.bf16.msra.mxu0 %v3466
    %3498 = vmatprep.subr.bf16.mxu0 0
    %3499 = vmatpush2.bf16.msra.mxu0 0
    %3500 = vmatprep.subr.bf16.mxu0 0
    %3501 = vmatpush2.bf16.msra.mxu0 0
    %3502 = vmatprep.subr.bf16.mxu0 0
    %3503 = vmatpush2.bf16.msra.mxu0 0
    %3504 = vmatprep.subr.bf16.mxu0 0
    %3505 = vmatpush2.bf16.msra.mxu0 0
    %3506 = vmatprep.subr.bf16.mxu0 0
    %3507 = vmatpush2.bf16.msra.mxu0 0
    %3508 = vmatprep.subr.bf16.mxu0 0
    %3509 = vmatpush2.bf16.msra.mxu0 0
    %3510 = vmatprep.subr.bf16.mxu0 0
    %3511 = vmatpush2.bf16.msra.mxu0 0
    %3512 = vmatprep.subr.bf16.mxu0 0
    %3513 = vmatpush2.bf16.msra.mxu0 0
    %3514 = vmatprep.mubr.bf16.mxu0 0
    %3515 = vmatmul.mubr.bf16.gmra.mxu0 %v2627
    %v3516 = vpop.f32.mrf.mxu0
    %v3517 = vadd.f32 %v2873, %v3516
    %v3518 = vpop.f32.mrf.mxu0
    %v3519 = vpop.f32.mrf.mxu0
    %v3520 = vpop.f32.mrf.mxu0
    %3521 = vdwg.mxu0
    %v3538 = vunpack.c.l.b16 %v2741
    %v3539 = vunpack.c.l.b16 %v2742
    %v3540 = vunpack.c.l.b16 %v2743
    %v3541 = vunpack.c.l.b16 %v2744
    %v3542 = vunpack.c.l.b16 %v2745
    %v3543 = vunpack.c.l.b16 %v2746
    %v3544 = vunpack.c.l.b16 %v2747
    %v3545 = vunpack.c.l.b16 %v2748
    %v3546 = vunpack.c.l.b16 %v2749
    %v3547 = vunpack.c.l.b16 %v2750
    %v3548 = vunpack.c.l.b16 %v2751
    %v3549 = vunpack.c.l.b16 %v2752
    %v3550 = vunpack.c.l.b16 %v2753
    %v3551 = vunpack.c.l.b16 %v2754
    %v3552 = vunpack.c.l.b16 %v2755
    %v3553 = vunpack.c.l.b16 %v2756
    %v3554 = vpack.c.b16 %v3539, %v3538
    %v3555 = vpack.c.b16 %v3541, %v3540
    %v3556 = vpack.c.b16 %v3543, %v3542
    %v3557 = vpack.c.b16 %v3545, %v3544
    %v3558 = vpack.c.b16 %v3547, %v3546
    %v3559 = vpack.c.b16 %v3549, %v3548
    %v3560 = vpack.c.b16 %v3551, %v3550
    %v3561 = vpack.c.b16 %v3553, %v3552
    %3570 = vmatprep.subr.bf16.mxu0 0
    %3571 = vmatpush1.bf16.msra.mxu0 %v3561
    %3572 = vmatprep.subr.bf16.mxu0 0
    %3573 = vmatpush1.bf16.msra.mxu0 %v3560
    %3574 = vmatprep.subr.bf16.mxu0 0
    %3575 = vmatpush1.bf16.msra.mxu0 %v3559
    %3576 = vmatprep.subr.bf16.mxu0 0
    %3577 = vmatpush1.bf16.msra.mxu0 %v3558
    %3578 = vmatprep.subr.bf16.mxu0 0
    %3579 = vmatpush1.bf16.msra.mxu0 %v3557
    %3580 = vmatprep.subr.bf16.mxu0 0
    %3581 = vmatpush1.bf16.msra.mxu0 %v3556
    %3582 = vmatprep.subr.bf16.mxu0 0
    %3583 = vmatpush1.bf16.msra.mxu0 %v3555
    %3584 = vmatprep.subr.bf16.mxu0 0
    %3585 = vmatpush1.bf16.msra.mxu0 %v3554
    %3586 = vmatprep.subr.bf16.mxu0 0
    %3587 = vmatpush2.bf16.msra.mxu0 0
    %3588 = vmatprep.subr.bf16.mxu0 0
    %3589 = vmatpush2.bf16.msra.mxu0 0
    %3590 = vmatprep.subr.bf16.mxu0 0
    %3591 = vmatpush2.bf16.msra.mxu0 0
    %3592 = vmatprep.subr.bf16.mxu0 0
    %3593 = vmatpush2.bf16.msra.mxu0 0
    %3594 = vmatprep.subr.bf16.mxu0 0
    %3595 = vmatpush2.bf16.msra.mxu0 0
    %3596 = vmatprep.subr.bf16.mxu0 0
    %3597 = vmatpush2.bf16.msra.mxu0 0
    %3598 = vmatprep.subr.bf16.mxu0 0
    %3599 = vmatpush2.bf16.msra.mxu0 0
    %3600 = vmatprep.subr.bf16.mxu0 0
    %3601 = vmatpush2.bf16.msra.mxu0 0
    %3602 = vmatprep.mubr.bf16.mxu0 0
    %3603 = vmatmul.mubr.bf16.gmra.mxu0 %v2627
    %v3604 = vpop.f32.mrf.mxu0
    %v3605 = vadd.f32 %v2877, %v3604
    %v3606 = vpop.f32.mrf.mxu0
    %v3607 = vpop.f32.mrf.mxu0
    %v3608 = vpop.f32.mrf.mxu0
    %3609 = vdwg.mxu0
    %v3626 = vunpack.c.l.b16 %v2757
    %v3627 = vunpack.c.l.b16 %v2758
    %v3628 = vunpack.c.l.b16 %v2759
    %v3629 = vunpack.c.l.b16 %v2760
    %v3630 = vunpack.c.l.b16 %v2761
    %v3631 = vunpack.c.l.b16 %v2762
    %v3632 = vunpack.c.l.b16 %v2763
    %v3633 = vunpack.c.l.b16 %v2764
    %v3634 = vunpack.c.l.b16 %v2765
    %v3635 = vunpack.c.l.b16 %v2766
    %v3636 = vunpack.c.l.b16 %v2767
    %v3637 = vunpack.c.l.b16 %v2768
    %v3638 = vunpack.c.l.b16 %v2769
    %v3639 = vunpack.c.l.b16 %v2770
    %v3640 = vunpack.c.l.b16 %v2771
    %v3641 = vunpack.c.l.b16 %v2772
    %v3642 = vpack.c.b16 %v3627, %v3626
    %v3643 = vpack.c.b16 %v3629, %v3628
    %v3644 = vpack.c.b16 %v3631, %v3630
    %v3645 = vpack.c.b16 %v3633, %v3632
    %v3646 = vpack.c.b16 %v3635, %v3634
    %v3647 = vpack.c.b16 %v3637, %v3636
    %v3648 = vpack.c.b16 %v3639, %v3638
    %v3649 = vpack.c.b16 %v3641, %v3640
    %3658 = vmatprep.subr.bf16.mxu0 0
    %3659 = vmatpush1.bf16.msra.mxu0 %v3649
    %3660 = vmatprep.subr.bf16.mxu0 0
    %3661 = vmatpush1.bf16.msra.mxu0 %v3648
    %3662 = vmatprep.subr.bf16.mxu0 0
    %3663 = vmatpush1.bf16.msra.mxu0 %v3647
    %3664 = vmatprep.subr.bf16.mxu0 0
    %3665 = vmatpush1.bf16.msra.mxu0 %v3646
    %3666 = vmatprep.subr.bf16.mxu0 0
    %3667 = vmatpush1.bf16.msra.mxu0 %v3645
    %3668 = vmatprep.subr.bf16.mxu0 0
    %3669 = vmatpush1.bf16.msra.mxu0 %v3644
    %3670 = vmatprep.subr.bf16.mxu0 0
    %3671 = vmatpush1.bf16.msra.mxu0 %v3643
    %3672 = vmatprep.subr.bf16.mxu0 0
    %3673 = vmatpush1.bf16.msra.mxu0 %v3642
    %3674 = vmatprep.subr.bf16.mxu0 0
    %3675 = vmatpush2.bf16.msra.mxu0 0
    %3676 = vmatprep.subr.bf16.mxu0 0
    %3677 = vmatpush2.bf16.msra.mxu0 0
    %3678 = vmatprep.subr.bf16.mxu0 0
    %3679 = vmatpush2.bf16.msra.mxu0 0
    %3680 = vmatprep.subr.bf16.mxu0 0
    %3681 = vmatpush2.bf16.msra.mxu0 0
    %3682 = vmatprep.subr.bf16.mxu0 0
    %3683 = vmatpush2.bf16.msra.mxu0 0
    %3684 = vmatprep.subr.bf16.mxu0 0
    %3685 = vmatpush2.bf16.msra.mxu0 0
    %3686 = vmatprep.subr.bf16.mxu0 0
    %3687 = vmatpush2.bf16.msra.mxu0 0
    %3688 = vmatprep.subr.bf16.mxu0 0
    %3689 = vmatpush2.bf16.msra.mxu0 0
    %3690 = vmatprep.mubr.bf16.mxu0 0
    %3691 = vmatmul.mubr.bf16.gmra.mxu0 %v2627
    %v3692 = vpop.f32.mrf.mxu0
    %v3693 = vadd.f32 %v2881, %v3692
    %v3694 = vpop.f32.mrf.mxu0
    %v3695 = vpop.f32.mrf.mxu0
    %v3696 = vpop.f32.mrf.mxu0
    %3697 = vdwg.mxu0
    %v3714 = vunpack.c.l.b16 %v2773
    %v3715 = vunpack.c.l.b16 %v2774
    %v3716 = vunpack.c.l.b16 %v2775
    %v3717 = vunpack.c.l.b16 %v2776
    %v3718 = vunpack.c.l.b16 %v2777
    %v3719 = vunpack.c.l.b16 %v2778
    %v3720 = vunpack.c.l.b16 %v2779
    %v3721 = vunpack.c.l.b16 %v2780
    %v3722 = vunpack.c.l.b16 %v2781
    %v3723 = vunpack.c.l.b16 %v2782
    %v3724 = vunpack.c.l.b16 %v2783
    %v3725 = vunpack.c.l.b16 %v2784
    %v3726 = vunpack.c.l.b16 %v2785
    %v3727 = vunpack.c.l.b16 %v2786
    %v3728 = vunpack.c.l.b16 %v2787
    %v3729 = vunpack.c.l.b16 %v2788
    %v3730 = vpack.c.b16 %v3715, %v3714
    %v3731 = vpack.c.b16 %v3717, %v3716
    %v3732 = vpack.c.b16 %v3719, %v3718
    %v3733 = vpack.c.b16 %v3721, %v3720
    %v3734 = vpack.c.b16 %v3723, %v3722
    %v3735 = vpack.c.b16 %v3725, %v3724
    %v3736 = vpack.c.b16 %v3727, %v3726
    %v3737 = vpack.c.b16 %v3729, %v3728
    %3746 = vmatprep.subr.bf16.mxu0 0
    %3747 = vmatpush1.bf16.msra.mxu0 %v3737
    %3748 = vmatprep.subr.bf16.mxu0 0
    %3749 = vmatpush1.bf16.msra.mxu0 %v3736
    %3750 = vmatprep.subr.bf16.mxu0 0
    %3751 = vmatpush1.bf16.msra.mxu0 %v3735
    %3752 = vmatprep.subr.bf16.mxu0 0
    %3753 = vmatpush1.bf16.msra.mxu0 %v3734
    %3754 = vmatprep.subr.bf16.mxu0 0
    %3755 = vmatpush1.bf16.msra.mxu0 %v3733
    %3756 = vmatprep.subr.bf16.mxu0 0
    %3757 = vmatpush1.bf16.msra.mxu0 %v3732
    %3758 = vmatprep.subr.bf16.mxu0 0
    %3759 = vmatpush1.bf16.msra.mxu0 %v3731
    %3760 = vmatprep.subr.bf16.mxu0 0
    %3761 = vmatpush1.bf16.msra.mxu0 %v3730
    %3762 = vmatprep.subr.bf16.mxu0 0
    %3763 = vmatpush2.bf16.msra.mxu0 0
    %3764 = vmatprep.subr.bf16.mxu0 0
    %3765 = vmatpush2.bf16.msra.mxu0 0
    %3766 = vmatprep.subr.bf16.mxu0 0
    %3767 = vmatpush2.bf16.msra.mxu0 0
    %3768 = vmatprep.subr.bf16.mxu0 0
    %3769 = vmatpush2.bf16.msra.mxu0 0
    %3770 = vmatprep.subr.bf16.mxu0 0
    %3771 = vmatpush2.bf16.msra.mxu0 0
    %3772 = vmatprep.subr.bf16.mxu0 0
    %3773 = vmatpush2.bf16.msra.mxu0 0
    %3774 = vmatprep.subr.bf16.mxu0 0
    %3775 = vmatpush2.bf16.msra.mxu0 0
    %3776 = vmatprep.subr.bf16.mxu0 0
    %3777 = vmatpush2.bf16.msra.mxu0 0
    %3778 = vmatprep.mubr.bf16.mxu0 0
    %3779 = vmatmul.mubr.bf16.gmra.mxu0 %v2627
    %v3780 = vpop.f32.mrf.mxu0
    %v3781 = vadd.f32 %v2885, %v3780
    %v3782 = vpop.f32.mrf.mxu0
    %v3783 = vpop.f32.mrf.mxu0
    %v3784 = vpop.f32.mrf.mxu0
    %3785 = vdwg.mxu0
    %v3802 = vunpack.c.l.b16 %v2789
    %v3803 = vunpack.c.l.b16 %v2790
    %v3804 = vunpack.c.l.b16 %v2791
    %v3805 = vunpack.c.l.b16 %v2792
    %v3806 = vunpack.c.l.b16 %v2793
    %v3807 = vunpack.c.l.b16 %v2794
    %v3808 = vunpack.c.l.b16 %v2795
    %v3809 = vunpack.c.l.b16 %v2796
    %v3810 = vunpack.c.l.b16 %v2797
    %v3811 = vunpack.c.l.b16 %v2798
    %v3812 = vunpack.c.l.b16 %v2799
    %v3813 = vunpack.c.l.b16 %v2800
    %v3814 = vunpack.c.l.b16 %v2801
    %v3815 = vunpack.c.l.b16 %v2802
    %v3816 = vunpack.c.l.b16 %v2803
    %v3817 = vunpack.c.l.b16 %v2804
    %v3818 = vpack.c.b16 %v3803, %v3802
    %v3819 = vpack.c.b16 %v3805, %v3804
    %v3820 = vpack.c.b16 %v3807, %v3806
    %v3821 = vpack.c.b16 %v3809, %v3808
    %v3822 = vpack.c.b16 %v3811, %v3810
    %v3823 = vpack.c.b16 %v3813, %v3812
    %v3824 = vpack.c.b16 %v3815, %v3814
    %v3825 = vpack.c.b16 %v3817, %v3816
    %3834 = vmatprep.subr.bf16.mxu0 0
    %3835 = vmatpush1.bf16.msra.mxu0 %v3825
    %3836 = vmatprep.subr.bf16.mxu0 0
    %3837 = vmatpush1.bf16.msra.mxu0 %v3824
    %3838 = vmatprep.subr.bf16.mxu0 0
    %3839 = vmatpush1.bf16.msra.mxu0 %v3823
    %3840 = vmatprep.subr.bf16.mxu0 0
    %3841 = vmatpush1.bf16.msra.mxu0 %v3822
    %3842 = vmatprep.subr.bf16.mxu0 0
    %3843 = vmatpush1.bf16.msra.mxu0 %v3821
    %3844 = vmatprep.subr.bf16.mxu0 0
    %3845 = vmatpush1.bf16.msra.mxu0 %v3820
    %3846 = vmatprep.subr.bf16.mxu0 0
    %3847 = vmatpush1.bf16.msra.mxu0 %v3819
    %3848 = vmatprep.subr.bf16.mxu0 0
    %3849 = vmatpush1.bf16.msra.mxu0 %v3818
    %3850 = vmatprep.subr.bf16.mxu0 0
    %3851 = vmatpush2.bf16.msra.mxu0 0
    %3852 = vmatprep.subr.bf16.mxu0 0
    %3853 = vmatpush2.bf16.msra.mxu0 0
    %3854 = vmatprep.subr.bf16.mxu0 0
    %3855 = vmatpush2.bf16.msra.mxu0 0
    %3856 = vmatprep.subr.bf16.mxu0 0
    %3857 = vmatpush2.bf16.msra.mxu0 0
    %3858 = vmatprep.subr.bf16.mxu0 0
    %3859 = vmatpush2.bf16.msra.mxu0 0
    %3860 = vmatprep.subr.bf16.mxu0 0
    %3861 = vmatpush2.bf16.msra.mxu0 0
    %3862 = vmatprep.subr.bf16.mxu0 0
    %3863 = vmatpush2.bf16.msra.mxu0 0
    %3864 = vmatprep.subr.bf16.mxu0 0
    %3865 = vmatpush2.bf16.msra.mxu0 0
    %3866 = vmatprep.mubr.bf16.mxu0 0
    %3867 = vmatmul.mubr.bf16.gmra.mxu0 %v2627
    %v3868 = vpop.f32.mrf.mxu0
    %v3869 = vadd.f32 %v2889, %v3868
    %v3870 = vpop.f32.mrf.mxu0
    %v3871 = vpop.f32.mrf.mxu0
    %v3872 = vpop.f32.mrf.mxu0
    %3873 = vdwg.mxu0
    %v3890 = vunpack.c.l.b16 %v2805
    %v3891 = vunpack.c.l.b16 %v2806
    %v3892 = vunpack.c.l.b16 %v2807
    %v3893 = vunpack.c.l.b16 %v2808
    %v3894 = vunpack.c.l.b16 %v2809
    %v3895 = vunpack.c.l.b16 %v2810
    %v3896 = vunpack.c.l.b16 %v2811
    %v3897 = vunpack.c.l.b16 %v2812
    %v3898 = vunpack.c.l.b16 %v2813
    %v3899 = vunpack.c.l.b16 %v2814
    %v3900 = vunpack.c.l.b16 %v2815
    %v3901 = vunpack.c.l.b16 %v2816
    %v3902 = vunpack.c.l.b16 %v2817
    %v3903 = vunpack.c.l.b16 %v2818
    %v3904 = vunpack.c.l.b16 %v2819
    %v3905 = vunpack.c.l.b16 %v2820
    %v3906 = vpack.c.b16 %v3891, %v3890
    %v3907 = vpack.c.b16 %v3893, %v3892
    %v3908 = vpack.c.b16 %v3895, %v3894
    %v3909 = vpack.c.b16 %v3897, %v3896
    %v3910 = vpack.c.b16 %v3899, %v3898
    %v3911 = vpack.c.b16 %v3901, %v3900
    %v3912 = vpack.c.b16 %v3903, %v3902
    %v3913 = vpack.c.b16 %v3905, %v3904
    %3922 = vmatprep.subr.bf16.mxu0 0
    %3923 = vmatpush1.bf16.msra.mxu0 %v3913
    %3924 = vmatprep.subr.bf16.mxu0 0
    %3925 = vmatpush1.bf16.msra.mxu0 %v3912
    %3926 = vmatprep.subr.bf16.mxu0 0
    %3927 = vmatpush1.bf16.msra.mxu0 %v3911
    %3928 = vmatprep.subr.bf16.mxu0 0
    %3929 = vmatpush1.bf16.msra.mxu0 %v3910
    %3930 = vmatprep.subr.bf16.mxu0 0
    %3931 = vmatpush1.bf16.msra.mxu0 %v3909
    %3932 = vmatprep.subr.bf16.mxu0 0
    %3933 = vmatpush1.bf16.msra.mxu0 %v3908
    %3934 = vmatprep.subr.bf16.mxu0 0
    %3935 = vmatpush1.bf16.msra.mxu0 %v3907
    %3936 = vmatprep.subr.bf16.mxu0 0
    %3937 = vmatpush1.bf16.msra.mxu0 %v3906
    %3938 = vmatprep.subr.bf16.mxu0 0
    %3939 = vmatpush2.bf16.msra.mxu0 0
    %3940 = vmatprep.subr.bf16.mxu0 0
    %3941 = vmatpush2.bf16.msra.mxu0 0
    %3942 = vmatprep.subr.bf16.mxu0 0
    %3943 = vmatpush2.bf16.msra.mxu0 0
    %3944 = vmatprep.subr.bf16.mxu0 0
    %3945 = vmatpush2.bf16.msra.mxu0 0
    %3946 = vmatprep.subr.bf16.mxu0 0
    %3947 = vmatpush2.bf16.msra.mxu0 0
    %3948 = vmatprep.subr.bf16.mxu0 0
    %3949 = vmatpush2.bf16.msra.mxu0 0
    %3950 = vmatprep.subr.bf16.mxu0 0
    %3951 = vmatpush2.bf16.msra.mxu0 0
    %3952 = vmatprep.subr.bf16.mxu0 0
    %3953 = vmatpush2.bf16.msra.mxu0 0
    %3954 = vmatprep.mubr.bf16.mxu0 0
    %3955 = vmatmul.mubr.bf16.gmra.mxu0 %v2627
    %v3956 = vpop.f32.mrf.mxu0
    %v3957 = vadd.f32 %v2893, %v3956
    %v3958 = vpop.f32.mrf.mxu0
    %v3959 = vpop.f32.mrf.mxu0
    %v3960 = vpop.f32.mrf.mxu0
    %3961 = vdwg.mxu0
    %v3962 = vpack.c.bf16 %v2989, %v2989
    %v3963 = vpack.c.bf16 %v3077, %v3077
    %v3964 = vpack.c.bf16 %v3165, %v3165
    %v3965 = vpack.c.bf16 %v3253, %v3253
    %v3966 = vpack.c.bf16 %v3341, %v3341
    %v3967 = vpack.c.bf16 %v3429, %v3429
    %v3968 = vpack.c.bf16 %v3517, %v3517
    %v3969 = vpack.c.bf16 %v3605, %v3605
    %v3970 = vpack.c.bf16 %v3693, %v3693
    %v3971 = vpack.c.bf16 %v3781, %v3781
    %v3972 = vpack.c.bf16 %v3869, %v3869
    %v3973 = vpack.c.bf16 %v3957, %v3957
    %v3975 = vsel %vm1556, %v3962, 0
    %v3978 = vsel %vm1556, %v3966, 0
    %3980 = vmatprep.subr.bf16.mxu0 0
    %3981 = vmatpush1.bf16.xpose.msra.mxu0 0
    %3982 = vmatprep.subr.bf16.mxu0 0
    %3983 = vmatpush1.bf16.xpose.msra.mxu0 0
    %3984 = vmatprep.subr.bf16.mxu0 0
    %3985 = vmatpush1.bf16.xpose.msra.mxu0 0
    %3986 = vmatprep.subr.bf16.mxu0 0
    %3987 = vmatpush1.bf16.xpose.msra.mxu0 0
    %3988 = vmatprep.subr.bf16.mxu0 0
    %3989 = vmatpush1.bf16.xpose.msra.mxu0 0
    %3990 = vmatprep.subr.bf16.mxu0 0
    %3991 = vmatpush1.bf16.xpose.msra.mxu0 0
    %3992 = vmatprep.subr.bf16.mxu0 0
    %3993 = vmatpush1.bf16.xpose.msra.mxu0 0
    %3994 = vmatprep.subr.bf16.mxu0 0
    %3995 = vmatpush1.bf16.xpose.msra.mxu0 %v3978
    %3996 = vmatprep.subr.bf16.mxu0 0
    %3997 = vmatpush2.bf16.xpose.msra.mxu0 0
    %3998 = vmatprep.subr.bf16.mxu0 0
    %3999 = vmatpush2.bf16.xpose.msra.mxu0 0
    %4000 = vmatprep.subr.bf16.mxu0 0
    %4001 = vmatpush2.bf16.xpose.msra.mxu0 0
    %4002 = vmatprep.subr.bf16.mxu0 0
    %4003 = vmatpush2.bf16.xpose.msra.mxu0 0
    %4004 = vmatprep.subr.bf16.mxu0 0
    %4005 = vmatpush2.bf16.xpose.msra.mxu0 0
    %4006 = vmatprep.subr.bf16.mxu0 0
    %4007 = vmatpush2.bf16.xpose.msra.mxu0 0
    %4008 = vmatprep.subr.bf16.mxu0 0
    %4009 = vmatpush2.bf16.xpose.msra.mxu0 0
    %4010 = vmatprep.subr.bf16.mxu0 0
    %4011 = vmatpush2.bf16.xpose.msra.mxu0 0
    %4012 = vmatprep.mubr.bf16.mxu0 0
    %4013 = vmatmul.mubr.bf16.gmra.mxu0 %v3975
    %v4014 = vpop.f32.mrf.mxu0
    %v4015 = vadd.f32 0.0, %v4014
    %v4016 = vpop.f32.mrf.mxu0
    %v4017 = vpop.f32.mrf.mxu0
    %v4018 = vpop.f32.mrf.mxu0
    %4019 = vdwg.mxu0
    %v4021 = vsel %vm1556, %v3963, 0
    %v4024 = vsel %vm1556, %v3967, 0
    %4026 = vmatprep.subr.bf16.mxu0 0
    %4027 = vmatpush1.bf16.xpose.msra.mxu0 0
    %4028 = vmatprep.subr.bf16.mxu0 0
    %4029 = vmatpush1.bf16.xpose.msra.mxu0 0
    %4030 = vmatprep.subr.bf16.mxu0 0
    %4031 = vmatpush1.bf16.xpose.msra.mxu0 0
    %4032 = vmatprep.subr.bf16.mxu0 0
    %4033 = vmatpush1.bf16.xpose.msra.mxu0 0
    %4034 = vmatprep.subr.bf16.mxu0 0
    %4035 = vmatpush1.bf16.xpose.msra.mxu0 0
    %4036 = vmatprep.subr.bf16.mxu0 0
    %4037 = vmatpush1.bf16.xpose.msra.mxu0 0
    %4038 = vmatprep.subr.bf16.mxu0 0
    %4039 = vmatpush1.bf16.xpose.msra.mxu0 0
    %4040 = vmatprep.subr.bf16.mxu0 0
    %4041 = vmatpush1.bf16.xpose.msra.mxu0 %v4024
    %4042 = vmatprep.subr.bf16.mxu0 0
    %4043 = vmatpush2.bf16.xpose.msra.mxu0 0
    %4044 = vmatprep.subr.bf16.mxu0 0
    %4045 = vmatpush2.bf16.xpose.msra.mxu0 0
    %4046 = vmatprep.subr.bf16.mxu0 0
    %4047 = vmatpush2.bf16.xpose.msra.mxu0 0
    %4048 = vmatprep.subr.bf16.mxu0 0
    %4049 = vmatpush2.bf16.xpose.msra.mxu0 0
    %4050 = vmatprep.subr.bf16.mxu0 0
    %4051 = vmatpush2.bf16.xpose.msra.mxu0 0
    %4052 = vmatprep.subr.bf16.mxu0 0
    %4053 = vmatpush2.bf16.xpose.msra.mxu0 0
    %4054 = vmatprep.subr.bf16.mxu0 0
    %4055 = vmatpush2.bf16.xpose.msra.mxu0 0
    %4056 = vmatprep.subr.bf16.mxu0 0
    %4057 = vmatpush2.bf16.xpose.msra.mxu0 0
    %4058 = vmatprep.mubr.bf16.mxu0 0
    %4059 = vmatmul.mubr.bf16.gmra.mxu0 %v4021
    %v4060 = vpop.f32.mrf.mxu0
    %v4061 = vadd.f32 0.0, %v4060
    %v4062 = vpop.f32.mrf.mxu0
    %v4063 = vpop.f32.mrf.mxu0
    %v4064 = vpop.f32.mrf.mxu0
    %4065 = vdwg.mxu0
    %v4067 = vsel %vm1556, %v3964, 0
    %v4070 = vsel %vm1556, %v3968, 0
    %4072 = vmatprep.subr.bf16.mxu0 0
    %4073 = vmatpush1.bf16.xpose.msra.mxu0 0
    %4074 = vmatprep.subr.bf16.mxu0 0
    %4075 = vmatpush1.bf16.xpose.msra.mxu0 0
    %4076 = vmatprep.subr.bf16.mxu0 0
    %4077 = vmatpush1.bf16.xpose.msra.mxu0 0
    %4078 = vmatprep.subr.bf16.mxu0 0
    %4079 = vmatpush1.bf16.xpose.msra.mxu0 0
    %4080 = vmatprep.subr.bf16.mxu0 0
    %4081 = vmatpush1.bf16.xpose.msra.mxu0 0
    %4082 = vmatprep.subr.bf16.mxu0 0
    %4083 = vmatpush1.bf16.xpose.msra.mxu0 0
    %4084 = vmatprep.subr.bf16.mxu0 0
    %4085 = vmatpush1.bf16.xpose.msra.mxu0 0
    %4086 = vmatprep.subr.bf16.mxu0 0
    %4087 = vmatpush1.bf16.xpose.msra.mxu0 %v4070
    %4088 = vmatprep.subr.bf16.mxu0 0
    %4089 = vmatpush2.bf16.xpose.msra.mxu0 0
    %4090 = vmatprep.subr.bf16.mxu0 0
    %4091 = vmatpush2.bf16.xpose.msra.mxu0 0
    %4092 = vmatprep.subr.bf16.mxu0 0
    %4093 = vmatpush2.bf16.xpose.msra.mxu0 0
    %4094 = vmatprep.subr.bf16.mxu0 0
    %4095 = vmatpush2.bf16.xpose.msra.mxu0 0
    %4096 = vmatprep.subr.bf16.mxu0 0
    %4097 = vmatpush2.bf16.xpose.msra.mxu0 0
    %4098 = vmatprep.subr.bf16.mxu0 0
    %4099 = vmatpush2.bf16.xpose.msra.mxu0 0
    %4100 = vmatprep.subr.bf16.mxu0 0
    %4101 = vmatpush2.bf16.xpose.msra.mxu0 0
    %4102 = vmatprep.subr.bf16.mxu0 0
    %4103 = vmatpush2.bf16.xpose.msra.mxu0 0
    %4104 = vmatprep.mubr.bf16.mxu0 0
    %4105 = vmatmul.mubr.bf16.gmra.mxu0 %v4067
    %v4106 = vpop.f32.mrf.mxu0
    %v4107 = vadd.f32 0.0, %v4106
    %v4108 = vpop.f32.mrf.mxu0
    %v4109 = vpop.f32.mrf.mxu0
    %v4110 = vpop.f32.mrf.mxu0
    %4111 = vdwg.mxu0
    %v4113 = vsel %vm1556, %v3965, 0
    %v4116 = vsel %vm1556, %v3969, 0
    %4118 = vmatprep.subr.bf16.mxu0 0
    %4119 = vmatpush1.bf16.xpose.msra.mxu0 0
    %4120 = vmatprep.subr.bf16.mxu0 0
    %4121 = vmatpush1.bf16.xpose.msra.mxu0 0
    %4122 = vmatprep.subr.bf16.mxu0 0
    %4123 = vmatpush1.bf16.xpose.msra.mxu0 0
    %4124 = vmatprep.subr.bf16.mxu0 0
    %4125 = vmatpush1.bf16.xpose.msra.mxu0 0
    %4126 = vmatprep.subr.bf16.mxu0 0
    %4127 = vmatpush1.bf16.xpose.msra.mxu0 0
    %4128 = vmatprep.subr.bf16.mxu0 0
    %4129 = vmatpush1.bf16.xpose.msra.mxu0 0
    %4130 = vmatprep.subr.bf16.mxu0 0
    %4131 = vmatpush1.bf16.xpose.msra.mxu0 0
    %4132 = vmatprep.subr.bf16.mxu0 0
    %4133 = vmatpush1.bf16.xpose.msra.mxu0 %v4116
    %4134 = vmatprep.subr.bf16.mxu0 0
    %4135 = vmatpush2.bf16.xpose.msra.mxu0 0
    %4136 = vmatprep.subr.bf16.mxu0 0
    %4137 = vmatpush2.bf16.xpose.msra.mxu0 0
    %4138 = vmatprep.subr.bf16.mxu0 0
    %4139 = vmatpush2.bf16.xpose.msra.mxu0 0
    %4140 = vmatprep.subr.bf16.mxu0 0
    %4141 = vmatpush2.bf16.xpose.msra.mxu0 0
    %4142 = vmatprep.subr.bf16.mxu0 0
    %4143 = vmatpush2.bf16.xpose.msra.mxu0 0
    %4144 = vmatprep.subr.bf16.mxu0 0
    %4145 = vmatpush2.bf16.xpose.msra.mxu0 0
    %4146 = vmatprep.subr.bf16.mxu0 0
    %4147 = vmatpush2.bf16.xpose.msra.mxu0 0
    %4148 = vmatprep.subr.bf16.mxu0 0
    %4149 = vmatpush2.bf16.xpose.msra.mxu0 0
    %4150 = vmatprep.mubr.bf16.mxu0 0
    %4151 = vmatmul.mubr.bf16.gmra.mxu0 %v4113
    %v4152 = vpop.f32.mrf.mxu0
    %v4153 = vadd.f32 0.0, %v4152
    %v4154 = vpop.f32.mrf.mxu0
    %v4155 = vpop.f32.mrf.mxu0
    %v4156 = vpop.f32.mrf.mxu0
    %4157 = vdwg.mxu0
    %v4158 = vsel %vm1741, %v4015, -inf
    %4159 = vmax.xlane.f32.xlu0 %v4158
    %v4160 = vpop.xlane.xlu0 %4159
    %v4161 = vsel %vm1741, %v4061, -inf
    %4162 = vmax.xlane.f32.xlu0 %v4161
    %v4163 = vpop.xlane.xlu0 %4162
    %v4164 = vsel %vm1741, %v4107, -inf
    %4165 = vmax.xlane.f32.xlu0 %v4164
    %v4166 = vpop.xlane.xlu0 %4165
    %v4167 = vsel %vm1741, %v4153, -inf
    %4168 = vmax.xlane.f32.xlu0 %v4167
    %v4169 = vpop.xlane.xlu0 %4168
    %v4170 = vsub.f32 %v4015, %v4160
    %v4171 = vsub.f32 %v4061, %v4163
    %v4172 = vsub.f32 %v4107, %v4166
    %v4173 = vsub.f32 %v4153, %v4169
    %v4174 = vmul.f32 %v4170, 1.442695
    %v4175 = vpow.pop %v4174
    %v4176 = vmul.f32 %v4171, 1.442695
    %v4177 = vpow.pop %v4176
    %v4178 = vmul.f32 %v4172, 1.442695
    %v4179 = vpow.pop %v4178
    %v4180 = vmul.f32 %v4173, 1.442695
    %v4181 = vpow.pop %v4180
    %v4182 = vsel %vm1741, %v4175, 0.0
    %4183 = vadd.xlane.f32.xlu0 %v4182
    %v4184 = vpop.xlane.xlu0 %4183
    %v4185 = vsel %vm1741, %v4177, 0.0
    %4186 = vadd.xlane.f32.xlu0 %v4185
    %v4187 = vpop.xlane.xlu0 %4186
    %v4188 = vsel %vm1741, %v4179, 0.0
    %4189 = vadd.xlane.f32.xlu0 %v4188
    %v4190 = vpop.xlane.xlu0 %4189
    %v4191 = vsel %vm1741, %v4181, 0.0
    %4192 = vadd.xlane.f32.xlu0 %v4191
    %v4193 = vpop.xlane.xlu0 %4192
    %v4194 = vrcp.pop %v4184
    %v4195 = vrcp.pop %v4187
    %v4196 = vrcp.pop %v4190
    %v4197 = vrcp.pop %v4193
    %v4198 = vmul.f32 %v4175, %v4194
    %v4199 = vmul.f32 %v4177, %v4195
    %v4200 = vmul.f32 %v4179, %v4196
    %v4201 = vmul.f32 %v4181, %v4197
    %v4202 = vpack.c.bf16 %v4198, %v4198
    %v4203 = vpack.c.bf16 %v4199, %v4199
    %v4204 = vpack.c.bf16 %v4200, %v4200
    %v4205 = vpack.c.bf16 %v4201, %v4201
    %v4207 = vsel %vm1741, %v4202, 0
    %v4210 = vsel %vm1793, %v3970, 0
    %4212 = vmatprep.subr.bf16.mxu0 0
    %4213 = vmatpush1.bf16.msra.mxu0 0
    %4214 = vmatprep.subr.bf16.mxu0 0
    %4215 = vmatpush1.bf16.msra.mxu0 0
    %4216 = vmatprep.subr.bf16.mxu0 0
    %4217 = vmatpush1.bf16.msra.mxu0 0
    %4218 = vmatprep.subr.bf16.mxu0 0
    %4219 = vmatpush1.bf16.msra.mxu0 0
    %4220 = vmatprep.subr.bf16.mxu0 0
    %4221 = vmatpush1.bf16.msra.mxu0 0
    %4222 = vmatprep.subr.bf16.mxu0 0
    %4223 = vmatpush1.bf16.msra.mxu0 0
    %4224 = vmatprep.subr.bf16.mxu0 0
    %4225 = vmatpush1.bf16.msra.mxu0 0
    %4226 = vmatprep.subr.bf16.mxu0 0
    %4227 = vmatpush1.bf16.msra.mxu0 %v4210
    %4228 = vmatprep.subr.bf16.mxu0 0
    %4229 = vmatpush2.bf16.msra.mxu0 0
    %4230 = vmatprep.subr.bf16.mxu0 0
    %4231 = vmatpush2.bf16.msra.mxu0 0
    %4232 = vmatprep.subr.bf16.mxu0 0
    %4233 = vmatpush2.bf16.msra.mxu0 0
    %4234 = vmatprep.subr.bf16.mxu0 0
    %4235 = vmatpush2.bf16.msra.mxu0 0
    %4236 = vmatprep.subr.bf16.mxu0 0
    %4237 = vmatpush2.bf16.msra.mxu0 0
    %4238 = vmatprep.subr.bf16.mxu0 0
    %4239 = vmatpush2.bf16.msra.mxu0 0
    %4240 = vmatprep.subr.bf16.mxu0 0
    %4241 = vmatpush2.bf16.msra.mxu0 0
    %4242 = vmatprep.subr.bf16.mxu0 0
    %4243 = vmatpush2.bf16.msra.mxu0 0
    %4244 = vmatprep.mubr.bf16.mxu0 0
    %4245 = vmatmul.mubr.bf16.gmra.mxu0 %v4207
    %v4246 = vpop.f32.mrf.mxu0
    %v4247 = vadd.f32 0.0, %v4246
    %v4248 = vpop.f32.mrf.mxu0
    %v4249 = vpop.f32.mrf.mxu0
    %v4250 = vpop.f32.mrf.mxu0
    %4251 = vdwg.mxu0
    %v4253 = vsel %vm1741, %v4203, 0
    %v4256 = vsel %vm1793, %v3971, 0
    %4258 = vmatprep.subr.bf16.mxu0 0
    %4259 = vmatpush1.bf16.msra.mxu0 0
    %4260 = vmatprep.subr.bf16.mxu0 0
    %4261 = vmatpush1.bf16.msra.mxu0 0
    %4262 = vmatprep.subr.bf16.mxu0 0
    %4263 = vmatpush1.bf16.msra.mxu0 0
    %4264 = vmatprep.subr.bf16.mxu0 0
    %4265 = vmatpush1.bf16.msra.mxu0 0
    %4266 = vmatprep.subr.bf16.mxu0 0
    %4267 = vmatpush1.bf16.msra.mxu0 0
    %4268 = vmatprep.subr.bf16.mxu0 0
    %4269 = vmatpush1.bf16.msra.mxu0 0
    %4270 = vmatprep.subr.bf16.mxu0 0
    %4271 = vmatpush1.bf16.msra.mxu0 0
    %4272 = vmatprep.subr.bf16.mxu0 0
    %4273 = vmatpush1.bf16.msra.mxu0 %v4256
    %4274 = vmatprep.subr.bf16.mxu0 0
    %4275 = vmatpush2.bf16.msra.mxu0 0
    %4276 = vmatprep.subr.bf16.mxu0 0
    %4277 = vmatpush2.bf16.msra.mxu0 0
    %4278 = vmatprep.subr.bf16.mxu0 0
    %4279 = vmatpush2.bf16.msra.mxu0 0
    %4280 = vmatprep.subr.bf16.mxu0 0
    %4281 = vmatpush2.bf16.msra.mxu0 0
    %4282 = vmatprep.subr.bf16.mxu0 0
    %4283 = vmatpush2.bf16.msra.mxu0 0
    %4284 = vmatprep.subr.bf16.mxu0 0
    %4285 = vmatpush2.bf16.msra.mxu0 0
    %4286 = vmatprep.subr.bf16.mxu0 0
    %4287 = vmatpush2.bf16.msra.mxu0 0
    %4288 = vmatprep.subr.bf16.mxu0 0
    %4289 = vmatpush2.bf16.msra.mxu0 0
    %4290 = vmatprep.mubr.bf16.mxu0 0
    %4291 = vmatmul.mubr.bf16.gmra.mxu0 %v4253
    %v4292 = vpop.f32.mrf.mxu0
    %v4293 = vadd.f32 0.0, %v4292
    %v4294 = vpop.f32.mrf.mxu0
    %v4295 = vpop.f32.mrf.mxu0
    %v4296 = vpop.f32.mrf.mxu0
    %4297 = vdwg.mxu0
    %v4299 = vsel %vm1741, %v4204, 0
    %v4302 = vsel %vm1793, %v3972, 0
    %4304 = vmatprep.subr.bf16.mxu0 0
    %4305 = vmatpush1.bf16.msra.mxu0 0
    %4306 = vmatprep.subr.bf16.mxu0 0
    %4307 = vmatpush1.bf16.msra.mxu0 0
    %4308 = vmatprep.subr.bf16.mxu0 0
    %4309 = vmatpush1.bf16.msra.mxu0 0
    %4310 = vmatprep.subr.bf16.mxu0 0
    %4311 = vmatpush1.bf16.msra.mxu0 0
    %4312 = vmatprep.subr.bf16.mxu0 0
    %4313 = vmatpush1.bf16.msra.mxu0 0
    %4314 = vmatprep.subr.bf16.mxu0 0
    %4315 = vmatpush1.bf16.msra.mxu0 0
    %4316 = vmatprep.subr.bf16.mxu0 0
    %4317 = vmatpush1.bf16.msra.mxu0 0
    %4318 = vmatprep.subr.bf16.mxu0 0
    %4319 = vmatpush1.bf16.msra.mxu0 %v4302
    %4320 = vmatprep.subr.bf16.mxu0 0
    %4321 = vmatpush2.bf16.msra.mxu0 0
    %4322 = vmatprep.subr.bf16.mxu0 0
    %4323 = vmatpush2.bf16.msra.mxu0 0
    %4324 = vmatprep.subr.bf16.mxu0 0
    %4325 = vmatpush2.bf16.msra.mxu0 0
    %4326 = vmatprep.subr.bf16.mxu0 0
    %4327 = vmatpush2.bf16.msra.mxu0 0
    %4328 = vmatprep.subr.bf16.mxu0 0
    %4329 = vmatpush2.bf16.msra.mxu0 0
    %4330 = vmatprep.subr.bf16.mxu0 0
    %4331 = vmatpush2.bf16.msra.mxu0 0
    %4332 = vmatprep.subr.bf16.mxu0 0
    %4333 = vmatpush2.bf16.msra.mxu0 0
    %4334 = vmatprep.subr.bf16.mxu0 0
    %4335 = vmatpush2.bf16.msra.mxu0 0
    %4336 = vmatprep.mubr.bf16.mxu0 0
    %4337 = vmatmul.mubr.bf16.gmra.mxu0 %v4299
    %v4338 = vpop.f32.mrf.mxu0
    %v4339 = vadd.f32 0.0, %v4338
    %v4340 = vpop.f32.mrf.mxu0
    %v4341 = vpop.f32.mrf.mxu0
    %v4342 = vpop.f32.mrf.mxu0
    %4343 = vdwg.mxu0
    %v4345 = vsel %vm1741, %v4205, 0
    %v4348 = vsel %vm1793, %v3973, 0
    %4350 = vmatprep.subr.bf16.mxu0 0
    %4351 = vmatpush1.bf16.msra.mxu0 0
    %4352 = vmatprep.subr.bf16.mxu0 0
    %4353 = vmatpush1.bf16.msra.mxu0 0
    %4354 = vmatprep.subr.bf16.mxu0 0
    %4355 = vmatpush1.bf16.msra.mxu0 0
    %4356 = vmatprep.subr.bf16.mxu0 0
    %4357 = vmatpush1.bf16.msra.mxu0 0
    %4358 = vmatprep.subr.bf16.mxu0 0
    %4359 = vmatpush1.bf16.msra.mxu0 0
    %4360 = vmatprep.subr.bf16.mxu0 0
    %4361 = vmatpush1.bf16.msra.mxu0 0
    %4362 = vmatprep.subr.bf16.mxu0 0
    %4363 = vmatpush1.bf16.msra.mxu0 0
    %4364 = vmatprep.subr.bf16.mxu0 0
    %4365 = vmatpush1.bf16.msra.mxu0 %v4348
    %4366 = vmatprep.subr.bf16.mxu0 0
    %4367 = vmatpush2.bf16.msra.mxu0 0
    %4368 = vmatprep.subr.bf16.mxu0 0
    %4369 = vmatpush2.bf16.msra.mxu0 0
    %4370 = vmatprep.subr.bf16.mxu0 0
    %4371 = vmatpush2.bf16.msra.mxu0 0
    %4372 = vmatprep.subr.bf16.mxu0 0
    %4373 = vmatpush2.bf16.msra.mxu0 0
    %4374 = vmatprep.subr.bf16.mxu0 0
    %4375 = vmatpush2.bf16.msra.mxu0 0
    %4376 = vmatprep.subr.bf16.mxu0 0
    %4377 = vmatpush2.bf16.msra.mxu0 0
    %4378 = vmatprep.subr.bf16.mxu0 0
    %4379 = vmatpush2.bf16.msra.mxu0 0
    %4380 = vmatprep.subr.bf16.mxu0 0
    %4381 = vmatpush2.bf16.msra.mxu0 0
    %4382 = vmatprep.mubr.bf16.mxu0 0
    %4383 = vmatmul.mubr.bf16.gmra.mxu0 %v4345
    %v4384 = vpop.f32.mrf.mxu0
    %v4385 = vadd.f32 0.0, %v4384
    %v4386 = vpop.f32.mrf.mxu0
    %v4387 = vpop.f32.mrf.mxu0
    %v4388 = vpop.f32.mrf.mxu0
    %4389 = vdwg.mxu0
    %v4390 = vpack.c.bf16 %v4247, %v4247
    %v4391 = vpack.c.bf16 %v4293, %v4293
    %v4392 = vpack.c.bf16 %v4339, %v4339
    %v4393 = vpack.c.bf16 %v4385, %v4385
    %s4394 = scalar_lea.vmem %s8, 64
    %v4395 = vld [vmem:[%s4394] sm:$0xf]
    %v4396 = vld [vmem:[%s4394 + $0x4] sm:$0xf]
    %v4397 = vld [vmem:[%s4394 + $0x8] sm:$0xf]
    %v4398 = vld [vmem:[%s4394 + $0xc] sm:$0xf]
    %v4399 = vld [vmem:[%s4394 + $0x10] sm:$0xf]
    %v4400 = vld [vmem:[%s4394 + $0x14] sm:$0xf]
    %v4401 = vld [vmem:[%s4394 + $0x18] sm:$0xf]
    %v4402 = vld [vmem:[%s4394 + $0x1c] sm:$0xf]
    %v4403 = vld [vmem:[%s4394 + $0x20] sm:$0xf]
    %v4404 = vld [vmem:[%s4394 + $0x24] sm:$0xf]
    %v4405 = vld [vmem:[%s4394 + $0x28] sm:$0xf]
    %v4406 = vld [vmem:[%s4394 + $0x2c] sm:$0xf]
    %v4407 = vld [vmem:[%s4394 + $0x30] sm:$0xf]
    %v4408 = vld [vmem:[%s4394 + $0x34] sm:$0xf]
    %v4409 = vld [vmem:[%s4394 + $0x38] sm:$0xf]
    %v4410 = vld [vmem:[%s4394 + $0x3c] sm:$0xf]
    %v4415 = vunpack.c.l.b16 %v4395
    %v4416 = vunpack.c.l.b16 %v4396
    %v4417 = vunpack.c.l.b16 %v4397
    %v4418 = vunpack.c.l.b16 %v4398
    %v4419 = vpack.c.b16 %v4416, %v4415
    %v4420 = vpack.c.b16 %v4418, %v4417
    %v4424 = vsel %vm1556, %v4390, 0
    %4426 = vmatprep.subr.bf16.mxu0 0
    %4427 = vmatpush1.bf16.msra.mxu0 0
    %4428 = vmatprep.subr.bf16.mxu0 0
    %4429 = vmatpush1.bf16.msra.mxu0 0
    %4430 = vmatprep.subr.bf16.mxu0 0
    %4431 = vmatpush1.bf16.msra.mxu0 0
    %4432 = vmatprep.subr.bf16.mxu0 0
    %4433 = vmatpush1.bf16.msra.mxu0 0
    %4434 = vmatprep.subr.bf16.mxu0 0
    %4435 = vmatpush1.bf16.msra.mxu0 0
    %4436 = vmatprep.subr.bf16.mxu0 0
    %4437 = vmatpush1.bf16.msra.mxu0 0
    %4438 = vmatprep.subr.bf16.mxu0 0
    %4439 = vmatpush1.bf16.msra.mxu0 %v4420
    %4440 = vmatprep.subr.bf16.mxu0 0
    %4441 = vmatpush1.bf16.msra.mxu0 %v4419
    %4442 = vmatprep.subr.bf16.mxu0 0
    %4443 = vmatpush2.bf16.msra.mxu0 0
    %4444 = vmatprep.subr.bf16.mxu0 0
    %4445 = vmatpush2.bf16.msra.mxu0 0
    %4446 = vmatprep.subr.bf16.mxu0 0
    %4447 = vmatpush2.bf16.msra.mxu0 0
    %4448 = vmatprep.subr.bf16.mxu0 0
    %4449 = vmatpush2.bf16.msra.mxu0 0
    %4450 = vmatprep.subr.bf16.mxu0 0
    %4451 = vmatpush2.bf16.msra.mxu0 0
    %4452 = vmatprep.subr.bf16.mxu0 0
    %4453 = vmatpush2.bf16.msra.mxu0 0
    %4454 = vmatprep.subr.bf16.mxu0 0
    %4455 = vmatpush2.bf16.msra.mxu0 0
    %4456 = vmatprep.subr.bf16.mxu0 0
    %4457 = vmatpush2.bf16.msra.mxu0 0
    %4458 = vmatprep.mubr.bf16.mxu0 0
    %4459 = vmatmul.mubr.bf16.gmra.mxu0 %v4424
    %v4460 = vpop.f32.mrf.mxu0
    %v4461 = vadd.f32 0.0, %v4460
    %v4462 = vpop.f32.mrf.mxu0
    %v4463 = vpop.f32.mrf.mxu0
    %v4464 = vpop.f32.mrf.mxu0
    %4465 = vdwg.mxu0
    %v4470 = vunpack.c.l.b16 %v4399
    %v4471 = vunpack.c.l.b16 %v4400
    %v4472 = vunpack.c.l.b16 %v4401
    %v4473 = vunpack.c.l.b16 %v4402
    %v4474 = vpack.c.b16 %v4471, %v4470
    %v4475 = vpack.c.b16 %v4473, %v4472
    %v4479 = vsel %vm1556, %v4391, 0
    %4481 = vmatprep.subr.bf16.mxu0 0
    %4482 = vmatpush1.bf16.msra.mxu0 0
    %4483 = vmatprep.subr.bf16.mxu0 0
    %4484 = vmatpush1.bf16.msra.mxu0 0
    %4485 = vmatprep.subr.bf16.mxu0 0
    %4486 = vmatpush1.bf16.msra.mxu0 0
    %4487 = vmatprep.subr.bf16.mxu0 0
    %4488 = vmatpush1.bf16.msra.mxu0 0
    %4489 = vmatprep.subr.bf16.mxu0 0
    %4490 = vmatpush1.bf16.msra.mxu0 0
    %4491 = vmatprep.subr.bf16.mxu0 0
    %4492 = vmatpush1.bf16.msra.mxu0 0
    %4493 = vmatprep.subr.bf16.mxu0 0
    %4494 = vmatpush1.bf16.msra.mxu0 %v4475
    %4495 = vmatprep.subr.bf16.mxu0 0
    %4496 = vmatpush1.bf16.msra.mxu0 %v4474
    %4497 = vmatprep.subr.bf16.mxu0 0
    %4498 = vmatpush2.bf16.msra.mxu0 0
    %4499 = vmatprep.subr.bf16.mxu0 0
    %4500 = vmatpush2.bf16.msra.mxu0 0
    %4501 = vmatprep.subr.bf16.mxu0 0
    %4502 = vmatpush2.bf16.msra.mxu0 0
    %4503 = vmatprep.subr.bf16.mxu0 0
    %4504 = vmatpush2.bf16.msra.mxu0 0
    %4505 = vmatprep.subr.bf16.mxu0 0
    %4506 = vmatpush2.bf16.msra.mxu0 0
    %4507 = vmatprep.subr.bf16.mxu0 0
    %4508 = vmatpush2.bf16.msra.mxu0 0
    %4509 = vmatprep.subr.bf16.mxu0 0
    %4510 = vmatpush2.bf16.msra.mxu0 0
    %4511 = vmatprep.subr.bf16.mxu0 0
    %4512 = vmatpush2.bf16.msra.mxu0 0
    %4513 = vmatprep.mubr.bf16.mxu0 0
    %4514 = vmatmul.mubr.bf16.gmra.mxu0 %v4479
    %v4515 = vpop.f32.mrf.mxu0
    %v4516 = vadd.f32 0.0, %v4515
    %v4517 = vpop.f32.mrf.mxu0
    %v4518 = vpop.f32.mrf.mxu0
    %v4519 = vpop.f32.mrf.mxu0
    %4520 = vdwg.mxu0
    %v4525 = vunpack.c.l.b16 %v4403
    %v4526 = vunpack.c.l.b16 %v4404
    %v4527 = vunpack.c.l.b16 %v4405
    %v4528 = vunpack.c.l.b16 %v4406
    %v4529 = vpack.c.b16 %v4526, %v4525
    %v4530 = vpack.c.b16 %v4528, %v4527
    %v4534 = vsel %vm1556, %v4392, 0
    %4536 = vmatprep.subr.bf16.mxu0 0
    %4537 = vmatpush1.bf16.msra.mxu0 0
    %4538 = vmatprep.subr.bf16.mxu0 0
    %4539 = vmatpush1.bf16.msra.mxu0 0
    %4540 = vmatprep.subr.bf16.mxu0 0
    %4541 = vmatpush1.bf16.msra.mxu0 0
    %4542 = vmatprep.subr.bf16.mxu0 0
    %4543 = vmatpush1.bf16.msra.mxu0 0
    %4544 = vmatprep.subr.bf16.mxu0 0
    %4545 = vmatpush1.bf16.msra.mxu0 0
    %4546 = vmatprep.subr.bf16.mxu0 0
    %4547 = vmatpush1.bf16.msra.mxu0 0
    %4548 = vmatprep.subr.bf16.mxu0 0
    %4549 = vmatpush1.bf16.msra.mxu0 %v4530
    %4550 = vmatprep.subr.bf16.mxu0 0
    %4551 = vmatpush1.bf16.msra.mxu0 %v4529
    %4552 = vmatprep.subr.bf16.mxu0 0
    %4553 = vmatpush2.bf16.msra.mxu0 0
    %4554 = vmatprep.subr.bf16.mxu0 0
    %4555 = vmatpush2.bf16.msra.mxu0 0
    %4556 = vmatprep.subr.bf16.mxu0 0
    %4557 = vmatpush2.bf16.msra.mxu0 0
    %4558 = vmatprep.subr.bf16.mxu0 0
    %4559 = vmatpush2.bf16.msra.mxu0 0
    %4560 = vmatprep.subr.bf16.mxu0 0
    %4561 = vmatpush2.bf16.msra.mxu0 0
    %4562 = vmatprep.subr.bf16.mxu0 0
    %4563 = vmatpush2.bf16.msra.mxu0 0
    %4564 = vmatprep.subr.bf16.mxu0 0
    %4565 = vmatpush2.bf16.msra.mxu0 0
    %4566 = vmatprep.subr.bf16.mxu0 0
    %4567 = vmatpush2.bf16.msra.mxu0 0
    %4568 = vmatprep.mubr.bf16.mxu0 0
    %4569 = vmatmul.mubr.bf16.gmra.mxu0 %v4534
    %v4570 = vpop.f32.mrf.mxu0
    %v4571 = vadd.f32 0.0, %v4570
    %v4572 = vpop.f32.mrf.mxu0
    %v4573 = vpop.f32.mrf.mxu0
    %v4574 = vpop.f32.mrf.mxu0
    %4575 = vdwg.mxu0
    %v4580 = vunpack.c.l.b16 %v4407
    %v4581 = vunpack.c.l.b16 %v4408
    %v4582 = vunpack.c.l.b16 %v4409
    %v4583 = vunpack.c.l.b16 %v4410
    %v4584 = vpack.c.b16 %v4581, %v4580
    %v4585 = vpack.c.b16 %v4583, %v4582
    %v4589 = vsel %vm1556, %v4393, 0
    %4591 = vmatprep.subr.bf16.mxu0 0
    %4592 = vmatpush1.bf16.msra.mxu0 0
    %4593 = vmatprep.subr.bf16.mxu0 0
    %4594 = vmatpush1.bf16.msra.mxu0 0
    %4595 = vmatprep.subr.bf16.mxu0 0
    %4596 = vmatpush1.bf16.msra.mxu0 0
    %4597 = vmatprep.subr.bf16.mxu0 0
    %4598 = vmatpush1.bf16.msra.mxu0 0
    %4599 = vmatprep.subr.bf16.mxu0 0
    %4600 = vmatpush1.bf16.msra.mxu0 0
    %4601 = vmatprep.subr.bf16.mxu0 0
    %4602 = vmatpush1.bf16.msra.mxu0 0
    %4603 = vmatprep.subr.bf16.mxu0 0
    %4604 = vmatpush1.bf16.msra.mxu0 %v4585
    %4605 = vmatprep.subr.bf16.mxu0 0
    %4606 = vmatpush1.bf16.msra.mxu0 %v4584
    %4607 = vmatprep.subr.bf16.mxu0 0
    %4608 = vmatpush2.bf16.msra.mxu0 0
    %4609 = vmatprep.subr.bf16.mxu0 0
    %4610 = vmatpush2.bf16.msra.mxu0 0
    %4611 = vmatprep.subr.bf16.mxu0 0
    %4612 = vmatpush2.bf16.msra.mxu0 0
    %4613 = vmatprep.subr.bf16.mxu0 0
    %4614 = vmatpush2.bf16.msra.mxu0 0
    %4615 = vmatprep.subr.bf16.mxu0 0
    %4616 = vmatpush2.bf16.msra.mxu0 0
    %4617 = vmatprep.subr.bf16.mxu0 0
    %4618 = vmatpush2.bf16.msra.mxu0 0
    %4619 = vmatprep.subr.bf16.mxu0 0
    %4620 = vmatpush2.bf16.msra.mxu0 0
    %4621 = vmatprep.subr.bf16.mxu0 0
    %4622 = vmatpush2.bf16.msra.mxu0 0
    %4623 = vmatprep.mubr.bf16.mxu0 0
    %4624 = vmatmul.mubr.bf16.gmra.mxu0 %v4589
    %v4625 = vpop.f32.mrf.mxu0
    %v4626 = vadd.f32 0.0, %v4625
    %v4627 = vpop.f32.mrf.mxu0
    %v4628 = vpop.f32.mrf.mxu0
    %v4629 = vpop.f32.mrf.mxu0
    %4630 = vdwg.mxu0
    %v4631 = vadd.f32 %v4461, %v4516
    %v4632 = vadd.f32 %v4631, %v4571
    %v4633 = vadd.f32 %v4632, %v4626
    %s4634 = scalar_lea.vmem %s9, 1
    %v4635 = vld [vmem:[%s4634] sm:$0x1]
    %v4637 = vlaneseq
    %v4638 = vshrl.u32 %v4637, 7
    %v4639 = vsub.s32 0, %v4638
    %v4640 = vrot.slane %v4635, %v4639
    %v4642 = vadd.f32 %v4633, %v4640
    %v4643 = vadd.f32 %v2626, %v4642
    %s4644 = scalar_lea.vmem %s10, 1
    %v4645 = vld [vmem:[%s4644] sm:$0x1]
    %s4646 = scalar_lea.vmem %s11, 1
    %v4647 = vld [vmem:[%s4646] sm:$0x1]
    %4648 = vadd.xlane.f32.xlu0 %v4643
    %v4649 = vpop.xlane.xlu0 %4648
    %v4650 = vmul.f32 %v4649, %v187
    %v4651 = vsub.f32 %v4643, %v4650
    %v4652 = vmul.f32 %v4651, %v4651
    %4653 = vadd.xlane.f32.xlu0 %v4652
    %v4654 = vpop.xlane.xlu0 %4653
    %v4655 = vmul.f32 %v4654, %v187
    %v4656 = vadd.f32 %v4655, 1e-12
    %v4657 = vrsqrt.pop %v4656
    %v4658 = vmul.f32 %v4651, %v4657
    %v4660 = vlaneseq
    %v4661 = vshrl.u32 %v4660, 7
    %v4662 = vsub.s32 0, %v4661
    %v4663 = vrot.slane %v4645, %v4662
    %v4665 = vmul.f32 %v4658, %v4663
    %v4667 = vlaneseq
    %v4668 = vshrl.u32 %v4667, 7
    %v4669 = vsub.s32 0, %v4668
    %v4670 = vrot.slane %v4647, %v4669
    %v4672 = vadd.f32 %v4665, %v4670
    %v4673 = vpack.c.bf16 %v4672, %v4672
    %s4674 = scalar_lea.vmem %s12, 128
    %v4675 = vld [vmem:[%s4674] sm:$0xff]
    %v4676 = vld [vmem:[%s4674 + $0x8] sm:$0xff]
    %v4677 = vld [vmem:[%s4674 + $0x10] sm:$0xff]
    %v4678 = vld [vmem:[%s4674 + $0x18] sm:$0xff]
    %v4679 = vld [vmem:[%s4674 + $0x20] sm:$0xff]
    %v4680 = vld [vmem:[%s4674 + $0x28] sm:$0xff]
    %v4681 = vld [vmem:[%s4674 + $0x30] sm:$0xff]
    %v4682 = vld [vmem:[%s4674 + $0x38] sm:$0xff]
    %v4683 = vld [vmem:[%s4674 + $0x40] sm:$0xff]
    %v4684 = vld [vmem:[%s4674 + $0x48] sm:$0xff]
    %v4685 = vld [vmem:[%s4674 + $0x50] sm:$0xff]
    %v4686 = vld [vmem:[%s4674 + $0x58] sm:$0xff]
    %v4687 = vld [vmem:[%s4674 + $0x60] sm:$0xff]
    %v4688 = vld [vmem:[%s4674 + $0x68] sm:$0xff]
    %v4689 = vld [vmem:[%s4674 + $0x70] sm:$0xff]
    %v4690 = vld [vmem:[%s4674 + $0x78] sm:$0xff]
    %s4691 = scalar_lea.vmem %s13, 2
    %v4692 = vld [vmem:[%s4691] sm:$0x3]
    %v4694 = vlaneseq
    %v4695 = vshrl.u32 %v4694, 7
    %v4696 = vsub.s32 0, %v4695
    %v4697 = vrot.slane %v4692, %v4696
    %v4698 = vlaneseq
    %v4699 = vshrl.u32 %v4698, 7
    %v4700 = vsub.s32 1, %v4699
    %v4701 = vrot.slane %v4692, %v4700
    %v4720 = vunpack.c.l.b16 %v4675
    %v4721 = vunpack.c.h.b16 %v4675
    %v4722 = vunpack.c.l.b16 %v4676
    %v4723 = vunpack.c.h.b16 %v4676
    %v4724 = vunpack.c.l.b16 %v4677
    %v4725 = vunpack.c.h.b16 %v4677
    %v4726 = vunpack.c.l.b16 %v4678
    %v4727 = vunpack.c.h.b16 %v4678
    %v4728 = vunpack.c.l.b16 %v4679
    %v4729 = vunpack.c.h.b16 %v4679
    %v4730 = vunpack.c.l.b16 %v4680
    %v4731 = vunpack.c.h.b16 %v4680
    %v4732 = vunpack.c.l.b16 %v4681
    %v4733 = vunpack.c.h.b16 %v4681
    %v4734 = vunpack.c.l.b16 %v4682
    %v4735 = vunpack.c.h.b16 %v4682
    %v4736 = vunpack.c.l.b16 %v4683
    %v4737 = vunpack.c.h.b16 %v4683
    %v4738 = vunpack.c.l.b16 %v4684
    %v4739 = vunpack.c.h.b16 %v4684
    %v4740 = vunpack.c.l.b16 %v4685
    %v4741 = vunpack.c.h.b16 %v4685
    %v4742 = vunpack.c.l.b16 %v4686
    %v4743 = vunpack.c.h.b16 %v4686
    %v4744 = vunpack.c.l.b16 %v4687
    %v4745 = vunpack.c.h.b16 %v4687
    %v4746 = vunpack.c.l.b16 %v4688
    %v4747 = vunpack.c.h.b16 %v4688
    %v4748 = vunpack.c.l.b16 %v4689
    %v4749 = vunpack.c.h.b16 %v4689
    %v4750 = vunpack.c.l.b16 %v4690
    %v4751 = vunpack.c.h.b16 %v4690
    %v4752 = vpack.c.b16 %v4722, %v4720
    %v4753 = vpack.c.b16 %v4723, %v4721
    %v4754 = vpack.c.b16 %v4726, %v4724
    %v4755 = vpack.c.b16 %v4727, %v4725
    %v4756 = vpack.c.b16 %v4730, %v4728
    %v4757 = vpack.c.b16 %v4731, %v4729
    %v4758 = vpack.c.b16 %v4734, %v4732
    %v4759 = vpack.c.b16 %v4735, %v4733
    %v4760 = vpack.c.b16 %v4738, %v4736
    %v4761 = vpack.c.b16 %v4739, %v4737
    %v4762 = vpack.c.b16 %v4742, %v4740
    %v4763 = vpack.c.b16 %v4743, %v4741
    %v4764 = vpack.c.b16 %v4746, %v4744
    %v4765 = vpack.c.b16 %v4747, %v4745
    %v4766 = vpack.c.b16 %v4750, %v4748
    %v4767 = vpack.c.b16 %v4751, %v4749
    %4784 = vmatprep.subr.bf16.mxu0 %v4767
    %4785 = vmatpush1.bf16.msra.mxu0 %v4766
    %4786 = vmatprep.subr.bf16.mxu0 %v4765
    %4787 = vmatpush1.bf16.msra.mxu0 %v4764
    %4788 = vmatprep.subr.bf16.mxu0 %v4763
    %4789 = vmatpush1.bf16.msra.mxu0 %v4762
    %4790 = vmatprep.subr.bf16.mxu0 %v4761
    %4791 = vmatpush1.bf16.msra.mxu0 %v4760
    %4792 = vmatprep.subr.bf16.mxu0 %v4759
    %4793 = vmatpush1.bf16.msra.mxu0 %v4758
    %4794 = vmatprep.subr.bf16.mxu0 %v4757
    %4795 = vmatpush1.bf16.msra.mxu0 %v4756
    %4796 = vmatprep.subr.bf16.mxu0 %v4755
    %4797 = vmatpush1.bf16.msra.mxu0 %v4754
    %4798 = vmatprep.subr.bf16.mxu0 %v4753
    %4799 = vmatpush1.bf16.msra.mxu0 %v4752
    %4800 = vmatprep.subr.bf16.mxu0 0
    %4801 = vmatpush2.bf16.msra.mxu0 0
    %4802 = vmatprep.subr.bf16.mxu0 0
    %4803 = vmatpush2.bf16.msra.mxu0 0
    %4804 = vmatprep.subr.bf16.mxu0 0
    %4805 = vmatpush2.bf16.msra.mxu0 0
    %4806 = vmatprep.subr.bf16.mxu0 0
    %4807 = vmatpush2.bf16.msra.mxu0 0
    %4808 = vmatprep.subr.bf16.mxu0 0
    %4809 = vmatpush2.bf16.msra.mxu0 0
    %4810 = vmatprep.subr.bf16.mxu0 0
    %4811 = vmatpush2.bf16.msra.mxu0 0
    %4812 = vmatprep.subr.bf16.mxu0 0
    %4813 = vmatpush2.bf16.msra.mxu0 0
    %4814 = vmatprep.subr.bf16.mxu0 0
    %4815 = vmatpush2.bf16.msra.mxu0 0
    %4816 = vmatprep.mubr.bf16.mxu0 0
    %4817 = vmatmul.mubr.bf16.gmra.mxu0 %v4673
    %v4818 = vpop.f32.mrf.mxu0
    %v4819 = vadd.f32 %v4697, %v4818
    %v4820 = vpop.f32.mrf.mxu0
    %v4821 = vadd.f32 %v4701, %v4820
    %v4822 = vpop.f32.mrf.mxu0
    %v4823 = vpop.f32.mrf.mxu0
    %4824 = vdwg.mxu0
    %v4825 = vmul.f32 %v4819, 0.5
    %v4826 = vmul.f32 %v4821, 0.5
    %v4827 = vmul.f32 %v4819, 0.044715
    %v4828 = vmul.f32 %v4821, 0.044715
    %v4829 = vmul.f32 %v4827, %v4819
    %v4830 = vmul.f32 %v4828, %v4821
    %v4831 = vmul.f32 %v4829, %v4819
    %v4832 = vmul.f32 %v4830, %v4821
    %v4833 = vadd.f32 %v4819, %v4831
    %v4834 = vadd.f32 %v4821, %v4832
    %v4835 = vmul.f32 %v4833, 0.7978846
    %v4836 = vmul.f32 %v4834, 0.7978846
    %v4837 = vtanh.pop %v4835
    %v4838 = vtanh.pop %v4836
    %v4839 = vadd.f32 %v4837, 1.0
    %v4840 = vadd.f32 %v4838, 1.0
    %v4841 = vmul.f32 %v4825, %v4839
    %v4842 = vmul.f32 %v4826, %v4840
    %v4843 = vpack.c.bf16 %v4841, %v4841
    %v4844 = vpack.c.bf16 %v4842, %v4842
    %s4845 = scalar_lea.vmem %s14, 128
    %v4846 = vld [vmem:[%s4845] sm:$0xf]
    %v4847 = vld [vmem:[%s4845 + $0x4] sm:$0xf]
    %v4848 = vld [vmem:[%s4845 + $0x8] sm:$0xf]
    %v4849 = vld [vmem:[%s4845 + $0xc] sm:$0xf]
    %v4850 = vld [vmem:[%s4845 + $0x10] sm:$0xf]
    %v4851 = vld [vmem:[%s4845 + $0x14] sm:$0xf]
    %v4852 = vld [vmem:[%s4845 + $0x18] sm:$0xf]
    %v4853 = vld [vmem:[%s4845 + $0x1c] sm:$0xf]
    %v4854 = vld [vmem:[%s4845 + $0x20] sm:$0xf]
    %v4855 = vld [vmem:[%s4845 + $0x24] sm:$0xf]
    %v4856 = vld [vmem:[%s4845 + $0x28] sm:$0xf]
    %v4857 = vld [vmem:[%s4845 + $0x2c] sm:$0xf]
    %v4858 = vld [vmem:[%s4845 + $0x30] sm:$0xf]
    %v4859 = vld [vmem:[%s4845 + $0x34] sm:$0xf]
    %v4860 = vld [vmem:[%s4845 + $0x38] sm:$0xf]
    %v4861 = vld [vmem:[%s4845 + $0x3c] sm:$0xf]
    %v4862 = vld [vmem:[%s4845 + $0x40] sm:$0xf]
    %v4863 = vld [vmem:[%s4845 + $0x44] sm:$0xf]
    %v4864 = vld [vmem:[%s4845 + $0x48] sm:$0xf]
    %v4865 = vld [vmem:[%s4845 + $0x4c] sm:$0xf]
    %v4866 = vld [vmem:[%s4845 + $0x50] sm:$0xf]
    %v4867 = vld [vmem:[%s4845 + $0x54] sm:$0xf]
    %v4868 = vld [vmem:[%s4845 + $0x58] sm:$0xf]
    %v4869 = vld [vmem:[%s4845 + $0x5c] sm:$0xf]
    %v4870 = vld [vmem:[%s4845 + $0x60] sm:$0xf]
    %v4871 = vld [vmem:[%s4845 + $0x64] sm:$0xf]
    %v4872 = vld [vmem:[%s4845 + $0x68] sm:$0xf]
    %v4873 = vld [vmem:[%s4845 + $0x6c] sm:$0xf]
    %v4874 = vld [vmem:[%s4845 + $0x70] sm:$0xf]
    %v4875 = vld [vmem:[%s4845 + $0x74] sm:$0xf]
    %v4876 = vld [vmem:[%s4845 + $0x78] sm:$0xf]
    %v4877 = vld [vmem:[%s4845 + $0x7c] sm:$0xf]
    %s4878 = scalar_lea.vmem %s15, 1
    %v4879 = vld [vmem:[%s4878] sm:$0x1]
    %v4881 = vlaneseq
    %v4882 = vshrl.u32 %v4881, 7
    %v4883 = vsub.s32 0, %v4882
    %v4884 = vrot.slane %v4879, %v4883
    %v4918 = vunpack.c.l.b16 %v4846
    %v4919 = vunpack.c.l.b16 %v4847
    %v4920 = vunpack.c.l.b16 %v4848
    %v4921 = vunpack.c.l.b16 %v4849
    %v4922 = vunpack.c.l.b16 %v4850
    %v4923 = vunpack.c.l.b16 %v4851
    %v4924 = vunpack.c.l.b16 %v4852
    %v4925 = vunpack.c.l.b16 %v4853
    %v4926 = vunpack.c.l.b16 %v4854
    %v4927 = vunpack.c.l.b16 %v4855
    %v4928 = vunpack.c.l.b16 %v4856
    %v4929 = vunpack.c.l.b16 %v4857
    %v4930 = vunpack.c.l.b16 %v4858
    %v4931 = vunpack.c.l.b16 %v4859
    %v4932 = vunpack.c.l.b16 %v4860
    %v4933 = vunpack.c.l.b16 %v4861
    %v4934 = vunpack.c.l.b16 %v4862
    %v4935 = vunpack.c.l.b16 %v4863
    %v4936 = vunpack.c.l.b16 %v4864
    %v4937 = vunpack.c.l.b16 %v4865
    %v4938 = vunpack.c.l.b16 %v4866
    %v4939 = vunpack.c.l.b16 %v4867
    %v4940 = vunpack.c.l.b16 %v4868
    %v4941 = vunpack.c.l.b16 %v4869
    %v4942 = vunpack.c.l.b16 %v4870
    %v4943 = vunpack.c.l.b16 %v4871
    %v4944 = vunpack.c.l.b16 %v4872
    %v4945 = vunpack.c.l.b16 %v4873
    %v4946 = vunpack.c.l.b16 %v4874
    %v4947 = vunpack.c.l.b16 %v4875
    %v4948 = vunpack.c.l.b16 %v4876
    %v4949 = vunpack.c.l.b16 %v4877
    %v4950 = vpack.c.b16 %v4919, %v4918
    %v4951 = vpack.c.b16 %v4921, %v4920
    %v4952 = vpack.c.b16 %v4923, %v4922
    %v4953 = vpack.c.b16 %v4925, %v4924
    %v4954 = vpack.c.b16 %v4927, %v4926
    %v4955 = vpack.c.b16 %v4929, %v4928
    %v4956 = vpack.c.b16 %v4931, %v4930
    %v4957 = vpack.c.b16 %v4933, %v4932
    %v4958 = vpack.c.b16 %v4935, %v4934
    %v4959 = vpack.c.b16 %v4937, %v4936
    %v4960 = vpack.c.b16 %v4939, %v4938
    %v4961 = vpack.c.b16 %v4941, %v4940
    %v4962 = vpack.c.b16 %v4943, %v4942
    %v4963 = vpack.c.b16 %v4945, %v4944
    %v4964 = vpack.c.b16 %v4947, %v4946
    %v4965 = vpack.c.b16 %v4949, %v4948
    %4982 = vmatprep.subr.bf16.mxu0 0
    %4983 = vmatpush1.bf16.msra.mxu0 %v4957
    %4984 = vmatprep.subr.bf16.mxu0 0
    %4985 = vmatpush1.bf16.msra.mxu0 %v4956
    %4986 = vmatprep.subr.bf16.mxu0 0
    %4987 = vmatpush1.bf16.msra.mxu0 %v4955
    %4988 = vmatprep.subr.bf16.mxu0 0
    %4989 = vmatpush1.bf16.msra.mxu0 %v4954
    %4990 = vmatprep.subr.bf16.mxu0 0
    %4991 = vmatpush1.bf16.msra.mxu0 %v4953
    %4992 = vmatprep.subr.bf16.mxu0 0
    %4993 = vmatpush1.bf16.msra.mxu0 %v4952
    %4994 = vmatprep.subr.bf16.mxu0 0
    %4995 = vmatpush1.bf16.msra.mxu0 %v4951
    %4996 = vmatprep.subr.bf16.mxu0 0
    %4997 = vmatpush1.bf16.msra.mxu0 %v4950
    %4998 = vmatprep.subr.bf16.mxu0 0
    %4999 = vmatpush2.bf16.msra.mxu0 %v4965
    %5000 = vmatprep.subr.bf16.mxu0 0
    %5001 = vmatpush2.bf16.msra.mxu0 %v4964
    %5002 = vmatprep.subr.bf16.mxu0 0
    %5003 = vmatpush2.bf16.msra.mxu0 %v4963
    %5004 = vmatprep.subr.bf16.mxu0 0
    %5005 = vmatpush2.bf16.msra.mxu0 %v4962
    %5006 = vmatprep.subr.bf16.mxu0 0
    %5007 = vmatpush2.bf16.msra.mxu0 %v4961
    %5008 = vmatprep.subr.bf16.mxu0 0
    %5009 = vmatpush2.bf16.msra.mxu0 %v4960
    %5010 = vmatprep.subr.bf16.mxu0 0
    %5011 = vmatpush2.bf16.msra.mxu0 %v4959
    %5012 = vmatprep.subr.bf16.mxu0 0
    %5013 = vmatpush2.bf16.msra.mxu0 %v4958
    %5014 = vmatprep.mubr.bf16.mxu0 %v4844
    %5015 = vmatmul.mubr.bf16.gmra.mxu0 %v4843
    %v5016 = vpop.f32.mrf.mxu0
    %v5017 = vadd.f32 %v4884, %v5016
    %v5018 = vpop.f32.mrf.mxu0
    %v5019 = vpop.f32.mrf.mxu0
    %v5020 = vpop.f32.mrf.mxu0
    %5021 = vdwg.mxu0
    %v5022 = vadd.f32 %v4672, %v5017
    %s5023 = scalar_lea.vmem %s16, 1
    %v5024 = vld [vmem:[%s5023] sm:$0x1]
    %s5025 = scalar_lea.vmem %s17, 1
    %v5026 = vld [vmem:[%s5025] sm:$0x1]
    %5027 = vadd.xlane.f32.xlu0 %v5022
    %v5028 = vpop.xlane.xlu0 %5027
    %v5029 = vmul.f32 %v5028, %v187
    %v5030 = vsub.f32 %v5022, %v5029
    %v5031 = vmul.f32 %v5030, %v5030
    %5032 = vadd.xlane.f32.xlu0 %v5031
    %v5033 = vpop.xlane.xlu0 %5032
    %v5034 = vmul.f32 %v5033, %v187
    %v5035 = vadd.f32 %v5034, 1e-12
    %v5036 = vrsqrt.pop %v5035
    %v5037 = vmul.f32 %v5030, %v5036
    %v5039 = vlaneseq
    %v5040 = vshrl.u32 %v5039, 7
    %v5041 = vsub.s32 0, %v5040
    %v5042 = vrot.slane %v5024, %v5041
    %v5044 = vmul.f32 %v5037, %v5042
    %v5046 = vlaneseq
    %v5047 = vshrl.u32 %v5046, 7
    %v5048 = vsub.s32 0, %v5047
    %v5049 = vrot.slane %v5026, %v5048
    %v5051 = vadd.f32 %v5044, %v5049
    %5052 = vst [vmem:[#allocation2] sm:$0xff] %v5051
    // Predicated region
    $region74: #{tpu_custom_call.1} parent=1 // pred_check
      _
    $region75: #{tpu_custom_call.1} parent=1 // pred_check_branch
      %5054 = sbr.rel (0) target = $region77
    $region76: #{tpu_custom_call.1} parent=1 // pred_region
      %s5056 = ssub.s32 128, 128
      %5057 = vsyncadd [#allocation3], %s5056
      %s5059 = sshll.u32 [#allocation2], 4
      %s5060 = int_to_ptr.vmem [resolvable:$true] %s5059
      %5062 = dma.vmem_to_hbm [thread:$0]  %s5060, 128, %s18, [#allocation3]
    $region77: #{tpu_custom_call.1} parent=1 // pred_fallthru
      _
    // Predicated region
    $region78: #{tpu_custom_call.1} parent=1 // pred_check
      _
    $region79: #{tpu_custom_call.1} parent=1 // pred_check_branch
      %5064 = sbr.rel (0) target = $region81
    $region80: #{tpu_custom_call.1} parent=1 // pred_region
      %5065 = dma.done [#allocation3], 128
    $region81: #{tpu_custom_call.1} parent=1 // pred_fallthru
      _
    %5066 = vsyncpa [#allocation3], 1

</llo_original>
